<compile_context>
chip_gen: v7x
topology: tpu7x:2x2x1
jax: 0.10.0
libtpu: 0.0.40
codegen_flags: <defaults>
</compile_context>

<pallas_src>
import functools

import jax
import jax.numpy as jnp
from jax.experimental import pallas as pl
from jax.experimental.pallas import tpu as pltpu


# ----------------------------------------------------------------------------
# Chip / capability helpers
# ----------------------------------------------------------------------------
_ACC_BUDGET_BYTES = 2 * 1024 * 1024      # f32 accumulator budget per conv tile
_L1_TILE_BYTES = 2 * 1024 * 1024         # bf16 bytes per L1 input tile


@functools.lru_cache(maxsize=None)
def _vmem_limit_bytes():
    """~3/4 of physical VMEM: ~48 MiB on v7x, ~96 MiB on v5e/v6e."""
    try:
        cap = int(pltpu.get_tpu_info().vmem_capacity_bytes)
    except Exception:
        cap = 64 * 1024 * 1024
    return max(32 * 1024 * 1024, min(cap * 3 // 4, 100 * 1024 * 1024))


@functools.lru_cache(maxsize=None)
def _default_input_budget():
    # Whole-image VMEM residency only when the flat padded input is small
    # relative to the VMEM limit; larger inputs use halo row-slabs.
    return _vmem_limit_bytes() // 8


def _probe_kernel(x_ref, o_ref):
    o_ref[...] = x_ref[...]


@functools.lru_cache(maxsize=None)
def _buffered_supported():
    """Probe whether BlockSpec(pipeline_mode=pl.Buffered(1)) works here."""
    try:
        f = pl.pallas_call(
            _probe_kernel,
            out_shape=jax.ShapeDtypeStruct((16, 128), jnp.float32),
            grid=(2,),
            in_specs=[pl.BlockSpec((8, 128), lambda i: (0, 0),
                                   pipeline_mode=pl.Buffered(buffer_count=1))],
            out_specs=pl.BlockSpec((8, 128), lambda i: (i, 0)),
        )
        jax.block_until_ready(f(jnp.ones((8, 128), jnp.float32)))
        return True
    except Exception:
        return False


def _spec(block_shape, index_map, single_buffer=False):
    """BlockSpec; grid-invariant blocks get single-buffering when supported."""
    if single_buffer and _buffered_supported():
        return pl.BlockSpec(block_shape, index_map,
                            pipeline_mode=pl.Buffered(buffer_count=1))
    return pl.BlockSpec(block_shape, index_map)


# ----------------------------------------------------------------------------
# Tiling helpers
# ----------------------------------------------------------------------------
def _round_up(x, m):
    return (x + m - 1) // m * m


def _pick_conv_tile_rows(H, pitch, cout, acc_budget):
    """Largest divisor th of H with th*pitch*cout*4 within the f32 acc budget."""
    max_rows = max(pitch, acc_budget // (4 * cout))
    th_max = min(H, max(1, max_rows // pitch))
    for th in range(th_max, 0, -1):
        if H % th == 0:
            return th
    return 1


def _pick_pool_tile(Ho, Wo, C, max_bytes=2 * 1024 * 1024):
    for t in range(Ho, 0, -1):
        if Ho % t == 0 and t * Wo * C * 8 <= max_bytes:
            return t
    return 1


def _pick_l1_tile(R, C, target_bytes=_L1_TILE_BYTES):
    cap = max(8, target_bytes // (2 * C))
    for t in range(min(R, cap), 0, -1):
        if R % t == 0 and (t % 8 == 0 or t == R):
            return t
    return R


# ----------------------------------------------------------------------------
# Conv 3x3 (pad=1, stride=1) + bias + ReLU   (bf16 MXU, f32 VMEM accumulation)
# ----------------------------------------------------------------------------
def _conv_taps_kernel(x_ref, w_ref, b_ref, o_ref, acc_ref, *,
                      tap_offsets, block_rows, use_grid_base):
    # x_ref: (1, P, Cin) flat padded input (whole/blocked) or (1,1,P,Cin) slab.
    # w_ref: (T, Cin, Cout) tap weights (bf16), VMEM-resident for whole grid.
    # b_ref: (1, Cout) bias (f32).
    # o_ref: (1, block_rows, Cout) output tile (bf16).
    # acc_ref: (block_rows, Cout) f32 scratch accumulator.
    base = pl.program_id(1) * block_rows if use_grid_base else 0
    for t, off in enumerate(tap_offsets):
        start = base + off
        if use_grid_base and off % 8 == 0 and block_rows % 8 == 0:
            start = pl.multiple_of(start, 8)
        if len(x_ref.shape) == 4:
            tap = x_ref[0, 0, pl.ds(start, block_rows), :]
        else:
            tap = x_ref[0, pl.ds(start, block_rows), :]
        contrib = jnp.dot(tap, w_ref[t], preferred_element_type=jnp.float32)
        if t == 0:
            acc_ref[...] = contrib
        else:
            acc_ref[...] += contrib
    o_ref[0] = jnp.maximum(acc_ref[...] + b_ref[...], 0.0).astype(o_ref.dtype)


@functools.lru_cache(maxsize=None)
def _build_conv_call(mode, N, n_blocks, in_rows, cin, cout, block_rows, taps):
    # mode: "whole"  -> input is the full flat padded image (1, in_rows, cin)
    #       "slab"   -> one pre-gathered halo slab per grid step (1,1,in_rows,cin)
    #       "blocked"-> plain per-block input (folded conv1_1), (1, block_rows, cin)
    use_grid_base = (mode == "whole")
    kernel = functools.partial(_conv_taps_kernel, tap_offsets=taps,
                               block_rows=block_rows,
                               use_grid_base=use_grid_base)
    if mode == "whole":
        x_spec = pl.BlockSpec((1, in_rows, cin), lambda n, h: (n, 0, 0))
    elif mode == "slab":
        x_spec = pl.BlockSpec((1, 1, in_rows, cin), lambda n, h: (n, h, 0, 0))
    else:
        x_spec = pl.BlockSpec((1, block_rows, cin), lambda n, h: (n, h, 0))
    w_spec = _spec((len(taps), cin, cout), lambda n, h: (0, 0, 0),
                   single_buffer=True)
    b_spec = _spec((1, cout), lambda n, h: (0, 0), single_buffer=True)
    return pl.pallas_call(
        kernel,
        out_shape=jax.ShapeDtypeStruct((N, n_blocks * block_rows, cout),
                                       jnp.bfloat16),
        grid=(N, n_blocks),
        in_specs=[x_spec, w_spec, b_spec],
        out_specs=pl.BlockSpec((1, block_rows, cout), lambda n, h: (n, h, 0)),
        scratch_shapes=[pltpu.VMEM((block_rows, cout), jnp.float32)],
        compiler_params=pltpu.CompilerParams(
            dimension_semantics=("parallel", "parallel"),
            vmem_limit_bytes=_vmem_limit_bytes(),
        ),
    )


def _conv3x3_relu_halo(x, w, b, input_budget, acc_budget):
    """3x3 conv via the flat-pitch trick; 9 per-tap MXU matmuls per tile."""
    N, H, W, Cin = x.shape
    Cout = w.shape[-1]
    pitch = _round_up(W + 2, 8)                  # 8-aligned flat row pitch
    th = _pick_conv_tile_rows(H, pitch, Cout, acc_budget)
    block_rows = th * pitch
    n_blocks = H // th
    taps = tuple(dy * pitch + dx for dy in range(3) for dx in range(3))
    # Zero pad: 1 top, 2 bottom rows; 1 left col, (pitch - W - 1) right cols.
    xp = jnp.pad(x, ((0, 0), (1, 2), (1, pitch - W - 1), (0, 0)))
    w9 = w.reshape(9, Cin, Cout)
    b2 = b.reshape(1, Cout).astype(jnp.float32)
    flat_rows = (H + 3) * pitch
    if flat_rows * Cin * 2 <= input_budget:
        # Small input: keep the whole flat padded image VMEM-resident per batch.
        xf = xp.reshape(N, flat_rows, Cin)
        call = _build_conv_call("whole", N, n_blocks, flat_rows, Cin, Cout,
                                block_rows, taps)
        out = call(xf, w9, b2)
    else:
        # Large input: overlapping halo row-slabs, one per grid step, so the
        # VMEM footprint stays bounded and DMA of slab i+1 overlaps compute.
        slab_rows = (th + 3) * pitch
        slabs = jnp.stack(
            [xp[:, i * th: i * th + th + 3] for i in range(n_blocks)], axis=1)
        slabs = slabs.reshape(N, n_blocks, slab_rows, Cin)
        call = _build_conv_call("slab", N, n_blocks, slab_rows, Cin, Cout,
                                block_rows, taps)
        out = call(slabs, w9, b2)
    # Drop the junk columns produced by the flat-pitch layout.
    return out.reshape(N, H, pitch, Cout)[:, :, :W, :]


def _conv3x3_relu_folded(x, w, b, acc_budget):
    """Small-Cin path (conv1_1): fold the 9 taps into one K=9*Cin matmul."""
    N, H, W, Cin = x.shape
    Cout = w.shape[-1]
    pitch = _round_up(W, 8)
    th = _pick_conv_tile_rows(H, pitch, Cout, acc_budget)
    block_rows = th * pitch
    n_blocks = H // th
    xp = jnp.pad(x, ((0, 0), (1, 1), (1, 1), (0, 0)))
    cols = jnp.concatenate(
        [xp[:, dy:dy + H, dx:dx + W, :] for dy in range(3) for dx in range(3)],
        axis=-1)                                             # (N, H, W, 9*Cin)
    if pitch != W:
        cols = jnp.pad(cols, ((0, 0), (0, 0), (0, pitch - W), (0, 0)))
    xf = cols.reshape(N, H * pitch, 9 * Cin)
    call = _build_conv_call("blocked", N, n_blocks, block_rows, 9 * Cin, Cout,
                            block_rows, (0,))
    out = call(xf, w.reshape(1, 9 * Cin, Cout),
               b.reshape(1, Cout).astype(jnp.float32))
    return out.reshape(N, H, pitch, Cout)[:, :, :W, :]


def conv3x3_relu(x, w, b, *, input_budget=None, acc_budget=None):
    """x: (N,H,W,Cin) bf16, w: (3,3,Cin,Cout) bf16, b: (Cout,) f32."""
    if input_budget is None:
        input_budget = _default_input_budget()
    if acc_budget is None:
        acc_budget = _ACC_BUDGET_BYTES
    if x.shape[-1] * 9 <= 128:
        return _conv3x3_relu_folded(x, w, b, acc_budget)
    return _conv3x3_relu_halo(x, w, b, input_budget, acc_budget)


# ----------------------------------------------------------------------------
# MaxPool 2x2, stride 2 (single-pass, no strided HBM views)
# ----------------------------------------------------------------------------
def _maxpool_kernel(x_ref, o_ref):
    # x_ref: (1, tph, 2, Wo, 2*C)  (row-pair explicit, col-pair packed on lanes)
    # o_ref: (1, tph, Wo, C)
    c = o_ref.shape[-1]
    top = jnp.maximum(x_ref[0, :, 0, :, :c], x_ref[0, :, 0, :, c:])
    bot = jnp.maximum(x_ref[0, :, 1, :, :c], x_ref[0, :, 1, :, c:])
    o_ref[0] = jnp.maximum(top, bot)


@functools.lru_cache(maxsize=None)
def _build_pool_call(N, Ho, Wo, C, tph):
    return pl.pallas_call(
        _maxpool_kernel,
        out_shape=jax.ShapeDtypeStruct((N, Ho, Wo, C), jnp.bfloat16),
        grid=(N, Ho // tph),
        in_specs=[pl.BlockSpec((1, tph, 2, Wo, 2 * C),
                               lambda n, i: (n, i, 0, 0, 0))],
        out_specs=pl.BlockSpec((1, tph, Wo, C), lambda n, i: (n, i, 0, 0)),
        compiler_params=pltpu.CompilerParams(
            dimension_semantics=("parallel", "parallel"),
            vmem_limit_bytes=_vmem_limit_bytes(),
        ),
    )


def maxpool2x2(x):
    N, H, W, C = x.shape
    Ho, Wo = H // 2, W // 2        # floors odd H/W like nn.MaxPool2d defaults
    xr = x[:, :2 * Ho, :2 * Wo, :].reshape(N, Ho, 2, Wo, 2 * C)  # free reshape
    tph = _pick_pool_tile(Ho, Wo, C)
    return _build_pool_call(N, Ho, Wo, C, tph)(xr)


# ----------------------------------------------------------------------------
# L1 loss (mean of |x - y|): parallel per-tile partial sums + JAX final sum
# ----------------------------------------------------------------------------
def _l1_partial_kernel(x_ref, y_ref, o_ref):
    d = jnp.abs(x_ref[...].astype(jnp.float32) - y_ref[...].astype(jnp.float32))
    s = jnp.sum(d)
    row = jax.lax.broadcasted_iota(jnp.int32, (8, 128), 0)
    col = jax.lax.broadcasted_iota(jnp.int32, (8, 128), 1)
    o_ref[0] = jnp.where((row == 0) & (col == 0), s, 0.0)


@functools.lru_cache(maxsize=None)
def _build_l1_call(R, C, Rt):
    n_tiles = R // Rt
    return pl.pallas_call(
        _l1_partial_kernel,
        out_shape=jax.ShapeDtypeStruct((n_tiles, 8, 128), jnp.float32),
        grid=(n_tiles,),
        in_specs=[pl.BlockSpec((Rt, C), lambda i: (i, 0)),
                  pl.BlockSpec((Rt, C), lambda i: (i, 0))],
        out_specs=pl.BlockSpec((1, 8, 128), lambda i: (i, 0, 0)),
        compiler_params=pltpu.CompilerParams(
            dimension_semantics=("parallel",),
            vmem_limit_bytes=_vmem_limit_bytes(),
        ),
    )


def l1_mean(a_nhwc, b_nhwc):
    N, H, W, C = a_nhwc.shape
    R = N * H * W
    Rt = _pick_l1_tile(R, C)
    parts = _build_l1_call(R, C, Rt)(a_nhwc.reshape(R, C), b_nhwc.reshape(R, C))
    return jnp.sum(parts) / jnp.float32(R * C)


# ----------------------------------------------------------------------------
# VGG19 feature extractor (slices 1..5 of torchvision vgg19.features)
# ----------------------------------------------------------------------------
_VGG_CONV_CFG = [
    (3, 64), (64, 64),                                   # block 1
    (64, 128), (128, 128),                               # block 2
    (128, 256), (256, 256), (256, 256), (256, 256),      # block 3
    (256, 512), (512, 512), (512, 512), (512, 512),      # block 4
    (512, 512),                                          # block 5 (conv5_1)
]


def init_vgg19_params(key):
    params = []
    for cin, cout in _VGG_CONV_CFG:
        key, kw, kb = jax.random.split(key, 3)
        std = (2.0 / (9.0 * cin)) ** 0.5
        w = (jax.random.normal(kw, (3, 3, cin, cout), jnp.float32) * std
             ).astype(jnp.bfloat16)
        b = jax.random.normal(kb, (cout,), jnp.float32) * 0.01
        params.append((w, b))
    return params


def _features(x_nchw, params, conv_fn, pool_fn):
    """Returns [h_relu1, ..., h_relu5] in NHWC (bf16)."""
    x = jnp.transpose(x_nchw, (0, 2, 3, 1)).astype(jnp.bfloat16)
    p = iter(params)
    h = conv_fn(x, *next(p)); h_relu1 = h          # conv1_1 -> slice1
    h = conv_fn(h, *next(p)); h = pool_fn(h)       # conv1_2, pool
    h = conv_fn(h, *next(p)); h_relu2 = h          # conv2_1 -> slice2
    h = conv_fn(h, *next(p)); h = pool_fn(h)       # conv2_2, pool
    h = conv_fn(h, *next(p)); h_relu3 = h          # conv3_1 -> slice3
    h = conv_fn(h, *next(p))                       # conv3_2
    h = conv_fn(h, *next(p))                       # conv3_3
    h = conv_fn(h, *next(p)); h = pool_fn(h)       # conv3_4, pool
    h = conv_fn(h, *next(p)); h_relu4 = h          # conv4_1 -> slice4
    h = conv_fn(h, *next(p))                       # conv4_2
    h = conv_fn(h, *next(p))                       # conv4_3
    h = conv_fn(h, *next(p)); h = pool_fn(h)       # conv4_4, pool
    h = conv_fn(h, *next(p)); h_relu5 = h          # conv5_1 -> slice5
    return [h_relu1, h_relu2, h_relu3, h_relu4, h_relu5]


def vgg19_features(x_nchw, params):
    return _features(x_nchw, params, conv3x3_relu, maxpool2x2)


# ----------------------------------------------------------------------------
# VGGLoss forward
# ----------------------------------------------------------------------------
VGG_LOSS_WEIGHTS = (1.0 / 32, 1.0 / 16, 1.0 / 8, 1.0 / 4, 1.0)


def vgg_loss(x_nchw, y_nchw, params, layids=None):
    fx = vgg19_features(x_nchw, params)
    fy = vgg19_features(y_nchw, params)
    fy = [jax.lax.stop_gradient(f) for f in fy]    # mirrors y_vgg[i].detach()
    if layids is None:
        layids = list(range(len(fx)))
    loss = jnp.float32(0.0)
    for i in layids:
        loss = loss + VGG_LOSS_WEIGHTS[i] * l1_mean(fx[i], fy[i])
    return loss


# ----------------------------------------------------------------------------
# Pure-JAX reference (same bf16 casting) for self-checking the Pallas kernels
# ----------------------------------------------------------------------------
def _ref_conv3x3_relu(x, w, b):
    y = jax.lax.conv_general_dilated(
        x.astype(jnp.bfloat16), w.astype(jnp.bfloat16),
        window_strides=(1, 1), padding=((1, 1), (1, 1)),
        dimension_numbers=("NHWC", "HWIO", "NHWC"),
        preferred_element_type=jnp.float32)
    y = y + b.astype(jnp.float32).reshape(1, 1, 1, -1)
    return jnp.maximum(y, 0.0).astype(jnp.bfloat16)


def _ref_maxpool2x2(x):
    N, H, W, C = x.shape
    Ho, Wo = H // 2, W // 2
    xr = x[:, :2 * Ho, :2 * Wo, :].reshape(N, Ho, 2, Wo, 2, C)
    return jnp.max(xr, axis=(2, 4))


def vgg_loss_reference(x_nchw, y_nchw, params, layids=None):
    fx = _features(x_nchw, params, _ref_conv3x3_relu, _ref_maxpool2x2)
    fy = _features(y_nchw, params, _ref_conv3x3_relu, _ref_maxpool2x2)
    if layids is None:
        layids = list(range(len(fx)))
    loss = jnp.float32(0.0)
    for i in layids:
        d = jnp.abs(fx[i].astype(jnp.float32) - fy[i].astype(jnp.float32))
        loss = loss + VGG_LOSS_WEIGHTS[i] * jnp.mean(d)
    return loss


if __name__ == "__main__":
    key = jax.random.PRNGKey(0)
    kx, ky, kp, kc = jax.random.split(key, 4)
    # NCHW inputs, like the PyTorch module (batch=2, 3 channels, 16x16).
    x = jax.random.normal(kx, (2, 3, 16, 16), jnp.float32)
    y = jax.random.normal(ky, (2, 3, 16, 16), jnp.float32)
    params = init_vgg19_params(kp)

    # Warm chip-info / pipeline-mode probes outside any jit trace.
    _vmem_limit_bytes()
    _buffered_supported()

    # Self-check: halo-slab conv path (the large-image path) vs XLA conv.
    k1, k2, k3 = jax.random.split(kc, 3)
    xs = jax.random.normal(k1, (1, 32, 16, 64), jnp.float32).astype(jnp.bfloat16)
    ws = (jax.random.normal(k2, (3, 3, 64, 64), jnp.float32) * 0.05
          ).astype(jnp.bfloat16)
    bs = jax.random.normal(k3, (64,), jnp.float32) * 0.01
    got = conv3x3_relu(xs, ws, bs, input_budget=1, acc_budget=50_000)
    want = _ref_conv3x3_relu(xs, ws, bs)
    assert bool(jnp.allclose(got.astype(jnp.float32), want.astype(jnp.float32),
                             rtol=5e-2, atol=5e-2))

    # Full VGG loss through the Pallas kernels, checked against a pure-JAX ref.
    loss = jax.block_until_ready(jax.jit(vgg_loss)(x, y, params))
    loss_ref = jax.block_until_ready(jax.jit(vgg_loss_reference)(x, y, params))

    assert loss.shape == () and bool(jnp.isfinite(loss))
    lr = float(loss_ref)
    assert abs(float(loss) - lr) <= 2e-2 * max(1.0, abs(lr)), (float(loss), lr)
    print("KERNEL_OK")
</pallas_src>

<mosaic_0001>
module attributes {stable_mosaic.version = 11 : i64} {
  func.func @_probe_kernel(%arg0: i32, %arg1: memref<8x128xf32, #tpu.memory_space<vmem>>, %arg2: memref<8x128xf32, #tpu.memory_space<vmem>>) attributes {dimension_semantics = [#tpu.dimension_semantics<arbitrary>], iteration_bounds = array<i64: 2>, scalar_prefetch = 0 : i64, scratch_operands = 0 : i64, tpu.core_type = #tpu.core_type<tc>, window_params = [{pipeline_mode = #tpu.pipeline_mode<synchronous>, transform_indices = @transform_0, window_bounds = array<i64: 8, 128>}, {transform_indices = @transform_1, window_bounds = array<i64: 8, 128>}]} {
    %c0 = arith.constant 0 : index
    %c0_0 = arith.constant 0 : index
    %0 = vector.load %arg1[%c0, %c0_0] : memref<8x128xf32, #tpu.memory_space<vmem>>, vector<8x128xf32>
    %c0_1 = arith.constant 0 : index
    %c0_2 = arith.constant 0 : index
    %1 = vector.load %arg2[%c0_1, %c0_2] : memref<8x128xf32, #tpu.memory_space<vmem>>, vector<8x128xf32>
    tpu.vector_store %arg2[%c0_1, %c0_2], %0 {strides = array<i32>} : memref<8x128xf32, #tpu.memory_space<vmem>>, vector<8x128xf32>,
    return
  }
  func.func @transform_0(%arg0: i32) -> (i32, i32) {
    %c0_i32 = arith.constant 0 : i32
    %c0_i32_0 = arith.constant 0 : i32
    %c0_i32_1 = arith.constant 0 : i32
    return %c0_i32, %c0_i32_0 : i32, i32
  }
  func.func @transform_1(%arg0: i32) -> (i32, i32) {
    %c0_i32 = arith.constant 0 : i32
    %c0_i32_0 = arith.constant 0 : i32
    return %arg0, %c0_i32 : i32, i32
  }
}

module attributes {stable_mosaic.version = 11 : i64} {
  func.func @_conv_taps_kernel(%arg0: i32, %arg1: i32, %arg2: memref<1x1x264x64xbf16, #tpu.memory_space<vmem>>, %arg3: memref<9x64x64xbf16, #tpu.memory_space<vmem>>, %arg4: memref<1x64xf32, #tpu.memory_space<vmem>>, %arg5: memref<1x192x64xbf16, #tpu.memory_space<vmem>>, %arg6: memref<192x64xf32, #tpu.memory_space<vmem>>) attributes {dimension_semantics = [#tpu.dimension_semantics<parallel>, #tpu.dimension_semantics<parallel>], iteration_bounds = array<i64: 1, 4>, scalar_prefetch = 0 : i64, scratch_operands = 1 : i64, tpu.core_type = #tpu.core_type<tc>, window_params = [{transform_indices = @transform_0, window_bounds = array<i64: 1, 1, 264, 64>}, {pipeline_mode = #tpu.pipeline_mode<synchronous>, transform_indices = @transform_1, window_bounds = array<i64: 9, 64, 64>}, {pipeline_mode = #tpu.pipeline_mode<synchronous>, transform_indices = @transform_2, window_bounds = array<i64: 1, 64>}, {transform_indices = @transform_3, window_bounds = array<i64: 1, 192, 64>}]} {
    %c0 = arith.constant 0 : index
    %c0_0 = arith.constant 0 : index
    %c0_1 = arith.constant 0 : index
    %c0_2 = arith.constant 0 : index
    %0 = vector.load %arg2[%c0, %c0_0, %c0_1, %c0_2] : memref<1x1x264x64xbf16, #tpu.memory_space<vmem>>, vector<1x1x192x64xbf16>
    %1 = vector.shape_cast %0 : vector<1x1x192x64xbf16> to vector<192x64xbf16>
    %c0_3 = arith.constant 0 : index
    %c0_4 = arith.constant 0 : index
    %c0_5 = arith.constant 0 : index
    %2 = vector.load %arg3[%c0_3, %c0_4, %c0_5] : memref<9x64x64xbf16, #tpu.memory_space<vmem>>, vector<1x64x64xbf16>
    %3 = vector.shape_cast %2 : vector<1x64x64xbf16> to vector<64x64xbf16>
    %cst = arith.constant dense<0.000000e+00> : vector<192x64xf32>
    %4 = tpu.matmul %1, %3, %cst {dimension_numbers = #tpu.dot_dimension_numbers<[1], [0], [0], [1], [0, 0, 1, 1], [], []>} : vector<192x64xbf16>, vector<64x64xbf16>, vector<192x64xf32> -> vector<192x64xf32>
    %c0_6 = arith.constant 0 : index
    %c0_7 = arith.constant 0 : index
    %5 = vector.load %arg6[%c0_6, %c0_7] : memref<192x64xf32, #tpu.memory_space<vmem>>, vector<192x64xf32>
    tpu.vector_store %arg6[%c0_6, %c0_7], %4 {strides = array<i32>} : memref<192x64xf32, #tpu.memory_space<vmem>>, vector<192x64xf32>,
    %c0_8 = arith.constant 0 : index
    %c0_9 = arith.constant 0 : index
    %c1 = arith.constant 1 : index
    %c0_10 = arith.constant 0 : index
    %6 = vector.load %arg2[%c0_8, %c0_9, %c1, %c0_10] : memref<1x1x264x64xbf16, #tpu.memory_space<vmem>>, vector<1x1x192x64xbf16>
    %7 = vector.shape_cast %6 : vector<1x1x192x64xbf16> to vector<192x64xbf16>
    %c1_11 = arith.constant 1 : index
    %c0_12 = arith.constant 0 : index
    %c0_13 = arith.constant 0 : index
    %8 = vector.load %arg3[%c1_11, %c0_12, %c0_13] : memref<9x64x64xbf16, #tpu.memory_space<vmem>>, vector<1x64x64xbf16>
    %9 = vector.shape_cast %8 : vector<1x64x64xbf16> to vector<64x64xbf16>
    %cst_14 = arith.constant dense<0.000000e+00> : vector<192x64xf32>
    %10 = tpu.matmul %7, %9, %cst_14 {dimension_numbers = #tpu.dot_dimension_numbers<[1], [0], [0], [1], [0, 0, 1, 1], [], []>} : vector<192x64xbf16>, vector<64x64xbf16>, vector<192x64xf32> -> vector<192x64xf32>
    %c0_15 = arith.constant 0 : index
    %c0_16 = arith.constant 0 : index
    %11 = vector.load %arg6[%c0_15, %c0_16] : memref<192x64xf32, #tpu.memory_space<vmem>>, vector<192x64xf32>
    %12 = arith.addf %11, %10 : vector<192x64xf32>
    %c0_17 = arith.constant 0 : index
    %c0_18 = arith.constant 0 : index
    %13 = vector.load %arg6[%c0_17, %c0_18] : memref<192x64xf32, #tpu.memory_space<vmem>>, vector<192x64xf32>
    tpu.vector_store %arg6[%c0_17, %c0_18], %12 {strides = array<i32>} : memref<192x64xf32, #tpu.memory_space<vmem>>, vector<192x64xf32>,
    %c0_19 = arith.constant 0 : index
    %c0_20 = arith.constant 0 : index
    %c2 = arith.constant 2 : index
    %c0_21 = arith.constant 0 : index
    %14 = vector.load %arg2[%c0_19, %c0_20, %c2, %c0_21] : memref<1x1x264x64xbf16, #tpu.memory_space<vmem>>, vector<1x1x192x64xbf16>
    %15 = vector.shape_cast %14 : vector<1x1x192x64xbf16> to vector<192x64xbf16>
    %c2_22 = arith.constant 2 : index
    %c0_23 = arith.constant 0 : index
    %c0_24 = arith.constant 0 : index
    %16 = vector.load %arg3[%c2_22, %c0_23, %c0_24] : memref<9x64x64xbf16, #tpu.memory_space<vmem>>, vector<1x64x64xbf16>
    %17 = vector.shape_cast %16 : vector<1x64x64xbf16> to vector<64x64xbf16>
    %cst_25 = arith.constant dense<0.000000e+00> : vector<192x64xf32>
    %18 = tpu.matmul %15, %17, %cst_25 {dimension_numbers = #tpu.dot_dimension_numbers<[1], [0], [0], [1], [0, 0, 1, 1], [], []>} : vector<192x64xbf16>, vector<64x64xbf16>, vector<192x64xf32> -> vector<192x64xf32>
    %c0_26 = arith.constant 0 : index
    %c0_27 = arith.constant 0 : index
    %19 = vector.load %arg6[%c0_26, %c0_27] : memref<192x64xf32, #tpu.memory_space<vmem>>, vector<192x64xf32>
    %20 = arith.addf %19, %18 : vector<192x64xf32>
    %c0_28 = arith.constant 0 : index
    %c0_29 = arith.constant 0 : index
    %21 = vector.load %arg6[%c0_28, %c0_29] : memref<192x64xf32, #tpu.memory_space<vmem>>, vector<192x64xf32>
    tpu.vector_store %arg6[%c0_28, %c0_29], %20 {strides = array<i32>} : memref<192x64xf32, #tpu.memory_space<vmem>>, vector<192x64xf32>,
    %c0_30 = arith.constant 0 : index
    %c0_31 = arith.constant 0 : index
    %c24 = arith.constant 24 : index
    %c0_32 = arith.constant 0 : index
    %22 = vector.load %arg2[%c0_30, %c0_31, %c24, %c0_32] : memref<1x1x264x64xbf16, #tpu.memory_space<vmem>>, vector<1x1x192x64xbf16>
    %23 = vector.shape_cast %22 : vector<1x1x192x64xbf16> to vector<192x64xbf16>
    %c3 = arith.constant 3 : index
    %c0_33 = arith.constant 0 : index
    %c0_34 = arith.constant 0 : index
    %24 = vector.load %arg3[%c3, %c0_33, %c0_34] : memref<9x64x64xbf16, #tpu.memory_space<vmem>>, vector<1x64x64xbf16>
    %25 = vector.shape_cast %24 : vector<1x64x64xbf16> to vector<64x64xbf16>
    %cst_35 = arith.constant dense<0.000000e+00> : vector<192x64xf32>
    %26 = tpu.matmul %23, %25, %cst_35 {dimension_numbers = #tpu.dot_dimension_numbers<[1], [0], [0], [1], [0, 0, 1, 1], [], []>} : vector<192x64xbf16>, vector<64x64xbf16>, vector<192x64xf32> -> vector<192x64xf32>
    %c0_36 = arith.constant 0 : index
    %c0_37 = arith.constant 0 : index
    %27 = vector.load %arg6[%c0_36, %c0_37] : memref<192x64xf32, #tpu.memory_space<vmem>>, vector<192x64xf32>
    %28 = arith.addf %27, %26 : vector<192x64xf32>
    %c0_38 = arith.constant 0 : index
    %c0_39 = arith.constant 0 : index
    %29 = vector.load %arg6[%c0_38, %c0_39] : memref<192x64xf32, #tpu.memory_space<vmem>>, vector<192x64xf32>
    tpu.vector_store %arg6[%c0_38, %c0_39], %28 {strides = array<i32>} : memref<192x64xf32, #tpu.memory_space<vmem>>, vector<192x64xf32>,
    %c0_40 = arith.constant 0 : index
    %c0_41 = arith.constant 0 : index
    %c25 = arith.constant 25 : index
    %c0_42 = arith.constant 0 : index
    %30 = vector.load %arg2[%c0_40, %c0_41, %c25, %c0_42] : memref<1x1x264x64xbf16, #tpu.memory_space<vmem>>, vector<1x1x192x64xbf16>
    %31 = vector.shape_cast %30 : vector<1x1x192x64xbf16> to vector<192x64xbf16>
    %c4 = arith.constant 4 : index
    %c0_43 = arith.constant 0 : index
    %c0_44 = arith.constant 0 : index
    %32 = vector.load %arg3[%c4, %c0_43, %c0_44] : memref<9x64x64xbf16, #tpu.memory_space<vmem>>, vector<1x64x64xbf16>
    %33 = vector.shape_cast %32 : vector<1x64x64xbf16> to vector<64x64xbf16>
    %cst_45 = arith.constant dense<0.000000e+00> : vector<192x64xf32>
    %34 = tpu.matmul %31, %33, %cst_45 {dimension_numbers = #tpu.dot_dimension_numbers<[1], [0], [0], [1], [0, 0, 1, 1], [], []>} : vector<192x64xbf16>, vector<64x64xbf16>, vector<192x64xf32> -> vector<192x64xf32>
    %c0_46 = arith.constant 0 : index
    %c0_47 = arith.constant 0 : index
    %35 = vector.load %arg6[%c0_46, %c0_47] : memref<192x64xf32, #tpu.memory_space<vmem>>, vector<192x64xf32>
    %36 = arith.addf %35, %34 : vector<192x64xf32>
    %c0_48 = arith.constant 0 : index
    %c0_49 = arith.constant 0 : index
    %37 = vector.load %arg6[%c0_48, %c0_49] : memref<192x64xf32, #tpu.memory_space<vmem>>, vector<192x64xf32>
    tpu.vector_store %arg6[%c0_48, %c0_49], %36 {strides = array<i32>} : memref<192x64xf32, #tpu.memory_space<vmem>>, vector<192x64xf32>,
    %c0_50 = arith.constant 0 : index
    %c0_51 = arith.constant 0 : index
    %c26 = arith.constant 26 : index
    %c0_52 = arith.constant 0 : index
    %38 = vector.load %arg2[%c0_50, %c0_51, %c26, %c0_52] : memref<1x1x264x64xbf16, #tpu.memory_space<vmem>>, vector<1x1x192x64xbf16>
    %39 = vector.shape_cast %38 : vector<1x1x192x64xbf16> to vector<192x64xbf16>
    %c5 = arith.constant 5 : index
    %c0_53 = arith.constant 0 : index
    %c0_54 = arith.constant 0 : index
    %40 = vector.load %arg3[%c5, %c0_53, %c0_54] : memref<9x64x64xbf16, #tpu.memory_space<vmem>>, vector<1x64x64xbf16>
    %41 = vector.shape_cast %40 : vector<1x64x64xbf16> to vector<64x64xbf16>
    %cst_55 = arith.constant dense<0.000000e+00> : vector<192x64xf32>
    %42 = tpu.matmul %39, %41, %cst_55 {dimension_numbers = #tpu.dot_dimension_numbers<[1], [0], [0], [1], [0, 0, 1, 1], [], []>} : vector<192x64xbf16>, vector<64x64xbf16>, vector<192x64xf32> -> vector<192x64xf32>
    %c0_56 = arith.constant 0 : index
    %c0_57 = arith.constant 0 : index
    %43 = vector.load %arg6[%c0_56, %c0_57] : memref<192x64xf32, #tpu.memory_space<vmem>>, vector<192x64xf32>
    %44 = arith.addf %43, %42 : vector<192x64xf32>
    %c0_58 = arith.constant 0 : index
    %c0_59 = arith.constant 0 : index
    %45 = vector.load %arg6[%c0_58, %c0_59] : memref<192x64xf32, #tpu.memory_space<vmem>>, vector<192x64xf32>
    tpu.vector_store %arg6[%c0_58, %c0_59], %44 {strides = array<i32>} : memref<192x64xf32, #tpu.memory_space<vmem>>, vector<192x64xf32>,
    %c0_60 = arith.constant 0 : index
    %c0_61 = arith.constant 0 : index
    %c48 = arith.constant 48 : index
    %c0_62 = arith.constant 0 : index
    %46 = vector.load %arg2[%c0_60, %c0_61, %c48, %c0_62] : memref<1x1x264x64xbf16, #tpu.memory_space<vmem>>, vector<1x1x192x64xbf16>
    %47 = vector.shape_cast %46 : vector<1x1x192x64xbf16> to vector<192x64xbf16>
    %c6 = arith.constant 6 : index
    %c0_63 = arith.constant 0 : index
    %c0_64 = arith.constant 0 : index
    %48 = vector.load %arg3[%c6, %c0_63, %c0_64] : memref<9x64x64xbf16, #tpu.memory_space<vmem>>, vector<1x64x64xbf16>
    %49 = vector.shape_cast %48 : vector<1x64x64xbf16> to vector<64x64xbf16>
    %cst_65 = arith.constant dense<0.000000e+00> : vector<192x64xf32>
    %50 = tpu.matmul %47, %49, %cst_65 {dimension_numbers = #tpu.dot_dimension_numbers<[1], [0], [0], [1], [0, 0, 1, 1], [], []>} : vector<192x64xbf16>, vector<64x64xbf16>, vector<192x64xf32> -> vector<192x64xf32>
    %c0_66 = arith.constant 0 : index
    %c0_67 = arith.constant 0 : index
    %51 = vector.load %arg6[%c0_66, %c0_67] : memref<192x64xf32, #tpu.memory_space<vmem>>, vector<192x64xf32>
    %52 = arith.addf %51, %50 : vector<192x64xf32>
    %c0_68 = arith.constant 0 : index
    %c0_69 = arith.constant 0 : index
    %53 = vector.load %arg6[%c0_68, %c0_69] : memref<192x64xf32, #tpu.memory_space<vmem>>, vector<192x64xf32>
    tpu.vector_store %arg6[%c0_68, %c0_69], %52 {strides = array<i32>} : memref<192x64xf32, #tpu.memory_space<vmem>>, vector<192x64xf32>,
    %c0_70 = arith.constant 0 : index
    %c0_71 = arith.constant 0 : index
    %c49 = arith.constant 49 : index
    %c0_72 = arith.constant 0 : index
    %54 = vector.load %arg2[%c0_70, %c0_71, %c49, %c0_72] : memref<1x1x264x64xbf16, #tpu.memory_space<vmem>>, vector<1x1x192x64xbf16>
    %55 = vector.shape_cast %54 : vector<1x1x192x64xbf16> to vector<192x64xbf16>
    %c7 = arith.constant 7 : index
    %c0_73 = arith.constant 0 : index
    %c0_74 = arith.constant 0 : index
    %56 = vector.load %arg3[%c7, %c0_73, %c0_74] : memref<9x64x64xbf16, #tpu.memory_space<vmem>>, vector<1x64x64xbf16>
    %57 = vector.shape_cast %56 : vector<1x64x64xbf16> to vector<64x64xbf16>
    %cst_75 = arith.constant dense<0.000000e+00> : vector<192x64xf32>
    %58 = tpu.matmul %55, %57, %cst_75 {dimension_numbers = #tpu.dot_dimension_numbers<[1], [0], [0], [1], [0, 0, 1, 1], [], []>} : vector<192x64xbf16>, vector<64x64xbf16>, vector<192x64xf32> -> vector<192x64xf32>
    %c0_76 = arith.constant 0 : index
    %c0_77 = arith.constant 0 : index
    %59 = vector.load %arg6[%c0_76, %c0_77] : memref<192x64xf32, #tpu.memory_space<vmem>>, vector<192x64xf32>
    %60 = arith.addf %59, %58 : vector<192x64xf32>
    %c0_78 = arith.constant 0 : index
    %c0_79 = arith.constant 0 : index
    %61 = vector.load %arg6[%c0_78, %c0_79] : memref<192x64xf32, #tpu.memory_space<vmem>>, vector<192x64xf32>
    tpu.vector_store %arg6[%c0_78, %c0_79], %60 {strides = array<i32>} : memref<192x64xf32, #tpu.memory_space<vmem>>, vector<192x64xf32>,
    %c0_80 = arith.constant 0 : index
    %c0_81 = arith.constant 0 : index
    %c50 = arith.constant 50 : index
    %c0_82 = arith.constant 0 : index
    %62 = vector.load %arg2[%c0_80, %c0_81, %c50, %c0_82] : memref<1x1x264x64xbf16, #tpu.memory_space<vmem>>, vector<1x1x192x64xbf16>
    %63 = vector.shape_cast %62 : vector<1x1x192x64xbf16> to vector<192x64xbf16>
    %c8 = arith.constant 8 : index
    %c0_83 = arith.constant 0 : index
    %c0_84 = arith.constant 0 : index
    %64 = vector.load %arg3[%c8, %c0_83, %c0_84] : memref<9x64x64xbf16, #tpu.memory_space<vmem>>, vector<1x64x64xbf16>
    %65 = vector.shape_cast %64 : vector<1x64x64xbf16> to vector<64x64xbf16>
    %cst_85 = arith.constant dense<0.000000e+00> : vector<192x64xf32>
    %66 = tpu.matmul %63, %65, %cst_85 {dimension_numbers = #tpu.dot_dimension_numbers<[1], [0], [0], [1], [0, 0, 1, 1], [], []>} : vector<192x64xbf16>, vector<64x64xbf16>, vector<192x64xf32> -> vector<192x64xf32>
    %c0_86 = arith.constant 0 : index
    %c0_87 = arith.constant 0 : index
    %67 = vector.load %arg6[%c0_86, %c0_87] : memref<192x64xf32, #tpu.memory_space<vmem>>, vector<192x64xf32>
    %68 = arith.addf %67, %66 : vector<192x64xf32>
    %c0_88 = arith.constant 0 : index
    %c0_89 = arith.constant 0 : index
    %69 = vector.load %arg6[%c0_88, %c0_89] : memref<192x64xf32, #tpu.memory_space<vmem>>, vector<192x64xf32>
    tpu.vector_store %arg6[%c0_88, %c0_89], %68 {strides = array<i32>} : memref<192x64xf32, #tpu.memory_space<vmem>>, vector<192x64xf32>,
    %c0_90 = arith.constant 0 : index
    %c0_91 = arith.constant 0 : index
    %70 = vector.load %arg6[%c0_90, %c0_91] : memref<192x64xf32, #tpu.memory_space<vmem>>, vector<192x64xf32>
    %c0_92 = arith.constant 0 : index
    %c0_93 = arith.constant 0 : index
    %71 = vector.load %arg4[%c0_92, %c0_93] : memref<1x64xf32, #tpu.memory_space<vmem>>, vector<1x64xf32>
    %72 = vector.broadcast %71 : vector<1x64xf32> to vector<192x64xf32>
    %73 = arith.addf %70, %72 : vector<192x64xf32>
    %cst_94 = arith.constant 0.000000e+00 : f32
    %74 = vector.broadcast %cst_94 : f32 to vector<192x64xf32>
    %75 = arith.maximumf %73, %74 : vector<192x64xf32>
    %76 = arith.truncf %75 : vector<192x64xf32> to vector<192x64xbf16>
    %c0_95 = arith.constant 0 : index
    %c0_96 = arith.constant 0 : index
    %c0_97 = arith.constant 0 : index
    %77 = vector.load %arg5[%c0_95, %c0_96, %c0_97] : memref<1x192x64xbf16, #tpu.memory_space<vmem>>, vector<1x192x64xbf16>
    %78 = vector.shape_cast %77 : vector<1x192x64xbf16> to vector<192x64xbf16>
    %79 = vector.shape_cast %76 : vector<192x64xbf16> to vector<1x192x64xbf16>
    tpu.vector_store %arg5[%c0_95, %c0_96, %c0_97], %79 {strides = array<i32>} : memref<1x192x64xbf16, #tpu.memory_space<vmem>>, vector<1x192x64xbf16>,
    return
  }
  func.func @transform_0(%arg0: i32, %arg1: i32) -> (i32, i32, i32, i32) {
    %c0_i32 = arith.constant 0 : i32
    %c0_i32_0 = arith.constant 0 : i32
    %c0_i32_1 = arith.constant 0 : i32
    return %arg0, %arg1, %c0_i32, %c0_i32_0 : i32, i32, i32, i32
  }
  func.func @transform_1(%arg0: i32, %arg1: i32) -> (i32, i32, i32) {
    %c0_i32 = arith.constant 0 : i32
    %c0_i32_0 = arith.constant 0 : i32
    %c0_i32_1 = arith.constant 0 : i32
    %c0_i32_2 = arith.constant 0 : i32
    return %c0_i32, %c0_i32_0, %c0_i32_1 : i32, i32, i32
  }
  func.func @transform_2(%arg0: i32, %arg1: i32) -> (i32, i32) {
    %c0_i32 = arith.constant 0 : i32
    %c0_i32_0 = arith.constant 0 : i32
    %c0_i32_1 = arith.constant 0 : i32
    return %c0_i32, %c0_i32_0 : i32, i32
  }
  func.func @transform_3(%arg0: i32, %arg1: i32) -> (i32, i32, i32) {
    %c0_i32 = arith.constant 0 : i32
    %c0_i32_0 = arith.constant 0 : i32
    return %arg0, %arg1, %c0_i32 : i32, i32, i32
  }
}

</mosaic_0001>

<llo_original>
// kernel: tpu_custom_call.1
$region0: #{tpu_custom_call.1}
  #allocation0 [shape = 'u32[]', space=smem, size = 0x4, offset = 0x4, fixed_abs, tag = 'smem constant byte address 0x4 - core index']
  #allocation1 [shape = 'u32[144,128]{1,0:T(1,128)}', space=vmem, size = 0x12000, scoped, tag = 'internal scratch']
  %s0 = inlined_call_operand.hbm [shape: f32[8,128], index: 0, kind: input, shape index: {}]
  %s1 = inlined_call_operand.hbm [shape: f32[16,128], index: 1, kind: output, shape index: {}]
  %s2 = sld [smem:[#allocation0]]
  $region41: #{tpu_custom_call.1} parent=0
    _
  %s4 = ssub.s32 1, %s2
  %s5 = scalar_select 0, %s4, %s2
  $region1: #{tpu_custom_call.1} parent=0
    #allocation2 [shape = 'u8[4096]{0}', space=vmem, size = 0x1000, scoped, tag = 'input window, operand 0, single buffered']
    #allocation3 [shape = 's32[2]{0}', space=sflag, size = 0x8, scoped, tag = 'scoped memory for tpu_custom_call.1']
    #allocation4 [shape = 's32[2]{0}', space=sflag, size = 0x8, scoped, tag = 'scoped memory for tpu_custom_call.1']
    #allocation5 [shape = 'u8[8192]{0}', space=vmem, size = 0x2000, scoped, tag = 'output window, operand 0']
    %6 = vsyncpa [#allocation3], 0
    %7 = vsyncpa [#allocation4], 0
    %s8 = scalar_lea.sflag [#allocation4], 1
    %9 = vsyncpa %s8, 0
    loop: start=0, step=1, limit=4
    $region2: #{tpu_custom_call.1} parent=1 // loop_pre_header
      _
    $region3: #{tpu_custom_call.1} parent=1 // loop_header
      %s11 = sphi 0, %s15
      %p12 = scmp.ge.s32.totalorder %s11, 4
      %s19 = sphi 0, %s19
      %s21 = sphi 0, %s19
      %s22 = sphi 0, %s21
      %s36 = sphi 0, %s22
      %s42 = sphi 0, %s44
      %s45 = sphi 0, %s42
      %s46 = sphi 0, %s45
      %s62 = sphi 0, %s46
    $region4: #{tpu_custom_call.1} parent=1 // loop_header_branch
      %14 = sbr.rel (%p12) target = $region8
    $region5: #{tpu_custom_call.1} parent=1 // loop_body
      %s16 = ssub.s32 %s11, 1
      %s17 = ssub.s32 %s11, 2
      %s18 = sadd.s32 %s11, 1
      %s20 = sadd.s32 %s19, 1
      %p23 = scmp.eq.s32.totalorder %s11, 1
      %p24 = scmp.ne.s32.totalorder %s19, %s21
      %p25 = scmp.eq.s32.totalorder %s11, 0
      %p26 = por %p24, %p25
      %p27 = scmp.ne.s32.totalorder %s19, %s21
      %p28 = scmp.eq.s32.totalorder %s16, 1
      %p29 = por %p27, %p28
      %p30 = scmp.ne.s32.totalorder %s21, %s22
      %p31 = scmp.eq.s32.totalorder %s16, 0
      %p32 = por %p30, %p31
      %p33 = scmp.ne.s32.totalorder %s21, %s22
      %p34 = scmp.eq.s32.totalorder %s17, 1
      %p35 = por %p33, %p34
      %p37 = scmp.ne.s32.totalorder %s22, %s36
      %p38 = scmp.eq.s32.totalorder %s17, 0
      %p39 = por %p37, %p38
      %s40 = ssub.s32 %s11, %s18
      %p41 = scmp.eq.s32.totalorder %s40, 0
      %s43 = sadd.s32 %s42, 1
      %s44 = scalar_select %p41, %s42, %s43
      %p47 = pneg %p41
      %p48 = scmp.eq.s32.totalorder %s11, 1
      %p49 = por %p47, %p48
      %p50 = scmp.ne.s32.totalorder %s42, %s45
      %p51 = scmp.eq.s32.totalorder %s11, 0
      %p52 = por %p50, %p51
      %p53 = scmp.ne.s32.totalorder %s42, %s45
      %p54 = scmp.eq.s32.totalorder %s16, 1
      %p55 = por %p53, %p54
      %p56 = scmp.ne.s32.totalorder %s45, %s46
      %p57 = scmp.eq.s32.totalorder %s16, 0
      %p58 = por %p56, %p57
      %p59 = scmp.ne.s32.totalorder %s45, %s46
      %p60 = scmp.eq.s32.totalorder %s17, 1
      %p61 = por %p59, %p60
      %p63 = scmp.ne.s32.totalorder %s46, %s62
      %p64 = scmp.eq.s32.totalorder %s17, 0
      %p65 = por %p63, %p64
      %p66 = scmp.le.s32.totalorder 1, %s11
      %p67 = scmp.lt.s32.totalorder %s11, 3
      %p68 = pnand %p66, %p67
      %p69 = pneg %p68
      // Predicated region
      $region9: #{tpu_custom_call.1} parent=5 // pred_check
        _
      $region10: #{tpu_custom_call.1} parent=5 // pred_check_branch
        %71 = sbr.rel (%p68) target = $region12
      $region11: #{tpu_custom_call.1} parent=5 // pred_region
        %s72 = ssub.s32 %s11, 1
        // Predicated region
        $region13: #{tpu_custom_call.1} parent=11 // pred_check
          %p73 = pneg %p32
        $region14: #{tpu_custom_call.1} parent=11 // pred_check_branch
          %75 = sbr.rel (%p73) target = $region16
        $region15: #{tpu_custom_call.1} parent=11 // pred_region
          %s77 = ssub.s32 128, 128
          %78 = vsyncadd [#allocation3], %s77
          %s80 = sshll.u32 [#allocation2], 4
          %s81 = int_to_ptr.vmem [resolvable:$true] %s80
          %83 = dma.hbm_to_vmem [thread:$0]  %s0, 128, %s81, [#allocation3]
        $region16: #{tpu_custom_call.1} parent=11 // pred_fallthru
          _
      $region12: #{tpu_custom_call.1} parent=5 // pred_fallthru
        _
      %p84 = scmp.lt.s32.totalorder %s11, 2
      // Predicated region
      $region17: #{tpu_custom_call.1} parent=5 // pred_check
        %p85 = pneg %p84
      $region18: #{tpu_custom_call.1} parent=5 // pred_check_branch
        %87 = sbr.rel (%p85) target = $region20
      $region19: #{tpu_custom_call.1} parent=5 // pred_region
        _
      $region20: #{tpu_custom_call.1} parent=5 // pred_fallthru
        _
      %p88 = scmp.le.s32.totalorder 1, %s11
      %p89 = scmp.lt.s32.totalorder %s11, 3
      %p90 = pnand %p88, %p89
      %p91 = pneg %p90
      // Predicated region
      $region21: #{tpu_custom_call.1} parent=5 // pred_check
        _
      $region22: #{tpu_custom_call.1} parent=5 // pred_check_branch
        %93 = sbr.rel (%p90) target = $region24
      $region23: #{tpu_custom_call.1} parent=5 // pred_region
        %s94 = ssub.s32 %s11, 1
        // Predicated region
        $region25: #{tpu_custom_call.1} parent=23 // pred_check
          %p95 = pneg %p32
        $region26: #{tpu_custom_call.1} parent=23 // pred_check_branch
          %97 = sbr.rel (%p95) target = $region28
        $region27: #{tpu_custom_call.1} parent=23 // pred_region
          %98 = dma.done [#allocation3], 128
        $region28: #{tpu_custom_call.1} parent=23 // pred_fallthru
          _
        %p99 = pneg %p32
        %p100 = pneg %p29
        %p101 = pneg %p58
        %p102 = pneg %p55
        %s103 = sand.u32 %s45, 1
        %s104 = scalar_lea.sflag [#allocation4], %s103
        %s105 = sand.u32 %s45, 1
        %s106 = smul.addr %s105, 8
        %s107 = scalar_lea.vmem [#allocation5], %s106
        %v108 = vld [vmem:[#allocation2] sm:$0xff]
        %109 = vst [vmem:[%s107] sm:$0xff] %v108
        %s110 = sand.u32 %s45, 1
        %s111 = scalar_lea.sflag [#allocation4], %s110
        %s112 = sand.u32 %s45, 1
        %s113 = smul.addr %s112, 8
        %s114 = scalar_lea.vmem [#allocation5], %s113
        // Predicated region
        $region29: #{tpu_custom_call.1} parent=23 // pred_check
          %p115 = pneg %p55
        $region30: #{tpu_custom_call.1} parent=23 // pred_check_branch
          %117 = sbr.rel (%p115) target = $region32
        $region31: #{tpu_custom_call.1} parent=23 // pred_region
          %s119 = ssub.s32 128, 128
          %120 = vsyncadd %s111, %s119
          %s121 = smul.addr %s16, 128
          %s122 = scalar_lea.hbm %s1, %s121
          %s124 = sshll.u32 %s114, 4
          %s125 = int_to_ptr.vmem [resolvable:$true] %s124
          %127 = dma.vmem_to_hbm [thread:$0]  %s125, 128, %s122, %s111
        $region32: #{tpu_custom_call.1} parent=23 // pred_fallthru
          _
      $region24: #{tpu_custom_call.1} parent=5 // pred_fallthru
        _
      %p128 = scmp.le.s32.totalorder 2, %s11
      // Predicated region
      $region33: #{tpu_custom_call.1} parent=5 // pred_check
        %p129 = pneg %p128
      $region34: #{tpu_custom_call.1} parent=5 // pred_check_branch
        %131 = sbr.rel (%p129) target = $region36
      $region35: #{tpu_custom_call.1} parent=5 // pred_region
        %s132 = ssub.s32 %s11, 2
        // Predicated region
        $region37: #{tpu_custom_call.1} parent=35 // pred_check
          %p133 = pneg %p61
        $region38: #{tpu_custom_call.1} parent=35 // pred_check_branch
          %135 = sbr.rel (%p133) target = $region40
        $region39: #{tpu_custom_call.1} parent=35 // pred_region
          %s136 = sand.u32 %s46, 1
          %s137 = scalar_lea.sflag [#allocation4], %s136
          %s138 = sand.u32 %s46, 1
          %s139 = smul.addr %s138, 8
          %s140 = scalar_lea.vmem [#allocation5], %s139
          %141 = dma.done %s137, 128
        $region40: #{tpu_custom_call.1} parent=35 // pred_fallthru
          _
      $region36: #{tpu_custom_call.1} parent=5 // pred_fallthru
        _
    $region6: #{tpu_custom_call.1} parent=1 // loop_footer
      %s15 = sadd.s32 1, %s11
    $region7: #{tpu_custom_call.1} parent=1 // loop_footer_branch
      %10 = sbr.rel target = $region3
    $region8: #{tpu_custom_call.1} parent=1 // loop_exit
      _
    %142 = vsyncpa [#allocation3], 1
    %s143 = scalar_lea.sflag [#allocation3], 1
    %144 = vsyncpa %s143, 1
    %145 = vsyncpa [#allocation4], 1
    %s146 = scalar_lea.sflag [#allocation4], 1
    %147 = vsyncpa %s146, 1

// kernel: tpu_custom_call.1
$region0: #{tpu_custom_call.1}
  #allocation0 [shape = 'u32[]', space=smem, size = 0x4, offset = 0x4, fixed_abs, tag = 'smem constant byte address 0x4 - core index']
  #allocation1 [shape = 'u32[144,128]{1,0:T(1,128)}', space=vmem, size = 0x12000, scoped, tag = 'internal scratch']
  #allocation2 [shape = 'f32[192,64]{1,0:T(8,128)}', space=vmem, size = 0x18000, scoped, tag = 'scratch operand']
  %s0 = inlined_call_operand.vmem [shape: bf16[1,4,264,64], index: 0, kind: input, shape index: {}]
  %s1 = inlined_call_operand.vmem [shape: bf16[9,64,64], index: 1, kind: input, shape index: {}]
  %s2 = inlined_call_operand.vmem [shape: f32[1,64], index: 2, kind: input, shape index: {}]
  %s3 = inlined_call_operand.vmem [shape: bf16[1,768,64], index: 3, kind: output, shape index: {}]
  %s4 = sld [smem:[#allocation0]]
  $region45: #{tpu_custom_call.1} parent=0
    _
  %s6 = ssub.s32 1, %s4
  %s7 = scalar_select 0, %s6, %s4
  loop: start=0, step=1, limit=6
  $region2: #{tpu_custom_call.1} parent=0 // loop_pre_header
    _
  $region3: #{tpu_custom_call.1} parent=0 // loop_header
    %s9 = sphi 0, %s13
    %p10 = scmp.ge.s32.totalorder %s9, 6
    %s16 = sphi 0, %s28
    %s17 = sphi 0, %s24
    %s18 = sphi 0, %s16
    %s19 = sphi 0, %s17
    %s20 = sphi 0, %s18
    %s21 = sphi 0, %s19
    %s33 = sphi 0, %s35
    %s36 = sphi 0, %s33
    %s37 = sphi 0, %s36
    %s53 = sphi 0, %s37
    %s57 = sphi 0, %s57
    %s59 = sphi 0, %s57
    %s60 = sphi 0, %s59
    %s74 = sphi 0, %s60
    %s78 = sphi 0, %s78
    %s80 = sphi 0, %s78
    %s81 = sphi 0, %s80
    %s95 = sphi 0, %s81
    %s103 = sphi 0, %s105
    %s106 = sphi 0, %s103
    %s107 = sphi 0, %s106
    %s123 = sphi 0, %s107
  $region4: #{tpu_custom_call.1} parent=0 // loop_header_branch
    %12 = sbr.rel (%p10) target = $region8
  $region5: #{tpu_custom_call.1} parent=0 // loop_body
    %s14 = ssub.s32 %s9, 1
    %s15 = ssub.s32 %s9, 2
    %s22 = sadd.s32 1, %s17
    %p23 = scmp.ge.s32.totalorder %s22, 4
    %s24 = scalar_select %p23, 0, %s22
    %s25 = sadd.s32 1, %s16
    %s26 = scalar_select %p23, %s25, %s16
    %p27 = scmp.ge.s32.totalorder %s26, 1
    %s28 = scalar_select %p27, 0, %s26
    %s29 = ssub.s32 %s16, %s28
    %s30 = ssub.s32 %s17, %s24
    %s31 = sor.u32 %s29, %s30
    %p32 = scmp.eq.s32.totalorder %s31, 0
    %s34 = sadd.s32 %s33, 1
    %s35 = scalar_select %p32, %s33, %s34
    %p38 = pneg %p32
    %p39 = scmp.eq.s32.totalorder %s9, 3
    %p40 = por %p38, %p39
    %p41 = scmp.ne.s32.totalorder %s33, %s36
    %p42 = scmp.eq.s32.totalorder %s9, 0
    %p43 = por %p41, %p42
    %p44 = scmp.ne.s32.totalorder %s33, %s36
    %p45 = scmp.eq.s32.totalorder %s14, 3
    %p46 = por %p44, %p45
    %p47 = scmp.ne.s32.totalorder %s36, %s37
    %p48 = scmp.eq.s32.totalorder %s14, 0
    %p49 = por %p47, %p48
    %p50 = scmp.ne.s32.totalorder %s36, %s37
    %p51 = scmp.eq.s32.totalorder %s15, 3
    %p52 = por %p50, %p51
    %p54 = scmp.ne.s32.totalorder %s37, %s53
    %p55 = scmp.eq.s32.totalorder %s15, 0
    %p56 = por %p54, %p55
    %s58 = sadd.s32 %s57, 1
    %p61 = scmp.eq.s32.totalorder %s9, 3
    %p62 = scmp.ne.s32.totalorder %s57, %s59
    %p63 = scmp.eq.s32.totalorder %s9, 0
    %p64 = por %p62, %p63
    %p65 = scmp.ne.s32.totalorder %s57, %s59
    %p66 = scmp.eq.s32.totalorder %s14, 3
    %p67 = por %p65, %p66
    %p68 = scmp.ne.s32.totalorder %s59, %s60
    %p69 = scmp.eq.s32.totalorder %s14, 0
    %p70 = por %p68, %p69
    %p71 = scmp.ne.s32.totalorder %s59, %s60
    %p72 = scmp.eq.s32.totalorder %s15, 3
    %p73 = por %p71, %p72
    %p75 = scmp.ne.s32.totalorder %s60, %s74
    %p76 = scmp.eq.s32.totalorder %s15, 0
    %p77 = por %p75, %p76
    %s79 = sadd.s32 %s78, 1
    %p82 = scmp.eq.s32.totalorder %s9, 3
    %p83 = scmp.ne.s32.totalorder %s78, %s80
    %p84 = scmp.eq.s32.totalorder %s9, 0
    %p85 = por %p83, %p84
    %p86 = scmp.ne.s32.totalorder %s78, %s80
    %p87 = scmp.eq.s32.totalorder %s14, 3
    %p88 = por %p86, %p87
    %p89 = scmp.ne.s32.totalorder %s80, %s81
    %p90 = scmp.eq.s32.totalorder %s14, 0
    %p91 = por %p89, %p90
    %p92 = scmp.ne.s32.totalorder %s80, %s81
    %p93 = scmp.eq.s32.totalorder %s15, 3
    %p94 = por %p92, %p93
    %p96 = scmp.ne.s32.totalorder %s81, %s95
    %p97 = scmp.eq.s32.totalorder %s15, 0
    %p98 = por %p96, %p97
    %s99 = ssub.s32 %s16, %s28
    %s100 = ssub.s32 %s17, %s24
    %s101 = sor.u32 %s99, %s100
    %p102 = scmp.eq.s32.totalorder %s101, 0
    %s104 = sadd.s32 %s103, 1
    %s105 = scalar_select %p102, %s103, %s104
    %p108 = pneg %p102
    %p109 = scmp.eq.s32.totalorder %s9, 3
    %p110 = por %p108, %p109
    %p111 = scmp.ne.s32.totalorder %s103, %s106
    %p112 = scmp.eq.s32.totalorder %s9, 0
    %p113 = por %p111, %p112
    %p114 = scmp.ne.s32.totalorder %s103, %s106
    %p115 = scmp.eq.s32.totalorder %s14, 3
    %p116 = por %p114, %p115
    %p117 = scmp.ne.s32.totalorder %s106, %s107
    %p118 = scmp.eq.s32.totalorder %s14, 0
    %p119 = por %p117, %p118
    %p120 = scmp.ne.s32.totalorder %s106, %s107
    %p121 = scmp.eq.s32.totalorder %s15, 3
    %p122 = por %p120, %p121
    %p124 = scmp.ne.s32.totalorder %s107, %s123
    %p125 = scmp.eq.s32.totalorder %s15, 0
    %p126 = por %p124, %p125
    %p127 = scmp.le.s32.totalorder 1, %s9
    %p128 = scmp.lt.s32.totalorder %s9, 5
    %p129 = pnand %p127, %p128
    %p130 = pneg %p129
    // Predicated region
    $region9: #{tpu_custom_call.1} parent=5 // pred_check
      _
    $region10: #{tpu_custom_call.1} parent=5 // pred_check_branch
      %132 = sbr.rel (%p129) target = $region12
    $region11: #{tpu_custom_call.1} parent=5 // pred_region
      %s133 = ssub.s32 %s9, 1
      // Predicated region
      $region13: #{tpu_custom_call.1} parent=11 // pred_check
        %p134 = pneg %p70
      $region14: #{tpu_custom_call.1} parent=11 // pred_check_branch
        %136 = sbr.rel (%p134) target = $region16
      $region15: #{tpu_custom_call.1} parent=11 // pred_region
        _
      $region16: #{tpu_custom_call.1} parent=11 // pred_fallthru
        _
      // Predicated region
      $region17: #{tpu_custom_call.1} parent=11 // pred_check
        %p137 = pneg %p91
      $region18: #{tpu_custom_call.1} parent=11 // pred_check_branch
        %139 = sbr.rel (%p137) target = $region20
      $region19: #{tpu_custom_call.1} parent=11 // pred_region
        _
      $region20: #{tpu_custom_call.1} parent=11 // pred_fallthru
        _
    $region12: #{tpu_custom_call.1} parent=5 // pred_fallthru
      _
    %p140 = scmp.lt.s32.totalorder %s9, 4
    // Predicated region
    $region21: #{tpu_custom_call.1} parent=5 // pred_check
      %p141 = pneg %p140
    $region22: #{tpu_custom_call.1} parent=5 // pred_check_branch
      %143 = sbr.rel (%p141) target = $region24
    $region23: #{tpu_custom_call.1} parent=5 // pred_region
      // Predicated region
      $region25: #{tpu_custom_call.1} parent=23 // pred_check
        %p144 = pneg %p43
      $region26: #{tpu_custom_call.1} parent=23 // pred_check_branch
        %146 = sbr.rel (%p144) target = $region28
      $region27: #{tpu_custom_call.1} parent=23 // pred_region
        %p147 = scmp.lt.s32.totalorder %s16, 0
        %s148 = scalar_select %p147, %s16, 0
        %p149 = scmp.lt.s32.totalorder %s17, 3
        %s150 = scalar_select %p149, %s17, 3
        %s151 = smul.addr %s150, 33
        %s152 = smul.addr %s148, 132
        %s153 = sadd.s32 %s151, %s152
        %s154 = smul.addr %s153, 4
        %s155 = scalar_lea.vmem %s0, %s154
      $region28: #{tpu_custom_call.1} parent=23 // pred_fallthru
        _
    $region24: #{tpu_custom_call.1} parent=5 // pred_fallthru
      _
    %p156 = scmp.le.s32.totalorder 1, %s9
    %p157 = scmp.lt.s32.totalorder %s9, 5
    %p158 = pnand %p156, %p157
    %p159 = pneg %p158
    // Predicated region
    $region29: #{tpu_custom_call.1} parent=5 // pred_check
      _
    $region30: #{tpu_custom_call.1} parent=5 // pred_check_branch
      %161 = sbr.rel (%p158) target = $region32
    $region31: #{tpu_custom_call.1} parent=5 // pred_region
      %s162 = ssub.s32 %s9, 1
      %p163 = scmp.lt.s32.totalorder %s18, 0
      %s164 = scalar_select %p163, %s18, 0
      %p165 = scmp.lt.s32.totalorder %s19, 3
      %s166 = scalar_select %p165, %s19, 3
      %s167 = smul.addr %s166, 33
      %s168 = smul.addr %s164, 132
      %s169 = sadd.s32 %s167, %s168
      %s170 = smul.addr %s169, 4
      %s171 = scalar_lea.vmem %s0, %s170
      %p172 = pneg %p49
      %p173 = pneg %p46
      %p174 = pneg %p70
      %p175 = pneg %p67
      %p176 = pneg %p91
      %p177 = pneg %p88
      %p178 = pneg %p119
      %p179 = pneg %p116
      %s180 = smul.u32 24, %s19
      %p181 = scmp.lt.s32.totalorder %s18, 0
      %s182 = scalar_select %p181, %s18, 0
      %p183 = scmp.lt.s32.totalorder %s180, 95
      %s184 = scalar_select %p183, %s180, 95
      %s185 = smul.addr %s182, 96
      %s186 = sadd.s32 %s184, %s185
      %s187 = smul.addr %s186, 4
      %s188 = scalar_lea.vmem %s3, %s187
      %p189 = scmp.lt.s32.totalorder %s18, 0
      %s190 = scalar_select %p189, %s18, 0
      %p191 = scmp.lt.s32.totalorder %s19, 3
      %s192 = scalar_select %p191, %s19, 3
      %s193 = smul.addr %s192, 33
      %s194 = smul.addr %s190, 132
      %s195 = sadd.s32 %s193, %s194
      %s196 = smul.addr %s195, 4
      %s197 = scalar_lea.vmem %s0, %s196
      %s198 = smul.u32 24, %s19
      %p199 = scmp.lt.s32.totalorder %s18, 0
      %s200 = scalar_select %p199, %s18, 0
      %p201 = scmp.lt.s32.totalorder %s198, 95
      %s202 = scalar_select %p201, %s198, 95
      %s203 = smul.addr %s200, 96
      %s204 = sadd.s32 %s202, %s203
      %s205 = smul.addr %s204, 4
      %s206 = scalar_lea.vmem %s3, %s205
      %s207 = smul.u32 24, %s19
      %v209 = vld [vmem:[%s197] sm:$0xf]
      %v210 = vld [vmem:[%s197 + $0x4] sm:$0xf]
      %v211 = vld [vmem:[%s197 + $0x8] sm:$0xf]
      %v212 = vld [vmem:[%s197 + $0xc] sm:$0xf]
      %v213 = vld [vmem:[%s197 + $0x10] sm:$0xf]
      %v214 = vld [vmem:[%s197 + $0x14] sm:$0xf]
      %v215 = vld [vmem:[%s197 + $0x18] sm:$0xf]
      %v216 = vld [vmem:[%s197 + $0x1c] sm:$0xf]
      %v217 = vld [vmem:[%s197 + $0x20] sm:$0xf]
      %v218 = vld [vmem:[%s197 + $0x24] sm:$0xf]
      %v219 = vld [vmem:[%s197 + $0x28] sm:$0xf]
      %v220 = vld [vmem:[%s197 + $0x2c] sm:$0xf]
      %v221 = vld [vmem:[%s197 + $0x30] sm:$0xf]
      %v222 = vld [vmem:[%s197 + $0x34] sm:$0xf]
      %v223 = vld [vmem:[%s197 + $0x38] sm:$0xf]
      %v224 = vld [vmem:[%s197 + $0x3c] sm:$0xf]
      %v225 = vld [vmem:[%s197 + $0x40] sm:$0xf]
      %v226 = vld [vmem:[%s197 + $0x44] sm:$0xf]
      %v227 = vld [vmem:[%s197 + $0x48] sm:$0xf]
      %v228 = vld [vmem:[%s197 + $0x4c] sm:$0xf]
      %v229 = vld [vmem:[%s197 + $0x50] sm:$0xf]
      %v230 = vld [vmem:[%s197 + $0x54] sm:$0xf]
      %v231 = vld [vmem:[%s197 + $0x58] sm:$0xf]
      %v232 = vld [vmem:[%s197 + $0x5c] sm:$0xf]
      %v233 = vld [vmem:[%s1] sm:$0xf]
      %v234 = vld [vmem:[%s1 + $0x4] sm:$0xf]
      %v235 = vld [vmem:[%s1 + $0x8] sm:$0xf]
      %v236 = vld [vmem:[%s1 + $0xc] sm:$0xf]
      %v237 = vld [vmem:[%s1 + $0x10] sm:$0xf]
      %v238 = vld [vmem:[%s1 + $0x14] sm:$0xf]
      %v239 = vld [vmem:[%s1 + $0x18] sm:$0xf]
      %v240 = vld [vmem:[%s1 + $0x1c] sm:$0xf]
      %v265 = vunpack.c.l.b16 %v209
      %v266 = vunpack.c.l.b16 %v210
      %v267 = vunpack.c.l.b16 %v211
      %v268 = vunpack.c.l.b16 %v212
      %v269 = vunpack.c.l.b16 %v213
      %v270 = vunpack.c.l.b16 %v214
      %v271 = vunpack.c.l.b16 %v215
      %v272 = vunpack.c.l.b16 %v216
      %v273 = vunpack.c.l.b16 %v217
      %v274 = vunpack.c.l.b16 %v218
      %v275 = vunpack.c.l.b16 %v219
      %v276 = vunpack.c.l.b16 %v220
      %v277 = vunpack.c.l.b16 %v221
      %v278 = vunpack.c.l.b16 %v222
      %v279 = vunpack.c.l.b16 %v223
      %v280 = vunpack.c.l.b16 %v224
      %v281 = vunpack.c.l.b16 %v225
      %v282 = vunpack.c.l.b16 %v226
      %v283 = vunpack.c.l.b16 %v227
      %v284 = vunpack.c.l.b16 %v228
      %v285 = vunpack.c.l.b16 %v229
      %v286 = vunpack.c.l.b16 %v230
      %v287 = vunpack.c.l.b16 %v231
      %v288 = vunpack.c.l.b16 %v232
      %v289 = vpack.c.b16 %v266, %v265
      %v290 = vpack.c.b16 %v268, %v267
      %v291 = vpack.c.b16 %v270, %v269
      %v292 = vpack.c.b16 %v272, %v271
      %v293 = vpack.c.b16 %v274, %v273
      %v294 = vpack.c.b16 %v276, %v275
      %v295 = vpack.c.b16 %v278, %v277
      %v296 = vpack.c.b16 %v280, %v279
      %v297 = vpack.c.b16 %v282, %v281
      %v298 = vpack.c.b16 %v284, %v283
      %v299 = vpack.c.b16 %v286, %v285
      %v300 = vpack.c.b16 %v288, %v287
      %v309 = vunpack.c.l.b16 %v233
      %v310 = vunpack.c.l.b16 %v234
      %v311 = vunpack.c.l.b16 %v235
      %v312 = vunpack.c.l.b16 %v236
      %v313 = vunpack.c.l.b16 %v237
      %v314 = vunpack.c.l.b16 %v238
      %v315 = vunpack.c.l.b16 %v239
      %v316 = vunpack.c.l.b16 %v240
      %v317 = vpack.c.b16 %v310, %v309
      %v318 = vpack.c.b16 %v312, %v311
      %v319 = vpack.c.b16 %v314, %v313
      %v320 = vpack.c.b16 %v316, %v315
      %vm325 = vcmask 523264
      %v327 = vsel %vm325, %v289, 0
      %v330 = vsel %vm325, %v290, 0
      %v333 = vsel %vm325, %v291, 0
      %v336 = vsel %vm325, %v292, 0
      %v339 = vsel %vm325, %v293, 0
      %v342 = vsel %vm325, %v294, 0
      %v345 = vsel %vm325, %v295, 0
      %v348 = vsel %vm325, %v296, 0
      %v351 = vsel %vm325, %v297, 0
      %v354 = vsel %vm325, %v298, 0
      %v357 = vsel %vm325, %v299, 0
      %v360 = vsel %vm325, %v300, 0
      %362 = vmatprep.subr.bf16.mxu0 0
      %363 = vmatpush1.bf16.msra.mxu0 %v317
      %364 = vmatprep.subr.bf16.mxu0 0
      %365 = vmatpush1.bf16.msra.mxu0 %v318
      %366 = vmatprep.subr.bf16.mxu0 0
      %367 = vmatpush1.bf16.msra.mxu0 %v319
      %368 = vmatprep.subr.bf16.mxu0 0
      %369 = vmatpush1.bf16.msra.mxu0 %v320
      %370 = vmatprep.subr.bf16.mxu0 0
      %371 = vmatpush1.bf16.msra.mxu0 0
      %372 = vmatprep.subr.bf16.mxu0 0
      %373 = vmatpush1.bf16.msra.mxu0 0
      %374 = vmatprep.subr.bf16.mxu0 0
      %375 = vmatpush1.bf16.msra.mxu0 0
      %376 = vmatprep.subr.bf16.mxu0 0
      %377 = vmatpush1.bf16.msra.mxu0 0
      %378 = vmatprep.subr.bf16.mxu0 0
      %379 = vmatpush1.bf16.msra.mxu0 0
      %380 = vmatprep.subr.bf16.mxu0 0
      %381 = vmatpush1.bf16.msra.mxu0 0
      %382 = vmatprep.subr.bf16.mxu0 0
      %383 = vmatpush1.bf16.msra.mxu0 0
      %384 = vmatprep.subr.bf16.mxu0 0
      %385 = vmatpush1.bf16.msra.mxu0 0
      %386 = vmatprep.subr.bf16.mxu0 0
      %387 = vmatpush1.bf16.msra.mxu0 0
      %388 = vmatprep.subr.bf16.mxu0 0
      %389 = vmatpush1.bf16.msra.mxu0 0
      %390 = vmatprep.subr.bf16.mxu0 0
      %391 = vmatpush1.bf16.msra.mxu0 0
      %392 = vmatprep.subr.bf16.mxu0 0
      %393 = vmatpush1.bf16.msra.mxu0 0
      %394 = vmatprep.mubr.bf16.mxu0 0
      %395 = vmatmul.mubr.bf16.gmra.mrb[0].mxu0 %v327
      %v396 = vpop.f32.mrb[0].mxu0
      %v397 = vadd.f32 0.0, %v396
      %v398 = vpop.f32.mrb[0].mxu0
      %v399 = vpop.f32.mrb[0].mxu0
      %v400 = vadd.f32 0.0, %v399
      %v401 = vpop.f32.mrb[0].mxu0
      %402 = vmatprep.mubr.bf16.mxu0 0
      %403 = vmatmul.mubr.bf16.gmra.mrb[0].mxu0 %v330
      %v404 = vpop.f32.mrb[0].mxu0
      %v405 = vadd.f32 0.0, %v404
      %v406 = vpop.f32.mrb[0].mxu0
      %v407 = vpop.f32.mrb[0].mxu0
      %v408 = vadd.f32 0.0, %v407
      %v409 = vpop.f32.mrb[0].mxu0
      %410 = vmatprep.mubr.bf16.mxu0 0
      %411 = vmatmul.mubr.bf16.gmra.mrb[0].mxu0 %v333
      %v412 = vpop.f32.mrb[0].mxu0
      %v413 = vadd.f32 0.0, %v412
      %v414 = vpop.f32.mrb[0].mxu0
      %v415 = vpop.f32.mrb[0].mxu0
      %v416 = vadd.f32 0.0, %v415
      %v417 = vpop.f32.mrb[0].mxu0
      %418 = vmatprep.mubr.bf16.mxu0 0
      %419 = vmatmul.mubr.bf16.gmra.mrb[0].mxu0 %v336
      %v420 = vpop.f32.mrb[0].mxu0
      %v421 = vadd.f32 0.0, %v420
      %v422 = vpop.f32.mrb[0].mxu0
      %v423 = vpop.f32.mrb[0].mxu0
      %v424 = vadd.f32 0.0, %v423
      %v425 = vpop.f32.mrb[0].mxu0
      %426 = vmatprep.mubr.bf16.mxu0 0
      %427 = vmatmul.mubr.bf16.gmra.mrb[0].mxu0 %v339
      %v428 = vpop.f32.mrb[0].mxu0
      %v429 = vadd.f32 0.0, %v428
      %v430 = vpop.f32.mrb[0].mxu0
      %v431 = vpop.f32.mrb[0].mxu0
      %v432 = vadd.f32 0.0, %v431
      %v433 = vpop.f32.mrb[0].mxu0
      %434 = vmatprep.mubr.bf16.mxu0 0
      %435 = vmatmul.mubr.bf16.gmra.mrb[0].mxu0 %v342
      %v436 = vpop.f32.mrb[0].mxu0
      %v437 = vadd.f32 0.0, %v436
      %v438 = vpop.f32.mrb[0].mxu0
      %v439 = vpop.f32.mrb[0].mxu0
      %v440 = vadd.f32 0.0, %v439
      %v441 = vpop.f32.mrb[0].mxu0
      %442 = vmatprep.mubr.bf16.mxu0 0
      %443 = vmatmul.mubr.bf16.gmra.mrb[0].mxu0 %v345
      %v444 = vpop.f32.mrb[0].mxu0
      %v445 = vadd.f32 0.0, %v444
      %v446 = vpop.f32.mrb[0].mxu0
      %v447 = vpop.f32.mrb[0].mxu0
      %v448 = vadd.f32 0.0, %v447
      %v449 = vpop.f32.mrb[0].mxu0
      %450 = vmatprep.mubr.bf16.mxu0 0
      %451 = vmatmul.mubr.bf16.gmra.mrb[0].mxu0 %v348
      %v452 = vpop.f32.mrb[0].mxu0
      %v453 = vadd.f32 0.0, %v452
      %v454 = vpop.f32.mrb[0].mxu0
      %v455 = vpop.f32.mrb[0].mxu0
      %v456 = vadd.f32 0.0, %v455
      %v457 = vpop.f32.mrb[0].mxu0
      %458 = vmatprep.mubr.bf16.mxu0 0
      %459 = vmatmul.mubr.bf16.gmra.mrb[0].mxu0 %v351
      %v460 = vpop.f32.mrb[0].mxu0
      %v461 = vadd.f32 0.0, %v460
      %v462 = vpop.f32.mrb[0].mxu0
      %v463 = vpop.f32.mrb[0].mxu0
      %v464 = vadd.f32 0.0, %v463
      %v465 = vpop.f32.mrb[0].mxu0
      %466 = vmatprep.mubr.bf16.mxu0 0
      %467 = vmatmul.mubr.bf16.gmra.mrb[0].mxu0 %v354
      %v468 = vpop.f32.mrb[0].mxu0
      %v469 = vadd.f32 0.0, %v468
      %v470 = vpop.f32.mrb[0].mxu0
      %v471 = vpop.f32.mrb[0].mxu0
      %v472 = vadd.f32 0.0, %v471
      %v473 = vpop.f32.mrb[0].mxu0
      %474 = vmatprep.mubr.bf16.mxu0 0
      %475 = vmatmul.mubr.bf16.gmra.mrb[0].mxu0 %v357
      %v476 = vpop.f32.mrb[0].mxu0
      %v477 = vadd.f32 0.0, %v476
      %v478 = vpop.f32.mrb[0].mxu0
      %v479 = vpop.f32.mrb[0].mxu0
      %v480 = vadd.f32 0.0, %v479
      %v481 = vpop.f32.mrb[0].mxu0
      %482 = vmatprep.mubr.bf16.mxu0 0
      %483 = vmatmul.mubr.bf16.gmra.mrb[0].mxu0 %v360
      %v484 = vpop.f32.mrb[0].mxu0
      %v485 = vadd.f32 0.0, %v484
      %v486 = vpop.f32.mrb[0].mxu0
      %v487 = vpop.f32.mrb[0].mxu0
      %v488 = vadd.f32 0.0, %v487
      %v489 = vpop.f32.mrb[0].mxu0
      %490 = vdwg.mxu0
      %491 = vst.msk [vmem:[#allocation2] sm:$0xff] %vm325, %v397
      %492 = vst.msk [vmem:[#allocation2 + $0x8] sm:$0xff] %vm325, %v400
      %493 = vst.msk [vmem:[#allocation2 + $0x10] sm:$0xff] %vm325, %v405
      %494 = vst.msk [vmem:[#allocation2 + $0x18] sm:$0xff] %vm325, %v408
      %495 = vst.msk [vmem:[#allocation2 + $0x20] sm:$0xff] %vm325, %v413
      %496 = vst.msk [vmem:[#allocation2 + $0x28] sm:$0xff] %vm325, %v416
      %497 = vst.msk [vmem:[#allocation2 + $0x30] sm:$0xff] %vm325, %v421
      %498 = vst.msk [vmem:[#allocation2 + $0x38] sm:$0xff] %vm325, %v424
      %499 = vst.msk [vmem:[#allocation2 + $0x40] sm:$0xff] %vm325, %v429
      %500 = vst.msk [vmem:[#allocation2 + $0x48] sm:$0xff] %vm325, %v432
      %501 = vst.msk [vmem:[#allocation2 + $0x50] sm:$0xff] %vm325, %v437
      %502 = vst.msk [vmem:[#allocation2 + $0x58] sm:$0xff] %vm325, %v440
      %503 = vst.msk [vmem:[#allocation2 + $0x60] sm:$0xff] %vm325, %v445
      %504 = vst.msk [vmem:[#allocation2 + $0x68] sm:$0xff] %vm325, %v448
      %505 = vst.msk [vmem:[#allocation2 + $0x70] sm:$0xff] %vm325, %v453
      %506 = vst.msk [vmem:[#allocation2 + $0x78] sm:$0xff] %vm325, %v456
      %507 = vst.msk [vmem:[#allocation2 + $0x80] sm:$0xff] %vm325, %v461
      %508 = vst.msk [vmem:[#allocation2 + $0x88] sm:$0xff] %vm325, %v464
      %509 = vst.msk [vmem:[#allocation2 + $0x90] sm:$0xff] %vm325, %v469
      %510 = vst.msk [vmem:[#allocation2 + $0x98] sm:$0xff] %vm325, %v472
      %511 = vst.msk [vmem:[#allocation2 + $0xa0] sm:$0xff] %vm325, %v477
      %512 = vst.msk [vmem:[#allocation2 + $0xa8] sm:$0xff] %vm325, %v480
      %513 = vst.msk [vmem:[#allocation2 + $0xb0] sm:$0xff] %vm325, %v485
      %514 = vst.msk [vmem:[#allocation2 + $0xb8] sm:$0xff] %vm325, %v488
      %v515 = vld [vmem:[%s197] sm:$0xf]
      %v516 = vld [vmem:[%s197 + $0x4] sm:$0xf]
      %v517 = vld [vmem:[%s197 + $0x8] sm:$0xf]
      %v518 = vld [vmem:[%s197 + $0xc] sm:$0xf]
      %v519 = vld [vmem:[%s197 + $0x10] sm:$0xf]
      %v520 = vld [vmem:[%s197 + $0x14] sm:$0xf]
      %v521 = vld [vmem:[%s197 + $0x18] sm:$0xf]
      %v522 = vld [vmem:[%s197 + $0x1c] sm:$0xf]
      %v523 = vld [vmem:[%s197 + $0x20] sm:$0xf]
      %v524 = vld [vmem:[%s197 + $0x24] sm:$0xf]
      %v525 = vld [vmem:[%s197 + $0x28] sm:$0xf]
      %v526 = vld [vmem:[%s197 + $0x2c] sm:$0xf]
      %v527 = vld [vmem:[%s197 + $0x30] sm:$0xf]
      %v528 = vld [vmem:[%s197 + $0x34] sm:$0xf]
      %v529 = vld [vmem:[%s197 + $0x38] sm:$0xf]
      %v530 = vld [vmem:[%s197 + $0x3c] sm:$0xf]
      %v531 = vld [vmem:[%s197 + $0x40] sm:$0xf]
      %v532 = vld [vmem:[%s197 + $0x44] sm:$0xf]
      %v533 = vld [vmem:[%s197 + $0x48] sm:$0xf]
      %v534 = vld [vmem:[%s197 + $0x4c] sm:$0xf]
      %v535 = vld [vmem:[%s197 + $0x50] sm:$0xf]
      %v536 = vld [vmem:[%s197 + $0x54] sm:$0xf]
      %v537 = vld [vmem:[%s197 + $0x58] sm:$0xf]
      %v538 = vld [vmem:[%s197 + $0x5c] sm:$0xf]
      %v539 = vld [vmem:[%s197 + $0x60] sm:$0x1]
      %s540 = scalar_lea.vmem %s1, 32
      %v541 = vld [vmem:[%s540] sm:$0xf]
      %v542 = vld [vmem:[%s540 + $0x4] sm:$0xf]
      %v543 = vld [vmem:[%s540 + $0x8] sm:$0xf]
      %v544 = vld [vmem:[%s540 + $0xc] sm:$0xf]
      %v545 = vld [vmem:[%s540 + $0x10] sm:$0xf]
      %v546 = vld [vmem:[%s540 + $0x14] sm:$0xf]
      %v547 = vld [vmem:[%s540 + $0x18] sm:$0xf]
      %v548 = vld [vmem:[%s540 + $0x1c] sm:$0xf]
      %v574 = vunpack.c.l.b16 %v515
      %v575 = vunpack.c.l.b16 %v516
      %v576 = vunpack.c.l.b16 %v517
      %v577 = vunpack.c.l.b16 %v518
      %v578 = vunpack.c.l.b16 %v519
      %v579 = vunpack.c.l.b16 %v520
      %v580 = vunpack.c.l.b16 %v521
      %v581 = vunpack.c.l.b16 %v522
      %v582 = vunpack.c.l.b16 %v523
      %v583 = vunpack.c.l.b16 %v524
      %v584 = vunpack.c.l.b16 %v525
      %v585 = vunpack.c.l.b16 %v526
      %v586 = vunpack.c.l.b16 %v527
      %v587 = vunpack.c.l.b16 %v528
      %v588 = vunpack.c.l.b16 %v529
      %v589 = vunpack.c.l.b16 %v530
      %v590 = vunpack.c.l.b16 %v531
      %v591 = vunpack.c.l.b16 %v532
      %v592 = vunpack.c.l.b16 %v533
      %v593 = vunpack.c.l.b16 %v534
      %v594 = vunpack.c.l.b16 %v535
      %v595 = vunpack.c.l.b16 %v536
      %v596 = vunpack.c.l.b16 %v537
      %v597 = vunpack.c.l.b16 %v538
      %v598 = vunpack.c.l.b16 %v539
      %v599 = vpack.c.b16 %v575, %v574
      %v600 = vpack.c.b16 %v577, %v576
      %v601 = vpack.c.b16 %v579, %v578
      %v602 = vpack.c.b16 %v581, %v580
      %v603 = vpack.c.b16 %v583, %v582
      %v604 = vpack.c.b16 %v585, %v584
      %v605 = vpack.c.b16 %v587, %v586
      %v606 = vpack.c.b16 %v589, %v588
      %v607 = vpack.c.b16 %v591, %v590
      %v608 = vpack.c.b16 %v593, %v592
      %v609 = vpack.c.b16 %v595, %v594
      %v610 = vpack.c.b16 %v597, %v596
      %v611 = vpack.c.b16 %v598, %v598
      %vm612 = vsmask.f32 7424
      %v614 = vshrl.u32 %v599, 16
      %v616 = vshll.u32 %v599, 16
      %v618 = vrot.slane %v616, 1
      %v619 = vor.u32 %v614, %v618
      %v621 = vshll.u32 %v600, 16
      %v623 = vrot.slane %v621, 1
      %v624 = vsel %vm612, %v619, %v623
      %v625 = vshrl.u32 %v600, 16
      %v627 = vor.u32 %v625, %v623
      %v629 = vshll.u32 %v601, 16
      %v631 = vrot.slane %v629, 1
      %v632 = vsel %vm612, %v627, %v631
      %v633 = vshrl.u32 %v601, 16
      %v635 = vor.u32 %v633, %v631
      %v637 = vshll.u32 %v602, 16
      %v639 = vrot.slane %v637, 1
      %v640 = vsel %vm612, %v635, %v639
      %v641 = vshrl.u32 %v602, 16
      %v643 = vor.u32 %v641, %v639
      %v645 = vshll.u32 %v603, 16
      %v647 = vrot.slane %v645, 1
      %v648 = vsel %vm612, %v643, %v647
      %v649 = vshrl.u32 %v603, 16
      %v651 = vor.u32 %v649, %v647
      %v653 = vshll.u32 %v604, 16
      %v655 = vrot.slane %v653, 1
      %v656 = vsel %vm612, %v651, %v655
      %v657 = vshrl.u32 %v604, 16
      %v659 = vor.u32 %v657, %v655
      %v661 = vshll.u32 %v605, 16
      %v663 = vrot.slane %v661, 1
      %v664 = vsel %vm612, %v659, %v663
      %v665 = vshrl.u32 %v605, 16
      %v667 = vor.u32 %v665, %v663
      %v669 = vshll.u32 %v606, 16
      %v671 = vrot.slane %v669, 1
      %v672 = vsel %vm612, %v667, %v671
      %v673 = vshrl.u32 %v606, 16
      %v675 = vor.u32 %v673, %v671
      %v677 = vshll.u32 %v607, 16
      %v679 = vrot.slane %v677, 1
      %v680 = vsel %vm612, %v675, %v679
      %v681 = vshrl.u32 %v607, 16
      %v683 = vor.u32 %v681, %v679
      %v685 = vshll.u32 %v608, 16
      %v687 = vrot.slane %v685, 1
      %v688 = vsel %vm612, %v683, %v687
      %v689 = vshrl.u32 %v608, 16
      %v691 = vor.u32 %v689, %v687
      %v693 = vshll.u32 %v609, 16
      %v695 = vrot.slane %v693, 1
      %v696 = vsel %vm612, %v691, %v695
      %v697 = vshrl.u32 %v609, 16
      %v699 = vor.u32 %v697, %v695
      %v701 = vshll.u32 %v610, 16
      %v703 = vrot.slane %v701, 1
      %v704 = vsel %vm612, %v699, %v703
      %v705 = vshrl.u32 %v610, 16
      %v707 = vor.u32 %v705, %v703
      %v709 = vshll.u32 %v611, 16
      %v711 = vrot.slane %v709, 1
      %v712 = vsel %vm612, %v707, %v711
      %v721 = vunpack.c.l.b16 %v541
      %v722 = vunpack.c.l.b16 %v542
      %v723 = vunpack.c.l.b16 %v543
      %v724 = vunpack.c.l.b16 %v544
      %v725 = vunpack.c.l.b16 %v545
      %v726 = vunpack.c.l.b16 %v546
      %v727 = vunpack.c.l.b16 %v547
      %v728 = vunpack.c.l.b16 %v548
      %v729 = vpack.c.b16 %v722, %v721
      %v730 = vpack.c.b16 %v724, %v723
      %v731 = vpack.c.b16 %v726, %v725
      %v732 = vpack.c.b16 %v728, %v727
      %v738 = vsel %vm325, %v624, 0
      %v741 = vsel %vm325, %v632, 0
      %v744 = vsel %vm325, %v640, 0
      %v747 = vsel %vm325, %v648, 0
      %v750 = vsel %vm325, %v656, 0
      %v753 = vsel %vm325, %v664, 0
      %v756 = vsel %vm325, %v672, 0
      %v759 = vsel %vm325, %v680, 0
      %v762 = vsel %vm325, %v688, 0
      %v765 = vsel %vm325, %v696, 0
      %v768 = vsel %vm325, %v704, 0
      %v771 = vsel %vm325, %v712, 0
      %773 = vmatprep.subr.bf16.mxu0 0
      %774 = vmatpush1.bf16.msra.mxu0 %v729
      %775 = vmatprep.subr.bf16.mxu0 0
      %776 = vmatpush1.bf16.msra.mxu0 %v730
      %777 = vmatprep.subr.bf16.mxu0 0
      %778 = vmatpush1.bf16.msra.mxu0 %v731
      %779 = vmatprep.subr.bf16.mxu0 0
      %780 = vmatpush1.bf16.msra.mxu0 %v732
      %781 = vmatprep.subr.bf16.mxu0 0
      %782 = vmatpush1.bf16.msra.mxu0 0
      %783 = vmatprep.subr.bf16.mxu0 0
      %784 = vmatpush1.bf16.msra.mxu0 0
      %785 = vmatprep.subr.bf16.mxu0 0
      %786 = vmatpush1.bf16.msra.mxu0 0
      %787 = vmatprep.subr.bf16.mxu0 0
      %788 = vmatpush1.bf16.msra.mxu0 0
      %789 = vmatprep.subr.bf16.mxu0 0
      %790 = vmatpush1.bf16.msra.mxu0 0
      %791 = vmatprep.subr.bf16.mxu0 0
      %792 = vmatpush1.bf16.msra.mxu0 0
      %793 = vmatprep.subr.bf16.mxu0 0
      %794 = vmatpush1.bf16.msra.mxu0 0
      %795 = vmatprep.subr.bf16.mxu0 0
      %796 = vmatpush1.bf16.msra.mxu0 0
      %797 = vmatprep.subr.bf16.mxu0 0
      %798 = vmatpush1.bf16.msra.mxu0 0
      %799 = vmatprep.subr.bf16.mxu0 0
      %800 = vmatpush1.bf16.msra.mxu0 0
      %801 = vmatprep.subr.bf16.mxu0 0
      %802 = vmatpush1.bf16.msra.mxu0 0
      %803 = vmatprep.subr.bf16.mxu0 0
      %804 = vmatpush1.bf16.msra.mxu0 0
      %805 = vmatprep.mubr.bf16.mxu0 0
      %806 = vmatmul.mubr.bf16.gmra.mrb[0].mxu0 %v738
      %v807 = vpop.f32.mrb[0].mxu0
      %v808 = vadd.f32 0.0, %v807
      %v809 = vpop.f32.mrb[0].mxu0
      %v810 = vpop.f32.mrb[0].mxu0
      %v811 = vadd.f32 0.0, %v810
      %v812 = vpop.f32.mrb[0].mxu0
      %813 = vmatprep.mubr.bf16.mxu0 0
      %814 = vmatmul.mubr.bf16.gmra.mrb[0].mxu0 %v741
      %v815 = vpop.f32.mrb[0].mxu0
      %v816 = vadd.f32 0.0, %v815
      %v817 = vpop.f32.mrb[0].mxu0
      %v818 = vpop.f32.mrb[0].mxu0
      %v819 = vadd.f32 0.0, %v818
      %v820 = vpop.f32.mrb[0].mxu0
      %821 = vmatprep.mubr.bf16.mxu0 0
      %822 = vmatmul.mubr.bf16.gmra.mrb[0].mxu0 %v744
      %v823 = vpop.f32.mrb[0].mxu0
      %v824 = vadd.f32 0.0, %v823
      %v825 = vpop.f32.mrb[0].mxu0
      %v826 = vpop.f32.mrb[0].mxu0
      %v827 = vadd.f32 0.0, %v826
      %v828 = vpop.f32.mrb[0].mxu0
      %829 = vmatprep.mubr.bf16.mxu0 0
      %830 = vmatmul.mubr.bf16.gmra.mrb[0].mxu0 %v747
      %v831 = vpop.f32.mrb[0].mxu0
      %v832 = vadd.f32 0.0, %v831
      %v833 = vpop.f32.mrb[0].mxu0
      %v834 = vpop.f32.mrb[0].mxu0
      %v835 = vadd.f32 0.0, %v834
      %v836 = vpop.f32.mrb[0].mxu0
      %837 = vmatprep.mubr.bf16.mxu0 0
      %838 = vmatmul.mubr.bf16.gmra.mrb[0].mxu0 %v750
      %v839 = vpop.f32.mrb[0].mxu0
      %v840 = vadd.f32 0.0, %v839
      %v841 = vpop.f32.mrb[0].mxu0
      %v842 = vpop.f32.mrb[0].mxu0
      %v843 = vadd.f32 0.0, %v842
      %v844 = vpop.f32.mrb[0].mxu0
      %845 = vmatprep.mubr.bf16.mxu0 0
      %846 = vmatmul.mubr.bf16.gmra.mrb[0].mxu0 %v753
      %v847 = vpop.f32.mrb[0].mxu0
      %v848 = vadd.f32 0.0, %v847
      %v849 = vpop.f32.mrb[0].mxu0
      %v850 = vpop.f32.mrb[0].mxu0
      %v851 = vadd.f32 0.0, %v850
      %v852 = vpop.f32.mrb[0].mxu0
      %853 = vmatprep.mubr.bf16.mxu0 0
      %854 = vmatmul.mubr.bf16.gmra.mrb[0].mxu0 %v756
      %v855 = vpop.f32.mrb[0].mxu0
      %v856 = vadd.f32 0.0, %v855
      %v857 = vpop.f32.mrb[0].mxu0
      %v858 = vpop.f32.mrb[0].mxu0
      %v859 = vadd.f32 0.0, %v858
      %v860 = vpop.f32.mrb[0].mxu0
      %861 = vmatprep.mubr.bf16.mxu0 0
      %862 = vmatmul.mubr.bf16.gmra.mrb[0].mxu0 %v759
      %v863 = vpop.f32.mrb[0].mxu0
      %v864 = vadd.f32 0.0, %v863
      %v865 = vpop.f32.mrb[0].mxu0
      %v866 = vpop.f32.mrb[0].mxu0
      %v867 = vadd.f32 0.0, %v866
      %v868 = vpop.f32.mrb[0].mxu0
      %869 = vmatprep.mubr.bf16.mxu0 0
      %870 = vmatmul.mubr.bf16.gmra.mrb[0].mxu0 %v762
      %v871 = vpop.f32.mrb[0].mxu0
      %v872 = vadd.f32 0.0, %v871
      %v873 = vpop.f32.mrb[0].mxu0
      %v874 = vpop.f32.mrb[0].mxu0
      %v875 = vadd.f32 0.0, %v874
      %v876 = vpop.f32.mrb[0].mxu0
      %877 = vmatprep.mubr.bf16.mxu0 0
      %878 = vmatmul.mubr.bf16.gmra.mrb[0].mxu0 %v765
      %v879 = vpop.f32.mrb[0].mxu0
      %v880 = vadd.f32 0.0, %v879
      %v881 = vpop.f32.mrb[0].mxu0
      %v882 = vpop.f32.mrb[0].mxu0
      %v883 = vadd.f32 0.0, %v882
      %v884 = vpop.f32.mrb[0].mxu0
      %885 = vmatprep.mubr.bf16.mxu0 0
      %886 = vmatmul.mubr.bf16.gmra.mrb[0].mxu0 %v768
      %v887 = vpop.f32.mrb[0].mxu0
      %v888 = vadd.f32 0.0, %v887
      %v889 = vpop.f32.mrb[0].mxu0
      %v890 = vpop.f32.mrb[0].mxu0
      %v891 = vadd.f32 0.0, %v890
      %v892 = vpop.f32.mrb[0].mxu0
      %893 = vmatprep.mubr.bf16.mxu0 0
      %894 = vmatmul.mubr.bf16.gmra.mrb[0].mxu0 %v771
      %v895 = vpop.f32.mrb[0].mxu0
      %v896 = vadd.f32 0.0, %v895
      %v897 = vpop.f32.mrb[0].mxu0
      %v898 = vpop.f32.mrb[0].mxu0
      %v899 = vadd.f32 0.0, %v898
      %v900 = vpop.f32.mrb[0].mxu0
      %901 = vdwg.mxu0
      %v902 = vld [vmem:[#allocation2] sm:$0xff]
      %v903 = vld [vmem:[#allocation2 + $0x8] sm:$0xff]
      %v904 = vld [vmem:[#allocation2 + $0x10] sm:$0xff]
      %v905 = vld [vmem:[#allocation2 + $0x18] sm:$0xff]
      %v906 = vld [vmem:[#allocation2 + $0x20] sm:$0xff]
      %v907 = vld [vmem:[#allocation2 + $0x28] sm:$0xff]
      %v908 = vld [vmem:[#allocation2 + $0x30] sm:$0xff]
      %v909 = vld [vmem:[#allocation2 + $0x38] sm:$0xff]
      %v910 = vld [vmem:[#allocation2 + $0x40] sm:$0xff]
      %v911 = vld [vmem:[#allocation2 + $0x48] sm:$0xff]
      %v912 = vld [vmem:[#allocation2 + $0x50] sm:$0xff]
      %v913 = vld [vmem:[#allocation2 + $0x58] sm:$0xff]
      %v914 = vld [vmem:[#allocation2 + $0x60] sm:$0xff]
      %v915 = vld [vmem:[#allocation2 + $0x68] sm:$0xff]
      %v916 = vld [vmem:[#allocation2 + $0x70] sm:$0xff]
      %v917 = vld [vmem:[#allocation2 + $0x78] sm:$0xff]
      %v918 = vld [vmem:[#allocation2 + $0x80] sm:$0xff]
      %v919 = vld [vmem:[#allocation2 + $0x88] sm:$0xff]
      %v920 = vld [vmem:[#allocation2 + $0x90] sm:$0xff]
      %v921 = vld [vmem:[#allocation2 + $0x98] sm:$0xff]
      %v922 = vld [vmem:[#allocation2 + $0xa0] sm:$0xff]
      %v923 = vld [vmem:[#allocation2 + $0xa8] sm:$0xff]
      %v924 = vld [vmem:[#allocation2 + $0xb0] sm:$0xff]
      %v925 = vld [vmem:[#allocation2 + $0xb8] sm:$0xff]
      %v926 = vadd.f32 %v902, %v808
      %v927 = vadd.f32 %v903, %v811
      %v928 = vadd.f32 %v904, %v816
      %v929 = vadd.f32 %v905, %v819
      %v930 = vadd.f32 %v906, %v824
      %v931 = vadd.f32 %v907, %v827
      %v932 = vadd.f32 %v908, %v832
      %v933 = vadd.f32 %v909, %v835
      %v934 = vadd.f32 %v910, %v840
      %v935 = vadd.f32 %v911, %v843
      %v936 = vadd.f32 %v912, %v848
      %v937 = vadd.f32 %v913, %v851
      %v938 = vadd.f32 %v914, %v856
      %v939 = vadd.f32 %v915, %v859
      %v940 = vadd.f32 %v916, %v864
      %v941 = vadd.f32 %v917, %v867
      %v942 = vadd.f32 %v918, %v872
      %v943 = vadd.f32 %v919, %v875
      %v944 = vadd.f32 %v920, %v880
      %v945 = vadd.f32 %v921, %v883
      %v946 = vadd.f32 %v922, %v888
      %v947 = vadd.f32 %v923, %v891
      %v948 = vadd.f32 %v924, %v896
      %v949 = vadd.f32 %v925, %v899
      %950 = vst.msk [vmem:[#allocation2] sm:$0xff] %vm325, %v926
      %951 = vst.msk [vmem:[#allocation2 + $0x8] sm:$0xff] %vm325, %v927
      %952 = vst.msk [vmem:[#allocation2 + $0x10] sm:$0xff] %vm325, %v928
      %953 = vst.msk [vmem:[#allocation2 + $0x18] sm:$0xff] %vm325, %v929
      %954 = vst.msk [vmem:[#allocation2 + $0x20] sm:$0xff] %vm325, %v930
      %955 = vst.msk [vmem:[#allocation2 + $0x28] sm:$0xff] %vm325, %v931
      %956 = vst.msk [vmem:[#allocation2 + $0x30] sm:$0xff] %vm325, %v932
      %957 = vst.msk [vmem:[#allocation2 + $0x38] sm:$0xff] %vm325, %v933
      %958 = vst.msk [vmem:[#allocation2 + $0x40] sm:$0xff] %vm325, %v934
      %959 = vst.msk [vmem:[#allocation2 + $0x48] sm:$0xff] %vm325, %v935
      %960 = vst.msk [vmem:[#allocation2 + $0x50] sm:$0xff] %vm325, %v936
      %961 = vst.msk [vmem:[#allocation2 + $0x58] sm:$0xff] %vm325, %v937
      %962 = vst.msk [vmem:[#allocation2 + $0x60] sm:$0xff] %vm325, %v938
      %963 = vst.msk [vmem:[#allocation2 + $0x68] sm:$0xff] %vm325, %v939
      %964 = vst.msk [vmem:[#allocation2 + $0x70] sm:$0xff] %vm325, %v940
      %965 = vst.msk [vmem:[#allocation2 + $0x78] sm:$0xff] %vm325, %v941
      %966 = vst.msk [vmem:[#allocation2 + $0x80] sm:$0xff] %vm325, %v942
      %967 = vst.msk [vmem:[#allocation2 + $0x88] sm:$0xff] %vm325, %v943
      %968 = vst.msk [vmem:[#allocation2 + $0x90] sm:$0xff] %vm325, %v944
      %969 = vst.msk [vmem:[#allocation2 + $0x98] sm:$0xff] %vm325, %v945
      %970 = vst.msk [vmem:[#allocation2 + $0xa0] sm:$0xff] %vm325, %v946
      %971 = vst.msk [vmem:[#allocation2 + $0xa8] sm:$0xff] %vm325, %v947
      %972 = vst.msk [vmem:[#allocation2 + $0xb0] sm:$0xff] %vm325, %v948
      %973 = vst.msk [vmem:[#allocation2 + $0xb8] sm:$0xff] %vm325, %v949
      %v974 = vld [vmem:[%s197] sm:$0xe]
      %v975 = vld [vmem:[%s197 + $0x4] sm:$0xf]
      %v976 = vld [vmem:[%s197 + $0x8] sm:$0xf]
      %v977 = vld [vmem:[%s197 + $0xc] sm:$0xf]
      %v978 = vld [vmem:[%s197 + $0x10] sm:$0xf]
      %v979 = vld [vmem:[%s197 + $0x14] sm:$0xf]
      %v980 = vld [vmem:[%s197 + $0x18] sm:$0xf]
      %v981 = vld [vmem:[%s197 + $0x1c] sm:$0xf]
      %v982 = vld [vmem:[%s197 + $0x20] sm:$0xf]
      %v983 = vld [vmem:[%s197 + $0x24] sm:$0xf]
      %v984 = vld [vmem:[%s197 + $0x28] sm:$0xf]
      %v985 = vld [vmem:[%s197 + $0x2c] sm:$0xf]
      %v986 = vld [vmem:[%s197 + $0x30] sm:$0xf]
      %v987 = vld [vmem:[%s197 + $0x34] sm:$0xf]
      %v988 = vld [vmem:[%s197 + $0x38] sm:$0xf]
      %v989 = vld [vmem:[%s197 + $0x3c] sm:$0xf]
      %v990 = vld [vmem:[%s197 + $0x40] sm:$0xf]
      %v991 = vld [vmem:[%s197 + $0x44] sm:$0xf]
      %v992 = vld [vmem:[%s197 + $0x48] sm:$0xf]
      %v993 = vld [vmem:[%s197 + $0x4c] sm:$0xf]
      %v994 = vld [vmem:[%s197 + $0x50] sm:$0xf]
      %v995 = vld [vmem:[%s197 + $0x54] sm:$0xf]
      %v996 = vld [vmem:[%s197 + $0x58] sm:$0xf]
      %v997 = vld [vmem:[%s197 + $0x5c] sm:$0xf]
      %v998 = vld [vmem:[%s197 + $0x60] sm:$0x1]
      %s999 = scalar_lea.vmem %s1, 64
      %v1000 = vld [vmem:[%s999] sm:$0xf]
      %v1001 = vld [vmem:[%s999 + $0x4] sm:$0xf]
      %v1002 = vld [vmem:[%s999 + $0x8] sm:$0xf]
      %v1003 = vld [vmem:[%s999 + $0xc] sm:$0xf]
      %v1004 = vld [vmem:[%s999 + $0x10] sm:$0xf]
      %v1005 = vld [vmem:[%s999 + $0x14] sm:$0xf]
      %v1006 = vld [vmem:[%s999 + $0x18] sm:$0xf]
      %v1007 = vld [vmem:[%s999 + $0x1c] sm:$0xf]
      %v1033 = vunpack.c.l.b16 %v974
      %v1034 = vunpack.c.l.b16 %v975
      %v1035 = vunpack.c.l.b16 %v976
      %v1036 = vunpack.c.l.b16 %v977
      %v1037 = vunpack.c.l.b16 %v978
      %v1038 = vunpack.c.l.b16 %v979
      %v1039 = vunpack.c.l.b16 %v980
      %v1040 = vunpack.c.l.b16 %v981
      %v1041 = vunpack.c.l.b16 %v982
      %v1042 = vunpack.c.l.b16 %v983
      %v1043 = vunpack.c.l.b16 %v984
      %v1044 = vunpack.c.l.b16 %v985
      %v1045 = vunpack.c.l.b16 %v986
      %v1046 = vunpack.c.l.b16 %v987
      %v1047 = vunpack.c.l.b16 %v988
      %v1048 = vunpack.c.l.b16 %v989
      %v1049 = vunpack.c.l.b16 %v990
      %v1050 = vunpack.c.l.b16 %v991
      %v1051 = vunpack.c.l.b16 %v992
      %v1052 = vunpack.c.l.b16 %v993
      %v1053 = vunpack.c.l.b16 %v994
      %v1054 = vunpack.c.l.b16 %v995
      %v1055 = vunpack.c.l.b16 %v996
      %v1056 = vunpack.c.l.b16 %v997
      %v1057 = vunpack.c.l.b16 %v998
      %v1058 = vpack.c.b16 %v1034, %v1033
      %v1059 = vpack.c.b16 %v1036, %v1035
      %v1060 = vpack.c.b16 %v1038, %v1037
      %v1061 = vpack.c.b16 %v1040, %v1039
      %v1062 = vpack.c.b16 %v1042, %v1041
      %v1063 = vpack.c.b16 %v1044, %v1043
      %v1064 = vpack.c.b16 %v1046, %v1045
      %v1065 = vpack.c.b16 %v1048, %v1047
      %v1066 = vpack.c.b16 %v1050, %v1049
      %v1067 = vpack.c.b16 %v1052, %v1051
      %v1068 = vpack.c.b16 %v1054, %v1053
      %v1069 = vpack.c.b16 %v1056, %v1055
      %v1070 = vpack.c.b16 %v1057, %v1057
      %vm1071 = vcmask 1046528
      %v1072 = vrot.slane %v1058, 1
      %v1073 = vrot.slane %v1059, 1
      %v1074 = vsel %vm1071, %v1072, %v1073
      %v1075 = vrot.slane %v1060, 1
      %v1076 = vsel %vm1071, %v1073, %v1075
      %v1077 = vrot.slane %v1061, 1
      %v1078 = vsel %vm1071, %v1075, %v1077
      %v1079 = vrot.slane %v1062, 1
      %v1080 = vsel %vm1071, %v1077, %v1079
      %v1081 = vrot.slane %v1063, 1
      %v1082 = vsel %vm1071, %v1079, %v1081
      %v1083 = vrot.slane %v1064, 1
      %v1084 = vsel %vm1071, %v1081, %v1083
      %v1085 = vrot.slane %v1065, 1
      %v1086 = vsel %vm1071, %v1083, %v1085
      %v1087 = vrot.slane %v1066, 1
      %v1088 = vsel %vm1071, %v1085, %v1087
      %v1089 = vrot.slane %v1067, 1
      %v1090 = vsel %vm1071, %v1087, %v1089
      %v1091 = vrot.slane %v1068, 1
      %v1092 = vsel %vm1071, %v1089, %v1091
      %v1093 = vrot.slane %v1069, 1
      %v1094 = vsel %vm1071, %v1091, %v1093
      %v1095 = vrot.slane %v1070, 1
      %v1096 = vsel %vm1071, %v1093, %v1095
      %v1105 = vunpack.c.l.b16 %v1000
      %v1106 = vunpack.c.l.b16 %v1001
      %v1107 = vunpack.c.l.b16 %v1002
      %v1108 = vunpack.c.l.b16 %v1003
      %v1109 = vunpack.c.l.b16 %v1004
      %v1110 = vunpack.c.l.b16 %v1005
      %v1111 = vunpack.c.l.b16 %v1006
      %v1112 = vunpack.c.l.b16 %v1007
      %v1113 = vpack.c.b16 %v1106, %v1105
      %v1114 = vpack.c.b16 %v1108, %v1107
      %v1115 = vpack.c.b16 %v1110, %v1109
      %v1116 = vpack.c.b16 %v1112, %v1111
      %v1122 = vsel %vm325, %v1074, 0
      %v1125 = vsel %vm325, %v1076, 0
      %v1128 = vsel %vm325, %v1078, 0
      %v1131 = vsel %vm325, %v1080, 0
      %v1134 = vsel %vm325, %v1082, 0
      %v1137 = vsel %vm325, %v1084, 0
      %v1140 = vsel %vm325, %v1086, 0
      %v1143 = vsel %vm325, %v1088, 0
      %v1146 = vsel %vm325, %v1090, 0
      %v1149 = vsel %vm325, %v1092, 0
      %v1152 = vsel %vm325, %v1094, 0
      %v1155 = vsel %vm325, %v1096, 0
      %1157 = vmatprep.subr.bf16.mxu0 0
      %1158 = vmatpush1.bf16.msra.mxu0 %v1113
      %1159 = vmatprep.subr.bf16.mxu0 0
      %1160 = vmatpush1.bf16.msra.mxu0 %v1114
      %1161 = vmatprep.subr.bf16.mxu0 0
      %1162 = vmatpush1.bf16.msra.mxu0 %v1115
      %1163 = vmatprep.subr.bf16.mxu0 0
      %1164 = vmatpush1.bf16.msra.mxu0 %v1116
      %1165 = vmatprep.subr.bf16.mxu0 0
      %1166 = vmatpush1.bf16.msra.mxu0 0
      %1167 = vmatprep.subr.bf16.mxu0 0
      %1168 = vmatpush1.bf16.msra.mxu0 0
      %1169 = vmatprep.subr.bf16.mxu0 0
      %1170 = vmatpush1.bf16.msra.mxu0 0
      %1171 = vmatprep.subr.bf16.mxu0 0
      %1172 = vmatpush1.bf16.msra.mxu0 0
      %1173 = vmatprep.subr.bf16.mxu0 0
      %1174 = vmatpush1.bf16.msra.mxu0 0
      %1175 = vmatprep.subr.bf16.mxu0 0
      %1176 = vmatpush1.bf16.msra.mxu0 0
      %1177 = vmatprep.subr.bf16.mxu0 0
      %1178 = vmatpush1.bf16.msra.mxu0 0
      %1179 = vmatprep.subr.bf16.mxu0 0
      %1180 = vmatpush1.bf16.msra.mxu0 0
      %1181 = vmatprep.subr.bf16.mxu0 0
      %1182 = vmatpush1.bf16.msra.mxu0 0
      %1183 = vmatprep.subr.bf16.mxu0 0
      %1184 = vmatpush1.bf16.msra.mxu0 0
      %1185 = vmatprep.subr.bf16.mxu0 0
      %1186 = vmatpush1.bf16.msra.mxu0 0
      %1187 = vmatprep.subr.bf16.mxu0 0
      %1188 = vmatpush1.bf16.msra.mxu0 0
      %1189 = vmatprep.mubr.bf16.mxu0 0
      %1190 = vmatmul.mubr.bf16.gmra.mrb[0].mxu0 %v1122
      %v1191 = vpop.f32.mrb[0].mxu0
      %v1192 = vadd.f32 0.0, %v1191
      %v1193 = vpop.f32.mrb[0].mxu0
      %v1194 = vpop.f32.mrb[0].mxu0
      %v1195 = vadd.f32 0.0, %v1194
      %v1196 = vpop.f32.mrb[0].mxu0
      %1197 = vmatprep.mubr.bf16.mxu0 0
      %1198 = vmatmul.mubr.bf16.gmra.mrb[0].mxu0 %v1125
      %v1199 = vpop.f32.mrb[0].mxu0
      %v1200 = vadd.f32 0.0, %v1199
      %v1201 = vpop.f32.mrb[0].mxu0
      %v1202 = vpop.f32.mrb[0].mxu0
      %v1203 = vadd.f32 0.0, %v1202
      %v1204 = vpop.f32.mrb[0].mxu0
      %1205 = vmatprep.mubr.bf16.mxu0 0
      %1206 = vmatmul.mubr.bf16.gmra.mrb[0].mxu0 %v1128
      %v1207 = vpop.f32.mrb[0].mxu0
      %v1208 = vadd.f32 0.0, %v1207
      %v1209 = vpop.f32.mrb[0].mxu0
      %v1210 = vpop.f32.mrb[0].mxu0
      %v1211 = vadd.f32 0.0, %v1210
      %v1212 = vpop.f32.mrb[0].mxu0
      %1213 = vmatprep.mubr.bf16.mxu0 0
      %1214 = vmatmul.mubr.bf16.gmra.mrb[0].mxu0 %v1131
      %v1215 = vpop.f32.mrb[0].mxu0
      %v1216 = vadd.f32 0.0, %v1215
      %v1217 = vpop.f32.mrb[0].mxu0
      %v1218 = vpop.f32.mrb[0].mxu0
      %v1219 = vadd.f32 0.0, %v1218
      %v1220 = vpop.f32.mrb[0].mxu0
      %1221 = vmatprep.mubr.bf16.mxu0 0
      %1222 = vmatmul.mubr.bf16.gmra.mrb[0].mxu0 %v1134
      %v1223 = vpop.f32.mrb[0].mxu0
      %v1224 = vadd.f32 0.0, %v1223
      %v1225 = vpop.f32.mrb[0].mxu0
      %v1226 = vpop.f32.mrb[0].mxu0
      %v1227 = vadd.f32 0.0, %v1226
      %v1228 = vpop.f32.mrb[0].mxu0
      %1229 = vmatprep.mubr.bf16.mxu0 0
      %1230 = vmatmul.mubr.bf16.gmra.mrb[0].mxu0 %v1137
      %v1231 = vpop.f32.mrb[0].mxu0
      %v1232 = vadd.f32 0.0, %v1231
      %v1233 = vpop.f32.mrb[0].mxu0
      %v1234 = vpop.f32.mrb[0].mxu0
      %v1235 = vadd.f32 0.0, %v1234
      %v1236 = vpop.f32.mrb[0].mxu0
      %1237 = vmatprep.mubr.bf16.mxu0 0
      %1238 = vmatmul.mubr.bf16.gmra.mrb[0].mxu0 %v1140
      %v1239 = vpop.f32.mrb[0].mxu0
      %v1240 = vadd.f32 0.0, %v1239
      %v1241 = vpop.f32.mrb[0].mxu0
      %v1242 = vpop.f32.mrb[0].mxu0
      %v1243 = vadd.f32 0.0, %v1242
      %v1244 = vpop.f32.mrb[0].mxu0
      %1245 = vmatprep.mubr.bf16.mxu0 0
      %1246 = vmatmul.mubr.bf16.gmra.mrb[0].mxu0 %v1143
      %v1247 = vpop.f32.mrb[0].mxu0
      %v1248 = vadd.f32 0.0, %v1247
      %v1249 = vpop.f32.mrb[0].mxu0
      %v1250 = vpop.f32.mrb[0].mxu0
      %v1251 = vadd.f32 0.0, %v1250
      %v1252 = vpop.f32.mrb[0].mxu0
      %1253 = vmatprep.mubr.bf16.mxu0 0
      %1254 = vmatmul.mubr.bf16.gmra.mrb[0].mxu0 %v1146
      %v1255 = vpop.f32.mrb[0].mxu0
      %v1256 = vadd.f32 0.0, %v1255
      %v1257 = vpop.f32.mrb[0].mxu0
      %v1258 = vpop.f32.mrb[0].mxu0
      %v1259 = vadd.f32 0.0, %v1258
      %v1260 = vpop.f32.mrb[0].mxu0
      %1261 = vmatprep.mubr.bf16.mxu0 0
      %1262 = vmatmul.mubr.bf16.gmra.mrb[0].mxu0 %v1149
      %v1263 = vpop.f32.mrb[0].mxu0
      %v1264 = vadd.f32 0.0, %v1263
      %v1265 = vpop.f32.mrb[0].mxu0
      %v1266 = vpop.f32.mrb[0].mxu0
      %v1267 = vadd.f32 0.0, %v1266
      %v1268 = vpop.f32.mrb[0].mxu0
      %1269 = vmatprep.mubr.bf16.mxu0 0
      %1270 = vmatmul.mubr.bf16.gmra.mrb[0].mxu0 %v1152
      %v1271 = vpop.f32.mrb[0].mxu0
      %v1272 = vadd.f32 0.0, %v1271
      %v1273 = vpop.f32.mrb[0].mxu0
      %v1274 = vpop.f32.mrb[0].mxu0
      %v1275 = vadd.f32 0.0, %v1274
      %v1276 = vpop.f32.mrb[0].mxu0
      %1277 = vmatprep.mubr.bf16.mxu0 0
      %1278 = vmatmul.mubr.bf16.gmra.mrb[0].mxu0 %v1155
      %v1279 = vpop.f32.mrb[0].mxu0
      %v1280 = vadd.f32 0.0, %v1279
      %v1281 = vpop.f32.mrb[0].mxu0
      %v1282 = vpop.f32.mrb[0].mxu0
      %v1283 = vadd.f32 0.0, %v1282
      %v1284 = vpop.f32.mrb[0].mxu0
      %1285 = vdwg.mxu0
      %v1286 = vld [vmem:[#allocation2] sm:$0xff]
      %v1287 = vld [vmem:[#allocation2 + $0x8] sm:$0xff]
      %v1288 = vld [vmem:[#allocation2 + $0x10] sm:$0xff]
      %v1289 = vld [vmem:[#allocation2 + $0x18] sm:$0xff]
      %v1290 = vld [vmem:[#allocation2 + $0x20] sm:$0xff]
      %v1291 = vld [vmem:[#allocation2 + $0x28] sm:$0xff]
      %v1292 = vld [vmem:[#allocation2 + $0x30] sm:$0xff]
      %v1293 = vld [vmem:[#allocation2 + $0x38] sm:$0xff]
      %v1294 = vld [vmem:[#allocation2 + $0x40] sm:$0xff]
      %v1295 = vld [vmem:[#allocation2 + $0x48] sm:$0xff]
      %v1296 = vld [vmem:[#allocation2 + $0x50] sm:$0xff]
      %v1297 = vld [vmem:[#allocation2 + $0x58] sm:$0xff]
      %v1298 = vld [vmem:[#allocation2 + $0x60] sm:$0xff]
      %v1299 = vld [vmem:[#allocation2 + $0x68] sm:$0xff]
      %v1300 = vld [vmem:[#allocation2 + $0x70] sm:$0xff]
      %v1301 = vld [vmem:[#allocation2 + $0x78] sm:$0xff]
      %v1302 = vld [vmem:[#allocation2 + $0x80] sm:$0xff]
      %v1303 = vld [vmem:[#allocation2 + $0x88] sm:$0xff]
      %v1304 = vld [vmem:[#allocation2 + $0x90] sm:$0xff]
      %v1305 = vld [vmem:[#allocation2 + $0x98] sm:$0xff]
      %v1306 = vld [vmem:[#allocation2 + $0xa0] sm:$0xff]
      %v1307 = vld [vmem:[#allocation2 + $0xa8] sm:$0xff]
      %v1308 = vld [vmem:[#allocation2 + $0xb0] sm:$0xff]
      %v1309 = vld [vmem:[#allocation2 + $0xb8] sm:$0xff]
      %v1310 = vadd.f32 %v1286, %v1192
      %v1311 = vadd.f32 %v1287, %v1195
      %v1312 = vadd.f32 %v1288, %v1200
      %v1313 = vadd.f32 %v1289, %v1203
      %v1314 = vadd.f32 %v1290, %v1208
      %v1315 = vadd.f32 %v1291, %v1211
      %v1316 = vadd.f32 %v1292, %v1216
      %v1317 = vadd.f32 %v1293, %v1219
      %v1318 = vadd.f32 %v1294, %v1224
      %v1319 = vadd.f32 %v1295, %v1227
      %v1320 = vadd.f32 %v1296, %v1232
      %v1321 = vadd.f32 %v1297, %v1235
      %v1322 = vadd.f32 %v1298, %v1240
      %v1323 = vadd.f32 %v1299, %v1243
      %v1324 = vadd.f32 %v1300, %v1248
      %v1325 = vadd.f32 %v1301, %v1251
      %v1326 = vadd.f32 %v1302, %v1256
      %v1327 = vadd.f32 %v1303, %v1259
      %v1328 = vadd.f32 %v1304, %v1264
      %v1329 = vadd.f32 %v1305, %v1267
      %v1330 = vadd.f32 %v1306, %v1272
      %v1331 = vadd.f32 %v1307, %v1275
      %v1332 = vadd.f32 %v1308, %v1280
      %v1333 = vadd.f32 %v1309, %v1283
      %1334 = vst.msk [vmem:[#allocation2] sm:$0xff] %vm325, %v1310
      %1335 = vst.msk [vmem:[#allocation2 + $0x8] sm:$0xff] %vm325, %v1311
      %1336 = vst.msk [vmem:[#allocation2 + $0x10] sm:$0xff] %vm325, %v1312
      %1337 = vst.msk [vmem:[#allocation2 + $0x18] sm:$0xff] %vm325, %v1313
      %1338 = vst.msk [vmem:[#allocation2 + $0x20] sm:$0xff] %vm325, %v1314
      %1339 = vst.msk [vmem:[#allocation2 + $0x28] sm:$0xff] %vm325, %v1315
      %1340 = vst.msk [vmem:[#allocation2 + $0x30] sm:$0xff] %vm325, %v1316
      %1341 = vst.msk [vmem:[#allocation2 + $0x38] sm:$0xff] %vm325, %v1317
      %1342 = vst.msk [vmem:[#allocation2 + $0x40] sm:$0xff] %vm325, %v1318
      %1343 = vst.msk [vmem:[#allocation2 + $0x48] sm:$0xff] %vm325, %v1319
      %1344 = vst.msk [vmem:[#allocation2 + $0x50] sm:$0xff] %vm325, %v1320
      %1345 = vst.msk [vmem:[#allocation2 + $0x58] sm:$0xff] %vm325, %v1321
      %1346 = vst.msk [vmem:[#allocation2 + $0x60] sm:$0xff] %vm325, %v1322
      %1347 = vst.msk [vmem:[#allocation2 + $0x68] sm:$0xff] %vm325, %v1323
      %1348 = vst.msk [vmem:[#allocation2 + $0x70] sm:$0xff] %vm325, %v1324
      %1349 = vst.msk [vmem:[#allocation2 + $0x78] sm:$0xff] %vm325, %v1325
      %1350 = vst.msk [vmem:[#allocation2 + $0x80] sm:$0xff] %vm325, %v1326
      %1351 = vst.msk [vmem:[#allocation2 + $0x88] sm:$0xff] %vm325, %v1327
      %1352 = vst.msk [vmem:[#allocation2 + $0x90] sm:$0xff] %vm325, %v1328
      %1353 = vst.msk [vmem:[#allocation2 + $0x98] sm:$0xff] %vm325, %v1329
      %1354 = vst.msk [vmem:[#allocation2 + $0xa0] sm:$0xff] %vm325, %v1330
      %1355 = vst.msk [vmem:[#allocation2 + $0xa8] sm:$0xff] %vm325, %v1331
      %1356 = vst.msk [vmem:[#allocation2 + $0xb0] sm:$0xff] %vm325, %v1332
      %1357 = vst.msk [vmem:[#allocation2 + $0xb8] sm:$0xff] %vm325, %v1333
      %v1358 = vld [vmem:[%s197 + $0xc] sm:$0xf]
      %v1359 = vld [vmem:[%s197 + $0x10] sm:$0xf]
      %v1360 = vld [vmem:[%s197 + $0x14] sm:$0xf]
      %v1361 = vld [vmem:[%s197 + $0x18] sm:$0xf]
      %v1362 = vld [vmem:[%s197 + $0x1c] sm:$0xf]
      %v1363 = vld [vmem:[%s197 + $0x20] sm:$0xf]
      %v1364 = vld [vmem:[%s197 + $0x24] sm:$0xf]
      %v1365 = vld [vmem:[%s197 + $0x28] sm:$0xf]
      %v1366 = vld [vmem:[%s197 + $0x2c] sm:$0xf]
      %v1367 = vld [vmem:[%s197 + $0x30] sm:$0xf]
      %v1368 = vld [vmem:[%s197 + $0x34] sm:$0xf]
      %v1369 = vld [vmem:[%s197 + $0x38] sm:$0xf]
      %v1370 = vld [vmem:[%s197 + $0x3c] sm:$0xf]
      %v1371 = vld [vmem:[%s197 + $0x40] sm:$0xf]
      %v1372 = vld [vmem:[%s197 + $0x44] sm:$0xf]
      %v1373 = vld [vmem:[%s197 + $0x48] sm:$0xf]
      %v1374 = vld [vmem:[%s197 + $0x4c] sm:$0xf]
      %v1375 = vld [vmem:[%s197 + $0x50] sm:$0xf]
      %v1376 = vld [vmem:[%s197 + $0x54] sm:$0xf]
      %v1377 = vld [vmem:[%s197 + $0x58] sm:$0xf]
      %v1378 = vld [vmem:[%s197 + $0x5c] sm:$0xf]
      %v1379 = vld [vmem:[%s197 + $0x60] sm:$0xf]
      %v1380 = vld [vmem:[%s197 + $0x64] sm:$0xf]
      %v1381 = vld [vmem:[%s197 + $0x68] sm:$0xf]
      %s1382 = scalar_lea.vmem %s1, 96
      %v1383 = vld [vmem:[%s1382] sm:$0xf]
      %v1384 = vld [vmem:[%s1382 + $0x4] sm:$0xf]
      %v1385 = vld [vmem:[%s1382 + $0x8] sm:$0xf]
      %v1386 = vld [vmem:[%s1382 + $0xc] sm:$0xf]
      %v1387 = vld [vmem:[%s1382 + $0x10] sm:$0xf]
      %v1388 = vld [vmem:[%s1382 + $0x14] sm:$0xf]
      %v1389 = vld [vmem:[%s1382 + $0x18] sm:$0xf]
      %v1390 = vld [vmem:[%s1382 + $0x1c] sm:$0xf]
      %v1415 = vunpack.c.l.b16 %v1358
      %v1416 = vunpack.c.l.b16 %v1359
      %v1417 = vunpack.c.l.b16 %v1360
      %v1418 = vunpack.c.l.b16 %v1361
      %v1419 = vunpack.c.l.b16 %v1362
      %v1420 = vunpack.c.l.b16 %v1363
      %v1421 = vunpack.c.l.b16 %v1364
      %v1422 = vunpack.c.l.b16 %v1365
      %v1423 = vunpack.c.l.b16 %v1366
      %v1424 = vunpack.c.l.b16 %v1367
      %v1425 = vunpack.c.l.b16 %v1368
      %v1426 = vunpack.c.l.b16 %v1369
      %v1427 = vunpack.c.l.b16 %v1370
      %v1428 = vunpack.c.l.b16 %v1371
      %v1429 = vunpack.c.l.b16 %v1372
      %v1430 = vunpack.c.l.b16 %v1373
      %v1431 = vunpack.c.l.b16 %v1374
      %v1432 = vunpack.c.l.b16 %v1375
      %v1433 = vunpack.c.l.b16 %v1376
      %v1434 = vunpack.c.l.b16 %v1377
      %v1435 = vunpack.c.l.b16 %v1378
      %v1436 = vunpack.c.l.b16 %v1379
      %v1437 = vunpack.c.l.b16 %v1380
      %v1438 = vunpack.c.l.b16 %v1381
      %v1439 = vpack.c.b16 %v1416, %v1415
      %v1440 = vpack.c.b16 %v1418, %v1417
      %v1441 = vpack.c.b16 %v1420, %v1419
      %v1442 = vpack.c.b16 %v1422, %v1421
      %v1443 = vpack.c.b16 %v1424, %v1423
      %v1444 = vpack.c.b16 %v1426, %v1425
      %v1445 = vpack.c.b16 %v1428, %v1427
      %v1446 = vpack.c.b16 %v1430, %v1429
      %v1447 = vpack.c.b16 %v1432, %v1431
      %v1448 = vpack.c.b16 %v1434, %v1433
      %v1449 = vpack.c.b16 %v1436, %v1435
      %v1450 = vpack.c.b16 %v1438, %v1437
      %v1459 = vunpack.c.l.b16 %v1383
      %v1460 = vunpack.c.l.b16 %v1384
      %v1461 = vunpack.c.l.b16 %v1385
      %v1462 = vunpack.c.l.b16 %v1386
      %v1463 = vunpack.c.l.b16 %v1387
      %v1464 = vunpack.c.l.b16 %v1388
      %v1465 = vunpack.c.l.b16 %v1389
      %v1466 = vunpack.c.l.b16 %v1390
      %v1467 = vpack.c.b16 %v1460, %v1459
      %v1468 = vpack.c.b16 %v1462, %v1461
      %v1469 = vpack.c.b16 %v1464, %v1463
      %v1470 = vpack.c.b16 %v1466, %v1465
      %v1476 = vsel %vm325, %v1439, 0
      %v1479 = vsel %vm325, %v1440, 0
      %v1482 = vsel %vm325, %v1441, 0
      %v1485 = vsel %vm325, %v1442, 0
      %v1488 = vsel %vm325, %v1443, 0
      %v1491 = vsel %vm325, %v1444, 0
      %v1494 = vsel %vm325, %v1445, 0
      %v1497 = vsel %vm325, %v1446, 0
      %v1500 = vsel %vm325, %v1447, 0
      %v1503 = vsel %vm325, %v1448, 0
      %v1506 = vsel %vm325, %v1449, 0
      %v1509 = vsel %vm325, %v1450, 0
      %1511 = vmatprep.subr.bf16.mxu0 0
      %1512 = vmatpush1.bf16.msra.mxu0 %v1467
      %1513 = vmatprep.subr.bf16.mxu0 0
      %1514 = vmatpush1.bf16.msra.mxu0 %v1468
      %1515 = vmatprep.subr.bf16.mxu0 0
      %1516 = vmatpush1.bf16.msra.mxu0 %v1469
      %1517 = vmatprep.subr.bf16.mxu0 0
      %1518 = vmatpush1.bf16.msra.mxu0 %v1470
      %1519 = vmatprep.subr.bf16.mxu0 0
      %1520 = vmatpush1.bf16.msra.mxu0 0
      %1521 = vmatprep.subr.bf16.mxu0 0
      %1522 = vmatpush1.bf16.msra.mxu0 0
      %1523 = vmatprep.subr.bf16.mxu0 0
      %1524 = vmatpush1.bf16.msra.mxu0 0
      %1525 = vmatprep.subr.bf16.mxu0 0
      %1526 = vmatpush1.bf16.msra.mxu0 0
      %1527 = vmatprep.subr.bf16.mxu0 0
      %1528 = vmatpush1.bf16.msra.mxu0 0
      %1529 = vmatprep.subr.bf16.mxu0 0
      %1530 = vmatpush1.bf16.msra.mxu0 0
      %1531 = vmatprep.subr.bf16.mxu0 0
      %1532 = vmatpush1.bf16.msra.mxu0 0
      %1533 = vmatprep.subr.bf16.mxu0 0
      %1534 = vmatpush1.bf16.msra.mxu0 0
      %1535 = vmatprep.subr.bf16.mxu0 0
      %1536 = vmatpush1.bf16.msra.mxu0 0
      %1537 = vmatprep.subr.bf16.mxu0 0
      %1538 = vmatpush1.bf16.msra.mxu0 0
      %1539 = vmatprep.subr.bf16.mxu0 0
      %1540 = vmatpush1.bf16.msra.mxu0 0
      %1541 = vmatprep.subr.bf16.mxu0 0
      %1542 = vmatpush1.bf16.msra.mxu0 0
      %1543 = vmatprep.mubr.bf16.mxu0 0
      %1544 = vmatmul.mubr.bf16.gmra.mrb[0].mxu0 %v1476
      %v1545 = vpop.f32.mrb[0].mxu0
      %v1546 = vadd.f32 0.0, %v1545
      %v1547 = vpop.f32.mrb[0].mxu0
      %v1548 = vpop.f32.mrb[0].mxu0
      %v1549 = vadd.f32 0.0, %v1548
      %v1550 = vpop.f32.mrb[0].mxu0
      %1551 = vmatprep.mubr.bf16.mxu0 0
      %1552 = vmatmul.mubr.bf16.gmra.mrb[0].mxu0 %v1479
      %v1553 = vpop.f32.mrb[0].mxu0
      %v1554 = vadd.f32 0.0, %v1553
      %v1555 = vpop.f32.mrb[0].mxu0
      %v1556 = vpop.f32.mrb[0].mxu0
      %v1557 = vadd.f32 0.0, %v1556
      %v1558 = vpop.f32.mrb[0].mxu0
      %1559 = vmatprep.mubr.bf16.mxu0 0
      %1560 = vmatmul.mubr.bf16.gmra.mrb[0].mxu0 %v1482
      %v1561 = vpop.f32.mrb[0].mxu0
      %v1562 = vadd.f32 0.0, %v1561
      %v1563 = vpop.f32.mrb[0].mxu0
      %v1564 = vpop.f32.mrb[0].mxu0
      %v1565 = vadd.f32 0.0, %v1564
      %v1566 = vpop.f32.mrb[0].mxu0
      %1567 = vmatprep.mubr.bf16.mxu0 0
      %1568 = vmatmul.mubr.bf16.gmra.mrb[0].mxu0 %v1485
      %v1569 = vpop.f32.mrb[0].mxu0
      %v1570 = vadd.f32 0.0, %v1569
      %v1571 = vpop.f32.mrb[0].mxu0
      %v1572 = vpop.f32.mrb[0].mxu0
      %v1573 = vadd.f32 0.0, %v1572
      %v1574 = vpop.f32.mrb[0].mxu0
      %1575 = vmatprep.mubr.bf16.mxu0 0
      %1576 = vmatmul.mubr.bf16.gmra.mrb[0].mxu0 %v1488
      %v1577 = vpop.f32.mrb[0].mxu0
      %v1578 = vadd.f32 0.0, %v1577
      %v1579 = vpop.f32.mrb[0].mxu0
      %v1580 = vpop.f32.mrb[0].mxu0
      %v1581 = vadd.f32 0.0, %v1580
      %v1582 = vpop.f32.mrb[0].mxu0
      %1583 = vmatprep.mubr.bf16.mxu0 0
      %1584 = vmatmul.mubr.bf16.gmra.mrb[0].mxu0 %v1491
      %v1585 = vpop.f32.mrb[0].mxu0
      %v1586 = vadd.f32 0.0, %v1585
      %v1587 = vpop.f32.mrb[0].mxu0
      %v1588 = vpop.f32.mrb[0].mxu0
      %v1589 = vadd.f32 0.0, %v1588
      %v1590 = vpop.f32.mrb[0].mxu0
      %1591 = vmatprep.mubr.bf16.mxu0 0
      %1592 = vmatmul.mubr.bf16.gmra.mrb[0].mxu0 %v1494
      %v1593 = vpop.f32.mrb[0].mxu0
      %v1594 = vadd.f32 0.0, %v1593
      %v1595 = vpop.f32.mrb[0].mxu0
      %v1596 = vpop.f32.mrb[0].mxu0
      %v1597 = vadd.f32 0.0, %v1596
      %v1598 = vpop.f32.mrb[0].mxu0
      %1599 = vmatprep.mubr.bf16.mxu0 0
      %1600 = vmatmul.mubr.bf16.gmra.mrb[0].mxu0 %v1497
      %v1601 = vpop.f32.mrb[0].mxu0
      %v1602 = vadd.f32 0.0, %v1601
      %v1603 = vpop.f32.mrb[0].mxu0
      %v1604 = vpop.f32.mrb[0].mxu0
      %v1605 = vadd.f32 0.0, %v1604
      %v1606 = vpop.f32.mrb[0].mxu0
      %1607 = vmatprep.mubr.bf16.mxu0 0
      %1608 = vmatmul.mubr.bf16.gmra.mrb[0].mxu0 %v1500
      %v1609 = vpop.f32.mrb[0].mxu0
      %v1610 = vadd.f32 0.0, %v1609
      %v1611 = vpop.f32.mrb[0].mxu0
      %v1612 = vpop.f32.mrb[0].mxu0
      %v1613 = vadd.f32 0.0, %v1612
      %v1614 = vpop.f32.mrb[0].mxu0
      %1615 = vmatprep.mubr.bf16.mxu0 0
      %1616 = vmatmul.mubr.bf16.gmra.mrb[0].mxu0 %v1503
      %v1617 = vpop.f32.mrb[0].mxu0
      %v1618 = vadd.f32 0.0, %v1617
      %v1619 = vpop.f32.mrb[0].mxu0
      %v1620 = vpop.f32.mrb[0].mxu0
      %v1621 = vadd.f32 0.0, %v1620
      %v1622 = vpop.f32.mrb[0].mxu0
      %1623 = vmatprep.mubr.bf16.mxu0 0
      %1624 = vmatmul.mubr.bf16.gmra.mrb[0].mxu0 %v1506
      %v1625 = vpop.f32.mrb[0].mxu0
      %v1626 = vadd.f32 0.0, %v1625
      %v1627 = vpop.f32.mrb[0].mxu0
      %v1628 = vpop.f32.mrb[0].mxu0
      %v1629 = vadd.f32 0.0, %v1628
      %v1630 = vpop.f32.mrb[0].mxu0
      %1631 = vmatprep.mubr.bf16.mxu0 0
      %1632 = vmatmul.mubr.bf16.gmra.mrb[0].mxu0 %v1509
      %v1633 = vpop.f32.mrb[0].mxu0
      %v1634 = vadd.f32 0.0, %v1633
      %v1635 = vpop.f32.mrb[0].mxu0
      %v1636 = vpop.f32.mrb[0].mxu0
      %v1637 = vadd.f32 0.0, %v1636
      %v1638 = vpop.f32.mrb[0].mxu0
      %1639 = vdwg.mxu0
      %v1640 = vld [vmem:[#allocation2] sm:$0xff]
      %v1641 = vld [vmem:[#allocation2 + $0x8] sm:$0xff]
      %v1642 = vld [vmem:[#allocation2 + $0x10] sm:$0xff]
      %v1643 = vld [vmem:[#allocation2 + $0x18] sm:$0xff]
      %v1644 = vld [vmem:[#allocation2 + $0x20] sm:$0xff]
      %v1645 = vld [vmem:[#allocation2 + $0x28] sm:$0xff]
      %v1646 = vld [vmem:[#allocation2 + $0x30] sm:$0xff]
      %v1647 = vld [vmem:[#allocation2 + $0x38] sm:$0xff]
      %v1648 = vld [vmem:[#allocation2 + $0x40] sm:$0xff]
      %v1649 = vld [vmem:[#allocation2 + $0x48] sm:$0xff]
      %v1650 = vld [vmem:[#allocation2 + $0x50] sm:$0xff]
      %v1651 = vld [vmem:[#allocation2 + $0x58] sm:$0xff]
      %v1652 = vld [vmem:[#allocation2 + $0x60] sm:$0xff]
      %v1653 = vld [vmem:[#allocation2 + $0x68] sm:$0xff]
      %v1654 = vld [vmem:[#allocation2 + $0x70] sm:$0xff]
      %v1655 = vld [vmem:[#allocation2 + $0x78] sm:$0xff]
      %v1656 = vld [vmem:[#allocation2 + $0x80] sm:$0xff]
      %v1657 = vld [vmem:[#allocation2 + $0x88] sm:$0xff]
      %v1658 = vld [vmem:[#allocation2 + $0x90] sm:$0xff]
      %v1659 = vld [vmem:[#allocation2 + $0x98] sm:$0xff]
      %v1660 = vld [vmem:[#allocation2 + $0xa0] sm:$0xff]
      %v1661 = vld [vmem:[#allocation2 + $0xa8] sm:$0xff]
      %v1662 = vld [vmem:[#allocation2 + $0xb0] sm:$0xff]
      %v1663 = vld [vmem:[#allocation2 + $0xb8] sm:$0xff]
      %v1664 = vadd.f32 %v1640, %v1546
      %v1665 = vadd.f32 %v1641, %v1549
      %v1666 = vadd.f32 %v1642, %v1554
      %v1667 = vadd.f32 %v1643, %v1557
      %v1668 = vadd.f32 %v1644, %v1562
      %v1669 = vadd.f32 %v1645, %v1565
      %v1670 = vadd.f32 %v1646, %v1570
      %v1671 = vadd.f32 %v1647, %v1573
      %v1672 = vadd.f32 %v1648, %v1578
      %v1673 = vadd.f32 %v1649, %v1581
      %v1674 = vadd.f32 %v1650, %v1586
      %v1675 = vadd.f32 %v1651, %v1589
      %v1676 = vadd.f32 %v1652, %v1594
      %v1677 = vadd.f32 %v1653, %v1597
      %v1678 = vadd.f32 %v1654, %v1602
      %v1679 = vadd.f32 %v1655, %v1605
      %v1680 = vadd.f32 %v1656, %v1610
      %v1681 = vadd.f32 %v1657, %v1613
      %v1682 = vadd.f32 %v1658, %v1618
      %v1683 = vadd.f32 %v1659, %v1621
      %v1684 = vadd.f32 %v1660, %v1626
      %v1685 = vadd.f32 %v1661, %v1629
      %v1686 = vadd.f32 %v1662, %v1634
      %v1687 = vadd.f32 %v1663, %v1637
      %1688 = vst.msk [vmem:[#allocation2] sm:$0xff] %vm325, %v1664
      %1689 = vst.msk [vmem:[#allocation2 + $0x8] sm:$0xff] %vm325, %v1665
      %1690 = vst.msk [vmem:[#allocation2 + $0x10] sm:$0xff] %vm325, %v1666
      %1691 = vst.msk [vmem:[#allocation2 + $0x18] sm:$0xff] %vm325, %v1667
      %1692 = vst.msk [vmem:[#allocation2 + $0x20] sm:$0xff] %vm325, %v1668
      %1693 = vst.msk [vmem:[#allocation2 + $0x28] sm:$0xff] %vm325, %v1669
      %1694 = vst.msk [vmem:[#allocation2 + $0x30] sm:$0xff] %vm325, %v1670
      %1695 = vst.msk [vmem:[#allocation2 + $0x38] sm:$0xff] %vm325, %v1671
      %1696 = vst.msk [vmem:[#allocation2 + $0x40] sm:$0xff] %vm325, %v1672
      %1697 = vst.msk [vmem:[#allocation2 + $0x48] sm:$0xff] %vm325, %v1673
      %1698 = vst.msk [vmem:[#allocation2 + $0x50] sm:$0xff] %vm325, %v1674
      %1699 = vst.msk [vmem:[#allocation2 + $0x58] sm:$0xff] %vm325, %v1675
      %1700 = vst.msk [vmem:[#allocation2 + $0x60] sm:$0xff] %vm325, %v1676
      %1701 = vst.msk [vmem:[#allocation2 + $0x68] sm:$0xff] %vm325, %v1677
      %1702 = vst.msk [vmem:[#allocation2 + $0x70] sm:$0xff] %vm325, %v1678
      %1703 = vst.msk [vmem:[#allocation2 + $0x78] sm:$0xff] %vm325, %v1679
      %1704 = vst.msk [vmem:[#allocation2 + $0x80] sm:$0xff] %vm325, %v1680
      %1705 = vst.msk [vmem:[#allocation2 + $0x88] sm:$0xff] %vm325, %v1681
      %1706 = vst.msk [vmem:[#allocation2 + $0x90] sm:$0xff] %vm325, %v1682
      %1707 = vst.msk [vmem:[#allocation2 + $0x98] sm:$0xff] %vm325, %v1683
      %1708 = vst.msk [vmem:[#allocation2 + $0xa0] sm:$0xff] %vm325, %v1684
      %1709 = vst.msk [vmem:[#allocation2 + $0xa8] sm:$0xff] %vm325, %v1685
      %1710 = vst.msk [vmem:[#allocation2 + $0xb0] sm:$0xff] %vm325, %v1686
      %1711 = vst.msk [vmem:[#allocation2 + $0xb8] sm:$0xff] %vm325, %v1687
      %v1712 = vld [vmem:[%s197 + $0xc] sm:$0xf]
      %v1713 = vld [vmem:[%s197 + $0x10] sm:$0xf]
      %v1714 = vld [vmem:[%s197 + $0x14] sm:$0xf]
      %v1715 = vld [vmem:[%s197 + $0x18] sm:$0xf]
      %v1716 = vld [vmem:[%s197 + $0x1c] sm:$0xf]
      %v1717 = vld [vmem:[%s197 + $0x20] sm:$0xf]
      %v1718 = vld [vmem:[%s197 + $0x24] sm:$0xf]
      %v1719 = vld [vmem:[%s197 + $0x28] sm:$0xf]
      %v1720 = vld [vmem:[%s197 + $0x2c] sm:$0xf]
      %v1721 = vld [vmem:[%s197 + $0x30] sm:$0xf]
      %v1722 = vld [vmem:[%s197 + $0x34] sm:$0xf]
      %v1723 = vld [vmem:[%s197 + $0x38] sm:$0xf]
      %v1724 = vld [vmem:[%s197 + $0x3c] sm:$0xf]
      %v1725 = vld [vmem:[%s197 + $0x40] sm:$0xf]
      %v1726 = vld [vmem:[%s197 + $0x44] sm:$0xf]
      %v1727 = vld [vmem:[%s197 + $0x48] sm:$0xf]
      %v1728 = vld [vmem:[%s197 + $0x4c] sm:$0xf]
      %v1729 = vld [vmem:[%s197 + $0x50] sm:$0xf]
      %v1730 = vld [vmem:[%s197 + $0x54] sm:$0xf]
      %v1731 = vld [vmem:[%s197 + $0x58] sm:$0xf]
      %v1732 = vld [vmem:[%s197 + $0x5c] sm:$0xf]
      %v1733 = vld [vmem:[%s197 + $0x60] sm:$0xf]
      %v1734 = vld [vmem:[%s197 + $0x64] sm:$0xf]
      %v1735 = vld [vmem:[%s197 + $0x68] sm:$0xf]
      %v1736 = vld [vmem:[%s197 + $0x6c] sm:$0x1]
      %s1737 = scalar_lea.vmem %s1, 128
      %v1738 = vld [vmem:[%s1737] sm:$0xf]
      %v1739 = vld [vmem:[%s1737 + $0x4] sm:$0xf]
      %v1740 = vld [vmem:[%s1737 + $0x8] sm:$0xf]
      %v1741 = vld [vmem:[%s1737 + $0xc] sm:$0xf]
      %v1742 = vld [vmem:[%s1737 + $0x10] sm:$0xf]
      %v1743 = vld [vmem:[%s1737 + $0x14] sm:$0xf]
      %v1744 = vld [vmem:[%s1737 + $0x18] sm:$0xf]
      %v1745 = vld [vmem:[%s1737 + $0x1c] sm:$0xf]
      %v1771 = vunpack.c.l.b16 %v1712
      %v1772 = vunpack.c.l.b16 %v1713
      %v1773 = vunpack.c.l.b16 %v1714
      %v1774 = vunpack.c.l.b16 %v1715
      %v1775 = vunpack.c.l.b16 %v1716
      %v1776 = vunpack.c.l.b16 %v1717
      %v1777 = vunpack.c.l.b16 %v1718
      %v1778 = vunpack.c.l.b16 %v1719
      %v1779 = vunpack.c.l.b16 %v1720
      %v1780 = vunpack.c.l.b16 %v1721
      %v1781 = vunpack.c.l.b16 %v1722
      %v1782 = vunpack.c.l.b16 %v1723
      %v1783 = vunpack.c.l.b16 %v1724
      %v1784 = vunpack.c.l.b16 %v1725
      %v1785 = vunpack.c.l.b16 %v1726
      %v1786 = vunpack.c.l.b16 %v1727
      %v1787 = vunpack.c.l.b16 %v1728
      %v1788 = vunpack.c.l.b16 %v1729
      %v1789 = vunpack.c.l.b16 %v1730
      %v1790 = vunpack.c.l.b16 %v1731
      %v1791 = vunpack.c.l.b16 %v1732
      %v1792 = vunpack.c.l.b16 %v1733
      %v1793 = vunpack.c.l.b16 %v1734
      %v1794 = vunpack.c.l.b16 %v1735
      %v1795 = vunpack.c.l.b16 %v1736
      %v1796 = vpack.c.b16 %v1772, %v1771
      %v1797 = vpack.c.b16 %v1774, %v1773
      %v1798 = vpack.c.b16 %v1776, %v1775
      %v1799 = vpack.c.b16 %v1778, %v1777
      %v1800 = vpack.c.b16 %v1780, %v1779
      %v1801 = vpack.c.b16 %v1782, %v1781
      %v1802 = vpack.c.b16 %v1784, %v1783
      %v1803 = vpack.c.b16 %v1786, %v1785
      %v1804 = vpack.c.b16 %v1788, %v1787
      %v1805 = vpack.c.b16 %v1790, %v1789
      %v1806 = vpack.c.b16 %v1792, %v1791
      %v1807 = vpack.c.b16 %v1794, %v1793
      %v1808 = vpack.c.b16 %v1795, %v1795
      %v1810 = vshrl.u32 %v1796, 16
      %v1812 = vshll.u32 %v1796, 16
      %v1814 = vrot.slane %v1812, 1
      %v1815 = vor.u32 %v1810, %v1814
      %v1817 = vshll.u32 %v1797, 16
      %v1819 = vrot.slane %v1817, 1
      %v1820 = vsel %vm612, %v1815, %v1819
      %v1821 = vshrl.u32 %v1797, 16
      %v1823 = vor.u32 %v1821, %v1819
      %v1825 = vshll.u32 %v1798, 16
      %v1827 = vrot.slane %v1825, 1
      %v1828 = vsel %vm612, %v1823, %v1827
      %v1829 = vshrl.u32 %v1798, 16
      %v1831 = vor.u32 %v1829, %v1827
      %v1833 = vshll.u32 %v1799, 16
      %v1835 = vrot.slane %v1833, 1
      %v1836 = vsel %vm612, %v1831, %v1835
      %v1837 = vshrl.u32 %v1799, 16
      %v1839 = vor.u32 %v1837, %v1835
      %v1841 = vshll.u32 %v1800, 16
      %v1843 = vrot.slane %v1841, 1
      %v1844 = vsel %vm612, %v1839, %v1843
      %v1845 = vshrl.u32 %v1800, 16
      %v1847 = vor.u32 %v1845, %v1843
      %v1849 = vshll.u32 %v1801, 16
      %v1851 = vrot.slane %v1849, 1
      %v1852 = vsel %vm612, %v1847, %v1851
      %v1853 = vshrl.u32 %v1801, 16
      %v1855 = vor.u32 %v1853, %v1851
      %v1857 = vshll.u32 %v1802, 16
      %v1859 = vrot.slane %v1857, 1
      %v1860 = vsel %vm612, %v1855, %v1859
      %v1861 = vshrl.u32 %v1802, 16
      %v1863 = vor.u32 %v1861, %v1859
      %v1865 = vshll.u32 %v1803, 16
      %v1867 = vrot.slane %v1865, 1
      %v1868 = vsel %vm612, %v1863, %v1867
      %v1869 = vshrl.u32 %v1803, 16
      %v1871 = vor.u32 %v1869, %v1867
      %v1873 = vshll.u32 %v1804, 16
      %v1875 = vrot.slane %v1873, 1
      %v1876 = vsel %vm612, %v1871, %v1875
      %v1877 = vshrl.u32 %v1804, 16
      %v1879 = vor.u32 %v1877, %v1875
      %v1881 = vshll.u32 %v1805, 16
      %v1883 = vrot.slane %v1881, 1
      %v1884 = vsel %vm612, %v1879, %v1883
      %v1885 = vshrl.u32 %v1805, 16
      %v1887 = vor.u32 %v1885, %v1883
      %v1889 = vshll.u32 %v1806, 16
      %v1891 = vrot.slane %v1889, 1
      %v1892 = vsel %vm612, %v1887, %v1891
      %v1893 = vshrl.u32 %v1806, 16
      %v1895 = vor.u32 %v1893, %v1891
      %v1897 = vshll.u32 %v1807, 16
      %v1899 = vrot.slane %v1897, 1
      %v1900 = vsel %vm612, %v1895, %v1899
      %v1901 = vshrl.u32 %v1807, 16
      %v1903 = vor.u32 %v1901, %v1899
      %v1905 = vshll.u32 %v1808, 16
      %v1907 = vrot.slane %v1905, 1
      %v1908 = vsel %vm612, %v1903, %v1907
      %v1917 = vunpack.c.l.b16 %v1738
      %v1918 = vunpack.c.l.b16 %v1739
      %v1919 = vunpack.c.l.b16 %v1740
      %v1920 = vunpack.c.l.b16 %v1741
      %v1921 = vunpack.c.l.b16 %v1742
      %v1922 = vunpack.c.l.b16 %v1743
      %v1923 = vunpack.c.l.b16 %v1744
      %v1924 = vunpack.c.l.b16 %v1745
      %v1925 = vpack.c.b16 %v1918, %v1917
      %v1926 = vpack.c.b16 %v1920, %v1919
      %v1927 = vpack.c.b16 %v1922, %v1921
      %v1928 = vpack.c.b16 %v1924, %v1923
      %v1934 = vsel %vm325, %v1820, 0
      %v1937 = vsel %vm325, %v1828, 0
      %v1940 = vsel %vm325, %v1836, 0
      %v1943 = vsel %vm325, %v1844, 0
      %v1946 = vsel %vm325, %v1852, 0
      %v1949 = vsel %vm325, %v1860, 0
      %v1952 = vsel %vm325, %v1868, 0
      %v1955 = vsel %vm325, %v1876, 0
      %v1958 = vsel %vm325, %v1884, 0
      %v1961 = vsel %vm325, %v1892, 0
      %v1964 = vsel %vm325, %v1900, 0
      %v1967 = vsel %vm325, %v1908, 0
      %1969 = vmatprep.subr.bf16.mxu0 0
      %1970 = vmatpush1.bf16.msra.mxu0 %v1925
      %1971 = vmatprep.subr.bf16.mxu0 0
      %1972 = vmatpush1.bf16.msra.mxu0 %v1926
      %1973 = vmatprep.subr.bf16.mxu0 0
      %1974 = vmatpush1.bf16.msra.mxu0 %v1927
      %1975 = vmatprep.subr.bf16.mxu0 0
      %1976 = vmatpush1.bf16.msra.mxu0 %v1928
      %1977 = vmatprep.subr.bf16.mxu0 0
      %1978 = vmatpush1.bf16.msra.mxu0 0
      %1979 = vmatprep.subr.bf16.mxu0 0
      %1980 = vmatpush1.bf16.msra.mxu0 0
      %1981 = vmatprep.subr.bf16.mxu0 0
      %1982 = vmatpush1.bf16.msra.mxu0 0
      %1983 = vmatprep.subr.bf16.mxu0 0
      %1984 = vmatpush1.bf16.msra.mxu0 0
      %1985 = vmatprep.subr.bf16.mxu0 0
      %1986 = vmatpush1.bf16.msra.mxu0 0
      %1987 = vmatprep.subr.bf16.mxu0 0
      %1988 = vmatpush1.bf16.msra.mxu0 0
      %1989 = vmatprep.subr.bf16.mxu0 0
      %1990 = vmatpush1.bf16.msra.mxu0 0
      %1991 = vmatprep.subr.bf16.mxu0 0
      %1992 = vmatpush1.bf16.msra.mxu0 0
      %1993 = vmatprep.subr.bf16.mxu0 0
      %1994 = vmatpush1.bf16.msra.mxu0 0
      %1995 = vmatprep.subr.bf16.mxu0 0
      %1996 = vmatpush1.bf16.msra.mxu0 0
      %1997 = vmatprep.subr.bf16.mxu0 0
      %1998 = vmatpush1.bf16.msra.mxu0 0
      %1999 = vmatprep.subr.bf16.mxu0 0
      %2000 = vmatpush1.bf16.msra.mxu0 0
      %2001 = vmatprep.mubr.bf16.mxu0 0
      %2002 = vmatmul.mubr.bf16.gmra.mrb[0].mxu0 %v1934
      %v2003 = vpop.f32.mrb[0].mxu0
      %v2004 = vadd.f32 0.0, %v2003
      %v2005 = vpop.f32.mrb[0].mxu0
      %v2006 = vpop.f32.mrb[0].mxu0
      %v2007 = vadd.f32 0.0, %v2006
      %v2008 = vpop.f32.mrb[0].mxu0
      %2009 = vmatprep.mubr.bf16.mxu0 0
      %2010 = vmatmul.mubr.bf16.gmra.mrb[0].mxu0 %v1937
      %v2011 = vpop.f32.mrb[0].mxu0
      %v2012 = vadd.f32 0.0, %v2011
      %v2013 = vpop.f32.mrb[0].mxu0
      %v2014 = vpop.f32.mrb[0].mxu0
      %v2015 = vadd.f32 0.0, %v2014
      %v2016 = vpop.f32.mrb[0].mxu0
      %2017 = vmatprep.mubr.bf16.mxu0 0
      %2018 = vmatmul.mubr.bf16.gmra.mrb[0].mxu0 %v1940
      %v2019 = vpop.f32.mrb[0].mxu0
      %v2020 = vadd.f32 0.0, %v2019
      %v2021 = vpop.f32.mrb[0].mxu0
      %v2022 = vpop.f32.mrb[0].mxu0
      %v2023 = vadd.f32 0.0, %v2022
      %v2024 = vpop.f32.mrb[0].mxu0
      %2025 = vmatprep.mubr.bf16.mxu0 0
      %2026 = vmatmul.mubr.bf16.gmra.mrb[0].mxu0 %v1943
      %v2027 = vpop.f32.mrb[0].mxu0
      %v2028 = vadd.f32 0.0, %v2027
      %v2029 = vpop.f32.mrb[0].mxu0
      %v2030 = vpop.f32.mrb[0].mxu0
      %v2031 = vadd.f32 0.0, %v2030
      %v2032 = vpop.f32.mrb[0].mxu0
      %2033 = vmatprep.mubr.bf16.mxu0 0
      %2034 = vmatmul.mubr.bf16.gmra.mrb[0].mxu0 %v1946
      %v2035 = vpop.f32.mrb[0].mxu0
      %v2036 = vadd.f32 0.0, %v2035
      %v2037 = vpop.f32.mrb[0].mxu0
      %v2038 = vpop.f32.mrb[0].mxu0
      %v2039 = vadd.f32 0.0, %v2038
      %v2040 = vpop.f32.mrb[0].mxu0
      %2041 = vmatprep.mubr.bf16.mxu0 0
      %2042 = vmatmul.mubr.bf16.gmra.mrb[0].mxu0 %v1949
      %v2043 = vpop.f32.mrb[0].mxu0
      %v2044 = vadd.f32 0.0, %v2043
      %v2045 = vpop.f32.mrb[0].mxu0
      %v2046 = vpop.f32.mrb[0].mxu0
      %v2047 = vadd.f32 0.0, %v2046
      %v2048 = vpop.f32.mrb[0].mxu0
      %2049 = vmatprep.mubr.bf16.mxu0 0
      %2050 = vmatmul.mubr.bf16.gmra.mrb[0].mxu0 %v1952
      %v2051 = vpop.f32.mrb[0].mxu0
      %v2052 = vadd.f32 0.0, %v2051
      %v2053 = vpop.f32.mrb[0].mxu0
      %v2054 = vpop.f32.mrb[0].mxu0
      %v2055 = vadd.f32 0.0, %v2054
      %v2056 = vpop.f32.mrb[0].mxu0
      %2057 = vmatprep.mubr.bf16.mxu0 0
      %2058 = vmatmul.mubr.bf16.gmra.mrb[0].mxu0 %v1955
      %v2059 = vpop.f32.mrb[0].mxu0
      %v2060 = vadd.f32 0.0, %v2059
      %v2061 = vpop.f32.mrb[0].mxu0
      %v2062 = vpop.f32.mrb[0].mxu0
      %v2063 = vadd.f32 0.0, %v2062
      %v2064 = vpop.f32.mrb[0].mxu0
      %2065 = vmatprep.mubr.bf16.mxu0 0
      %2066 = vmatmul.mubr.bf16.gmra.mrb[0].mxu0 %v1958
      %v2067 = vpop.f32.mrb[0].mxu0
      %v2068 = vadd.f32 0.0, %v2067
      %v2069 = vpop.f32.mrb[0].mxu0
      %v2070 = vpop.f32.mrb[0].mxu0
      %v2071 = vadd.f32 0.0, %v2070
      %v2072 = vpop.f32.mrb[0].mxu0
      %2073 = vmatprep.mubr.bf16.mxu0 0
      %2074 = vmatmul.mubr.bf16.gmra.mrb[0].mxu0 %v1961
      %v2075 = vpop.f32.mrb[0].mxu0
      %v2076 = vadd.f32 0.0, %v2075
      %v2077 = vpop.f32.mrb[0].mxu0
      %v2078 = vpop.f32.mrb[0].mxu0
      %v2079 = vadd.f32 0.0, %v2078
      %v2080 = vpop.f32.mrb[0].mxu0
      %2081 = vmatprep.mubr.bf16.mxu0 0
      %2082 = vmatmul.mubr.bf16.gmra.mrb[0].mxu0 %v1964
      %v2083 = vpop.f32.mrb[0].mxu0
      %v2084 = vadd.f32 0.0, %v2083
      %v2085 = vpop.f32.mrb[0].mxu0
      %v2086 = vpop.f32.mrb[0].mxu0
      %v2087 = vadd.f32 0.0, %v2086
      %v2088 = vpop.f32.mrb[0].mxu0
      %2089 = vmatprep.mubr.bf16.mxu0 0
      %2090 = vmatmul.mubr.bf16.gmra.mrb[0].mxu0 %v1967
      %v2091 = vpop.f32.mrb[0].mxu0
      %v2092 = vadd.f32 0.0, %v2091
      %v2093 = vpop.f32.mrb[0].mxu0
      %v2094 = vpop.f32.mrb[0].mxu0
      %v2095 = vadd.f32 0.0, %v2094
      %v2096 = vpop.f32.mrb[0].mxu0
      %2097 = vdwg.mxu0
      %v2098 = vld [vmem:[#allocation2] sm:$0xff]
      %v2099 = vld [vmem:[#allocation2 + $0x8] sm:$0xff]
      %v2100 = vld [vmem:[#allocation2 + $0x10] sm:$0xff]
      %v2101 = vld [vmem:[#allocation2 + $0x18] sm:$0xff]
      %v2102 = vld [vmem:[#allocation2 + $0x20] sm:$0xff]
      %v2103 = vld [vmem:[#allocation2 + $0x28] sm:$0xff]
      %v2104 = vld [vmem:[#allocation2 + $0x30] sm:$0xff]
      %v2105 = vld [vmem:[#allocation2 + $0x38] sm:$0xff]
      %v2106 = vld [vmem:[#allocation2 + $0x40] sm:$0xff]
      %v2107 = vld [vmem:[#allocation2 + $0x48] sm:$0xff]
      %v2108 = vld [vmem:[#allocation2 + $0x50] sm:$0xff]
      %v2109 = vld [vmem:[#allocation2 + $0x58] sm:$0xff]
      %v2110 = vld [vmem:[#allocation2 + $0x60] sm:$0xff]
      %v2111 = vld [vmem:[#allocation2 + $0x68] sm:$0xff]
      %v2112 = vld [vmem:[#allocation2 + $0x70] sm:$0xff]
      %v2113 = vld [vmem:[#allocation2 + $0x78] sm:$0xff]
      %v2114 = vld [vmem:[#allocation2 + $0x80] sm:$0xff]
      %v2115 = vld [vmem:[#allocation2 + $0x88] sm:$0xff]
      %v2116 = vld [vmem:[#allocation2 + $0x90] sm:$0xff]
      %v2117 = vld [vmem:[#allocation2 + $0x98] sm:$0xff]
      %v2118 = vld [vmem:[#allocation2 + $0xa0] sm:$0xff]
      %v2119 = vld [vmem:[#allocation2 + $0xa8] sm:$0xff]
      %v2120 = vld [vmem:[#allocation2 + $0xb0] sm:$0xff]
      %v2121 = vld [vmem:[#allocation2 + $0xb8] sm:$0xff]
      %v2122 = vadd.f32 %v2098, %v2004
      %v2123 = vadd.f32 %v2099, %v2007
      %v2124 = vadd.f32 %v2100, %v2012
      %v2125 = vadd.f32 %v2101, %v2015
      %v2126 = vadd.f32 %v2102, %v2020
      %v2127 = vadd.f32 %v2103, %v2023
      %v2128 = vadd.f32 %v2104, %v2028
      %v2129 = vadd.f32 %v2105, %v2031
      %v2130 = vadd.f32 %v2106, %v2036
      %v2131 = vadd.f32 %v2107, %v2039
      %v2132 = vadd.f32 %v2108, %v2044
      %v2133 = vadd.f32 %v2109, %v2047
      %v2134 = vadd.f32 %v2110, %v2052
      %v2135 = vadd.f32 %v2111, %v2055
      %v2136 = vadd.f32 %v2112, %v2060
      %v2137 = vadd.f32 %v2113, %v2063
      %v2138 = vadd.f32 %v2114, %v2068
      %v2139 = vadd.f32 %v2115, %v2071
      %v2140 = vadd.f32 %v2116, %v2076
      %v2141 = vadd.f32 %v2117, %v2079
      %v2142 = vadd.f32 %v2118, %v2084
      %v2143 = vadd.f32 %v2119, %v2087
      %v2144 = vadd.f32 %v2120, %v2092
      %v2145 = vadd.f32 %v2121, %v2095
      %2146 = vst.msk [vmem:[#allocation2] sm:$0xff] %vm325, %v2122
      %2147 = vst.msk [vmem:[#allocation2 + $0x8] sm:$0xff] %vm325, %v2123
      %2148 = vst.msk [vmem:[#allocation2 + $0x10] sm:$0xff] %vm325, %v2124
      %2149 = vst.msk [vmem:[#allocation2 + $0x18] sm:$0xff] %vm325, %v2125
      %2150 = vst.msk [vmem:[#allocation2 + $0x20] sm:$0xff] %vm325, %v2126
      %2151 = vst.msk [vmem:[#allocation2 + $0x28] sm:$0xff] %vm325, %v2127
      %2152 = vst.msk [vmem:[#allocation2 + $0x30] sm:$0xff] %vm325, %v2128
      %2153 = vst.msk [vmem:[#allocation2 + $0x38] sm:$0xff] %vm325, %v2129
      %2154 = vst.msk [vmem:[#allocation2 + $0x40] sm:$0xff] %vm325, %v2130
      %2155 = vst.msk [vmem:[#allocation2 + $0x48] sm:$0xff] %vm325, %v2131
      %2156 = vst.msk [vmem:[#allocation2 + $0x50] sm:$0xff] %vm325, %v2132
      %2157 = vst.msk [vmem:[#allocation2 + $0x58] sm:$0xff] %vm325, %v2133
      %2158 = vst.msk [vmem:[#allocation2 + $0x60] sm:$0xff] %vm325, %v2134
      %2159 = vst.msk [vmem:[#allocation2 + $0x68] sm:$0xff] %vm325, %v2135
      %2160 = vst.msk [vmem:[#allocation2 + $0x70] sm:$0xff] %vm325, %v2136
      %2161 = vst.msk [vmem:[#allocation2 + $0x78] sm:$0xff] %vm325, %v2137
      %2162 = vst.msk [vmem:[#allocation2 + $0x80] sm:$0xff] %vm325, %v2138
      %2163 = vst.msk [vmem:[#allocation2 + $0x88] sm:$0xff] %vm325, %v2139
      %2164 = vst.msk [vmem:[#allocation2 + $0x90] sm:$0xff] %vm325, %v2140
      %2165 = vst.msk [vmem:[#allocation2 + $0x98] sm:$0xff] %vm325, %v2141
      %2166 = vst.msk [vmem:[#allocation2 + $0xa0] sm:$0xff] %vm325, %v2142
      %2167 = vst.msk [vmem:[#allocation2 + $0xa8] sm:$0xff] %vm325, %v2143
      %2168 = vst.msk [vmem:[#allocation2 + $0xb0] sm:$0xff] %vm325, %v2144
      %2169 = vst.msk [vmem:[#allocation2 + $0xb8] sm:$0xff] %vm325, %v2145
      %v2170 = vld [vmem:[%s197 + $0xc] sm:$0xe]
      %v2171 = vld [vmem:[%s197 + $0x10] sm:$0xf]
      %v2172 = vld [vmem:[%s197 + $0x14] sm:$0xf]
      %v2173 = vld [vmem:[%s197 + $0x18] sm:$0xf]
      %v2174 = vld [vmem:[%s197 + $0x1c] sm:$0xf]
      %v2175 = vld [vmem:[%s197 + $0x20] sm:$0xf]
      %v2176 = vld [vmem:[%s197 + $0x24] sm:$0xf]
      %v2177 = vld [vmem:[%s197 + $0x28] sm:$0xf]
      %v2178 = vld [vmem:[%s197 + $0x2c] sm:$0xf]
      %v2179 = vld [vmem:[%s197 + $0x30] sm:$0xf]
      %v2180 = vld [vmem:[%s197 + $0x34] sm:$0xf]
      %v2181 = vld [vmem:[%s197 + $0x38] sm:$0xf]
      %v2182 = vld [vmem:[%s197 + $0x3c] sm:$0xf]
      %v2183 = vld [vmem:[%s197 + $0x40] sm:$0xf]
      %v2184 = vld [vmem:[%s197 + $0x44] sm:$0xf]
      %v2185 = vld [vmem:[%s197 + $0x48] sm:$0xf]
      %v2186 = vld [vmem:[%s197 + $0x4c] sm:$0xf]
      %v2187 = vld [vmem:[%s197 + $0x50] sm:$0xf]
      %v2188 = vld [vmem:[%s197 + $0x54] sm:$0xf]
      %v2189 = vld [vmem:[%s197 + $0x58] sm:$0xf]
      %v2190 = vld [vmem:[%s197 + $0x5c] sm:$0xf]
      %v2191 = vld [vmem:[%s197 + $0x60] sm:$0xf]
      %v2192 = vld [vmem:[%s197 + $0x64] sm:$0xf]
      %v2193 = vld [vmem:[%s197 + $0x68] sm:$0xf]
      %v2194 = vld [vmem:[%s197 + $0x6c] sm:$0x1]
      %s2195 = scalar_lea.vmem %s1, 160
      %v2196 = vld [vmem:[%s2195] sm:$0xf]
      %v2197 = vld [vmem:[%s2195 + $0x4] sm:$0xf]
      %v2198 = vld [vmem:[%s2195 + $0x8] sm:$0xf]
      %v2199 = vld [vmem:[%s2195 + $0xc] sm:$0xf]
      %v2200 = vld [vmem:[%s2195 + $0x10] sm:$0xf]
      %v2201 = vld [vmem:[%s2195 + $0x14] sm:$0xf]
      %v2202 = vld [vmem:[%s2195 + $0x18] sm:$0xf]
      %v2203 = vld [vmem:[%s2195 + $0x1c] sm:$0xf]
      %v2229 = vunpack.c.l.b16 %v2170
      %v2230 = vunpack.c.l.b16 %v2171
      %v2231 = vunpack.c.l.b16 %v2172
      %v2232 = vunpack.c.l.b16 %v2173
      %v2233 = vunpack.c.l.b16 %v2174
      %v2234 = vunpack.c.l.b16 %v2175
      %v2235 = vunpack.c.l.b16 %v2176
      %v2236 = vunpack.c.l.b16 %v2177
      %v2237 = vunpack.c.l.b16 %v2178
      %v2238 = vunpack.c.l.b16 %v2179
      %v2239 = vunpack.c.l.b16 %v2180
      %v2240 = vunpack.c.l.b16 %v2181
      %v2241 = vunpack.c.l.b16 %v2182
      %v2242 = vunpack.c.l.b16 %v2183
      %v2243 = vunpack.c.l.b16 %v2184
      %v2244 = vunpack.c.l.b16 %v2185
      %v2245 = vunpack.c.l.b16 %v2186
      %v2246 = vunpack.c.l.b16 %v2187
      %v2247 = vunpack.c.l.b16 %v2188
      %v2248 = vunpack.c.l.b16 %v2189
      %v2249 = vunpack.c.l.b16 %v2190
      %v2250 = vunpack.c.l.b16 %v2191
      %v2251 = vunpack.c.l.b16 %v2192
      %v2252 = vunpack.c.l.b16 %v2193
      %v2253 = vunpack.c.l.b16 %v2194
      %v2254 = vpack.c.b16 %v2230, %v2229
      %v2255 = vpack.c.b16 %v2232, %v2231
      %v2256 = vpack.c.b16 %v2234, %v2233
      %v2257 = vpack.c.b16 %v2236, %v2235
      %v2258 = vpack.c.b16 %v2238, %v2237
      %v2259 = vpack.c.b16 %v2240, %v2239
      %v2260 = vpack.c.b16 %v2242, %v2241
      %v2261 = vpack.c.b16 %v2244, %v2243
      %v2262 = vpack.c.b16 %v2246, %v2245
      %v2263 = vpack.c.b16 %v2248, %v2247
      %v2264 = vpack.c.b16 %v2250, %v2249
      %v2265 = vpack.c.b16 %v2252, %v2251
      %v2266 = vpack.c.b16 %v2253, %v2253
      %v2267 = vrot.slane %v2254, 1
      %v2268 = vrot.slane %v2255, 1
      %v2269 = vsel %vm1071, %v2267, %v2268
      %v2270 = vrot.slane %v2256, 1
      %v2271 = vsel %vm1071, %v2268, %v2270
      %v2272 = vrot.slane %v2257, 1
      %v2273 = vsel %vm1071, %v2270, %v2272
      %v2274 = vrot.slane %v2258, 1
      %v2275 = vsel %vm1071, %v2272, %v2274
      %v2276 = vrot.slane %v2259, 1
      %v2277 = vsel %vm1071, %v2274, %v2276
      %v2278 = vrot.slane %v2260, 1
      %v2279 = vsel %vm1071, %v2276, %v2278
      %v2280 = vrot.slane %v2261, 1
      %v2281 = vsel %vm1071, %v2278, %v2280
      %v2282 = vrot.slane %v2262, 1
      %v2283 = vsel %vm1071, %v2280, %v2282
      %v2284 = vrot.slane %v2263, 1
      %v2285 = vsel %vm1071, %v2282, %v2284
      %v2286 = vrot.slane %v2264, 1
      %v2287 = vsel %vm1071, %v2284, %v2286
      %v2288 = vrot.slane %v2265, 1
      %v2289 = vsel %vm1071, %v2286, %v2288
      %v2290 = vrot.slane %v2266, 1
      %v2291 = vsel %vm1071, %v2288, %v2290
      %v2300 = vunpack.c.l.b16 %v2196
      %v2301 = vunpack.c.l.b16 %v2197
      %v2302 = vunpack.c.l.b16 %v2198
      %v2303 = vunpack.c.l.b16 %v2199
      %v2304 = vunpack.c.l.b16 %v2200
      %v2305 = vunpack.c.l.b16 %v2201
      %v2306 = vunpack.c.l.b16 %v2202
      %v2307 = vunpack.c.l.b16 %v2203
      %v2308 = vpack.c.b16 %v2301, %v2300
      %v2309 = vpack.c.b16 %v2303, %v2302
      %v2310 = vpack.c.b16 %v2305, %v2304
      %v2311 = vpack.c.b16 %v2307, %v2306
      %v2317 = vsel %vm325, %v2269, 0
      %v2320 = vsel %vm325, %v2271, 0
      %v2323 = vsel %vm325, %v2273, 0
      %v2326 = vsel %vm325, %v2275, 0
      %v2329 = vsel %vm325, %v2277, 0
      %v2332 = vsel %vm325, %v2279, 0
      %v2335 = vsel %vm325, %v2281, 0
      %v2338 = vsel %vm325, %v2283, 0
      %v2341 = vsel %vm325, %v2285, 0
      %v2344 = vsel %vm325, %v2287, 0
      %v2347 = vsel %vm325, %v2289, 0
      %v2350 = vsel %vm325, %v2291, 0
      %2352 = vmatprep.subr.bf16.mxu0 0
      %2353 = vmatpush1.bf16.msra.mxu0 %v2308
      %2354 = vmatprep.subr.bf16.mxu0 0
      %2355 = vmatpush1.bf16.msra.mxu0 %v2309
      %2356 = vmatprep.subr.bf16.mxu0 0
      %2357 = vmatpush1.bf16.msra.mxu0 %v2310
      %2358 = vmatprep.subr.bf16.mxu0 0
      %2359 = vmatpush1.bf16.msra.mxu0 %v2311
      %2360 = vmatprep.subr.bf16.mxu0 0
      %2361 = vmatpush1.bf16.msra.mxu0 0
      %2362 = vmatprep.subr.bf16.mxu0 0
      %2363 = vmatpush1.bf16.msra.mxu0 0
      %2364 = vmatprep.subr.bf16.mxu0 0
      %2365 = vmatpush1.bf16.msra.mxu0 0
      %2366 = vmatprep.subr.bf16.mxu0 0
      %2367 = vmatpush1.bf16.msra.mxu0 0
      %2368 = vmatprep.subr.bf16.mxu0 0
      %2369 = vmatpush1.bf16.msra.mxu0 0
      %2370 = vmatprep.subr.bf16.mxu0 0
      %2371 = vmatpush1.bf16.msra.mxu0 0
      %2372 = vmatprep.subr.bf16.mxu0 0
      %2373 = vmatpush1.bf16.msra.mxu0 0
      %2374 = vmatprep.subr.bf16.mxu0 0
      %2375 = vmatpush1.bf16.msra.mxu0 0
      %2376 = vmatprep.subr.bf16.mxu0 0
      %2377 = vmatpush1.bf16.msra.mxu0 0
      %2378 = vmatprep.subr.bf16.mxu0 0
      %2379 = vmatpush1.bf16.msra.mxu0 0
      %2380 = vmatprep.subr.bf16.mxu0 0
      %2381 = vmatpush1.bf16.msra.mxu0 0
      %2382 = vmatprep.subr.bf16.mxu0 0
      %2383 = vmatpush1.bf16.msra.mxu0 0
      %2384 = vmatprep.mubr.bf16.mxu0 0
      %2385 = vmatmul.mubr.bf16.gmra.mrb[0].mxu0 %v2317
      %v2386 = vpop.f32.mrb[0].mxu0
      %v2387 = vadd.f32 0.0, %v2386
      %v2388 = vpop.f32.mrb[0].mxu0
      %v2389 = vpop.f32.mrb[0].mxu0
      %v2390 = vadd.f32 0.0, %v2389
      %v2391 = vpop.f32.mrb[0].mxu0
      %2392 = vmatprep.mubr.bf16.mxu0 0
      %2393 = vmatmul.mubr.bf16.gmra.mrb[0].mxu0 %v2320
      %v2394 = vpop.f32.mrb[0].mxu0
      %v2395 = vadd.f32 0.0, %v2394
      %v2396 = vpop.f32.mrb[0].mxu0
      %v2397 = vpop.f32.mrb[0].mxu0
      %v2398 = vadd.f32 0.0, %v2397
      %v2399 = vpop.f32.mrb[0].mxu0
      %2400 = vmatprep.mubr.bf16.mxu0 0
      %2401 = vmatmul.mubr.bf16.gmra.mrb[0].mxu0 %v2323
      %v2402 = vpop.f32.mrb[0].mxu0
      %v2403 = vadd.f32 0.0, %v2402
      %v2404 = vpop.f32.mrb[0].mxu0
      %v2405 = vpop.f32.mrb[0].mxu0
      %v2406 = vadd.f32 0.0, %v2405
      %v2407 = vpop.f32.mrb[0].mxu0
      %2408 = vmatprep.mubr.bf16.mxu0 0
      %2409 = vmatmul.mubr.bf16.gmra.mrb[0].mxu0 %v2326
      %v2410 = vpop.f32.mrb[0].mxu0
      %v2411 = vadd.f32 0.0, %v2410
      %v2412 = vpop.f32.mrb[0].mxu0
      %v2413 = vpop.f32.mrb[0].mxu0
      %v2414 = vadd.f32 0.0, %v2413
      %v2415 = vpop.f32.mrb[0].mxu0
      %2416 = vmatprep.mubr.bf16.mxu0 0
      %2417 = vmatmul.mubr.bf16.gmra.mrb[0].mxu0 %v2329
      %v2418 = vpop.f32.mrb[0].mxu0
      %v2419 = vadd.f32 0.0, %v2418
      %v2420 = vpop.f32.mrb[0].mxu0
      %v2421 = vpop.f32.mrb[0].mxu0
      %v2422 = vadd.f32 0.0, %v2421
      %v2423 = vpop.f32.mrb[0].mxu0
      %2424 = vmatprep.mubr.bf16.mxu0 0
      %2425 = vmatmul.mubr.bf16.gmra.mrb[0].mxu0 %v2332
      %v2426 = vpop.f32.mrb[0].mxu0
      %v2427 = vadd.f32 0.0, %v2426
      %v2428 = vpop.f32.mrb[0].mxu0
      %v2429 = vpop.f32.mrb[0].mxu0
      %v2430 = vadd.f32 0.0, %v2429
      %v2431 = vpop.f32.mrb[0].mxu0
      %2432 = vmatprep.mubr.bf16.mxu0 0
      %2433 = vmatmul.mubr.bf16.gmra.mrb[0].mxu0 %v2335
      %v2434 = vpop.f32.mrb[0].mxu0
      %v2435 = vadd.f32 0.0, %v2434
      %v2436 = vpop.f32.mrb[0].mxu0
      %v2437 = vpop.f32.mrb[0].mxu0
      %v2438 = vadd.f32 0.0, %v2437
      %v2439 = vpop.f32.mrb[0].mxu0
      %2440 = vmatprep.mubr.bf16.mxu0 0
      %2441 = vmatmul.mubr.bf16.gmra.mrb[0].mxu0 %v2338
      %v2442 = vpop.f32.mrb[0].mxu0
      %v2443 = vadd.f32 0.0, %v2442
      %v2444 = vpop.f32.mrb[0].mxu0
      %v2445 = vpop.f32.mrb[0].mxu0
      %v2446 = vadd.f32 0.0, %v2445
      %v2447 = vpop.f32.mrb[0].mxu0
      %2448 = vmatprep.mubr.bf16.mxu0 0
      %2449 = vmatmul.mubr.bf16.gmra.mrb[0].mxu0 %v2341
      %v2450 = vpop.f32.mrb[0].mxu0
      %v2451 = vadd.f32 0.0, %v2450
      %v2452 = vpop.f32.mrb[0].mxu0
      %v2453 = vpop.f32.mrb[0].mxu0
      %v2454 = vadd.f32 0.0, %v2453
      %v2455 = vpop.f32.mrb[0].mxu0
      %2456 = vmatprep.mubr.bf16.mxu0 0
      %2457 = vmatmul.mubr.bf16.gmra.mrb[0].mxu0 %v2344
      %v2458 = vpop.f32.mrb[0].mxu0
      %v2459 = vadd.f32 0.0, %v2458
      %v2460 = vpop.f32.mrb[0].mxu0
      %v2461 = vpop.f32.mrb[0].mxu0
      %v2462 = vadd.f32 0.0, %v2461
      %v2463 = vpop.f32.mrb[0].mxu0
      %2464 = vmatprep.mubr.bf16.mxu0 0
      %2465 = vmatmul.mubr.bf16.gmra.mrb[0].mxu0 %v2347
      %v2466 = vpop.f32.mrb[0].mxu0
      %v2467 = vadd.f32 0.0, %v2466
      %v2468 = vpop.f32.mrb[0].mxu0
      %v2469 = vpop.f32.mrb[0].mxu0
      %v2470 = vadd.f32 0.0, %v2469
      %v2471 = vpop.f32.mrb[0].mxu0
      %2472 = vmatprep.mubr.bf16.mxu0 0
      %2473 = vmatmul.mubr.bf16.gmra.mrb[0].mxu0 %v2350
      %v2474 = vpop.f32.mrb[0].mxu0
      %v2475 = vadd.f32 0.0, %v2474
      %v2476 = vpop.f32.mrb[0].mxu0
      %v2477 = vpop.f32.mrb[0].mxu0
      %v2478 = vadd.f32 0.0, %v2477
      %v2479 = vpop.f32.mrb[0].mxu0
      %2480 = vdwg.mxu0
      %v2481 = vld [vmem:[#allocation2] sm:$0xff]
      %v2482 = vld [vmem:[#allocation2 + $0x8] sm:$0xff]
      %v2483 = vld [vmem:[#allocation2 + $0x10] sm:$0xff]
      %v2484 = vld [vmem:[#allocation2 + $0x18] sm:$0xff]
      %v2485 = vld [vmem:[#allocation2 + $0x20] sm:$0xff]
      %v2486 = vld [vmem:[#allocation2 + $0x28] sm:$0xff]
      %v2487 = vld [vmem:[#allocation2 + $0x30] sm:$0xff]
      %v2488 = vld [vmem:[#allocation2 + $0x38] sm:$0xff]
      %v2489 = vld [vmem:[#allocation2 + $0x40] sm:$0xff]
      %v2490 = vld [vmem:[#allocation2 + $0x48] sm:$0xff]
      %v2491 = vld [vmem:[#allocation2 + $0x50] sm:$0xff]
      %v2492 = vld [vmem:[#allocation2 + $0x58] sm:$0xff]
      %v2493 = vld [vmem:[#allocation2 + $0x60] sm:$0xff]
      %v2494 = vld [vmem:[#allocation2 + $0x68] sm:$0xff]
      %v2495 = vld [vmem:[#allocation2 + $0x70] sm:$0xff]
      %v2496 = vld [vmem:[#allocation2 + $0x78] sm:$0xff]
      %v2497 = vld [vmem:[#allocation2 + $0x80] sm:$0xff]
      %v2498 = vld [vmem:[#allocation2 + $0x88] sm:$0xff]
      %v2499 = vld [vmem:[#allocation2 + $0x90] sm:$0xff]
      %v2500 = vld [vmem:[#allocation2 + $0x98] sm:$0xff]
      %v2501 = vld [vmem:[#allocation2 + $0xa0] sm:$0xff]
      %v2502 = vld [vmem:[#allocation2 + $0xa8] sm:$0xff]
      %v2503 = vld [vmem:[#allocation2 + $0xb0] sm:$0xff]
      %v2504 = vld [vmem:[#allocation2 + $0xb8] sm:$0xff]
      %v2505 = vadd.f32 %v2481, %v2387
      %v2506 = vadd.f32 %v2482, %v2390
      %v2507 = vadd.f32 %v2483, %v2395
      %v2508 = vadd.f32 %v2484, %v2398
      %v2509 = vadd.f32 %v2485, %v2403
      %v2510 = vadd.f32 %v2486, %v2406
      %v2511 = vadd.f32 %v2487, %v2411
      %v2512 = vadd.f32 %v2488, %v2414
      %v2513 = vadd.f32 %v2489, %v2419
      %v2514 = vadd.f32 %v2490, %v2422
      %v2515 = vadd.f32 %v2491, %v2427
      %v2516 = vadd.f32 %v2492, %v2430
      %v2517 = vadd.f32 %v2493, %v2435
      %v2518 = vadd.f32 %v2494, %v2438
      %v2519 = vadd.f32 %v2495, %v2443
      %v2520 = vadd.f32 %v2496, %v2446
      %v2521 = vadd.f32 %v2497, %v2451
      %v2522 = vadd.f32 %v2498, %v2454
      %v2523 = vadd.f32 %v2499, %v2459
      %v2524 = vadd.f32 %v2500, %v2462
      %v2525 = vadd.f32 %v2501, %v2467
      %v2526 = vadd.f32 %v2502, %v2470
      %v2527 = vadd.f32 %v2503, %v2475
      %v2528 = vadd.f32 %v2504, %v2478
      %2529 = vst.msk [vmem:[#allocation2] sm:$0xff] %vm325, %v2505
      %2530 = vst.msk [vmem:[#allocation2 + $0x8] sm:$0xff] %vm325, %v2506
      %2531 = vst.msk [vmem:[#allocation2 + $0x10] sm:$0xff] %vm325, %v2507
      %2532 = vst.msk [vmem:[#allocation2 + $0x18] sm:$0xff] %vm325, %v2508
      %2533 = vst.msk [vmem:[#allocation2 + $0x20] sm:$0xff] %vm325, %v2509
      %2534 = vst.msk [vmem:[#allocation2 + $0x28] sm:$0xff] %vm325, %v2510
      %2535 = vst.msk [vmem:[#allocation2 + $0x30] sm:$0xff] %vm325, %v2511
      %2536 = vst.msk [vmem:[#allocation2 + $0x38] sm:$0xff] %vm325, %v2512
      %2537 = vst.msk [vmem:[#allocation2 + $0x40] sm:$0xff] %vm325, %v2513
      %2538 = vst.msk [vmem:[#allocation2 + $0x48] sm:$0xff] %vm325, %v2514
      %2539 = vst.msk [vmem:[#allocation2 + $0x50] sm:$0xff] %vm325, %v2515
      %2540 = vst.msk [vmem:[#allocation2 + $0x58] sm:$0xff] %vm325, %v2516
      %2541 = vst.msk [vmem:[#allocation2 + $0x60] sm:$0xff] %vm325, %v2517
      %2542 = vst.msk [vmem:[#allocation2 + $0x68] sm:$0xff] %vm325, %v2518
      %2543 = vst.msk [vmem:[#allocation2 + $0x70] sm:$0xff] %vm325, %v2519
      %2544 = vst.msk [vmem:[#allocation2 + $0x78] sm:$0xff] %vm325, %v2520
      %2545 = vst.msk [vmem:[#allocation2 + $0x80] sm:$0xff] %vm325, %v2521
      %2546 = vst.msk [vmem:[#allocation2 + $0x88] sm:$0xff] %vm325, %v2522
      %2547 = vst.msk [vmem:[#allocation2 + $0x90] sm:$0xff] %vm325, %v2523
      %2548 = vst.msk [vmem:[#allocation2 + $0x98] sm:$0xff] %vm325, %v2524
      %2549 = vst.msk [vmem:[#allocation2 + $0xa0] sm:$0xff] %vm325, %v2525
      %2550 = vst.msk [vmem:[#allocation2 + $0xa8] sm:$0xff] %vm325, %v2526
      %2551 = vst.msk [vmem:[#allocation2 + $0xb0] sm:$0xff] %vm325, %v2527
      %2552 = vst.msk [vmem:[#allocation2 + $0xb8] sm:$0xff] %vm325, %v2528
      %v2553 = vld [vmem:[%s197 + $0x18] sm:$0xf]
      %v2554 = vld [vmem:[%s197 + $0x1c] sm:$0xf]
      %v2555 = vld [vmem:[%s197 + $0x20] sm:$0xf]
      %v2556 = vld [vmem:[%s197 + $0x24] sm:$0xf]
      %v2557 = vld [vmem:[%s197 + $0x28] sm:$0xf]
      %v2558 = vld [vmem:[%s197 + $0x2c] sm:$0xf]
      %v2559 = vld [vmem:[%s197 + $0x30] sm:$0xf]
      %v2560 = vld [vmem:[%s197 + $0x34] sm:$0xf]
      %v2561 = vld [vmem:[%s197 + $0x38] sm:$0xf]
      %v2562 = vld [vmem:[%s197 + $0x3c] sm:$0xf]
      %v2563 = vld [vmem:[%s197 + $0x40] sm:$0xf]
      %v2564 = vld [vmem:[%s197 + $0x44] sm:$0xf]
      %v2565 = vld [vmem:[%s197 + $0x48] sm:$0xf]
      %v2566 = vld [vmem:[%s197 + $0x4c] sm:$0xf]
      %v2567 = vld [vmem:[%s197 + $0x50] sm:$0xf]
      %v2568 = vld [vmem:[%s197 + $0x54] sm:$0xf]
      %v2569 = vld [vmem:[%s197 + $0x58] sm:$0xf]
      %v2570 = vld [vmem:[%s197 + $0x5c] sm:$0xf]
      %v2571 = vld [vmem:[%s197 + $0x60] sm:$0xf]
      %v2572 = vld [vmem:[%s197 + $0x64] sm:$0xf]
      %v2573 = vld [vmem:[%s197 + $0x68] sm:$0xf]
      %v2574 = vld [vmem:[%s197 + $0x6c] sm:$0xf]
      %v2575 = vld [vmem:[%s197 + $0x70] sm:$0xf]
      %v2576 = vld [vmem:[%s197 + $0x74] sm:$0xf]
      %s2577 = scalar_lea.vmem %s1, 192
      %v2578 = vld [vmem:[%s2577] sm:$0xf]
      %v2579 = vld [vmem:[%s2577 + $0x4] sm:$0xf]
      %v2580 = vld [vmem:[%s2577 + $0x8] sm:$0xf]
      %v2581 = vld [vmem:[%s2577 + $0xc] sm:$0xf]
      %v2582 = vld [vmem:[%s2577 + $0x10] sm:$0xf]
      %v2583 = vld [vmem:[%s2577 + $0x14] sm:$0xf]
      %v2584 = vld [vmem:[%s2577 + $0x18] sm:$0xf]
      %v2585 = vld [vmem:[%s2577 + $0x1c] sm:$0xf]
      %v2610 = vunpack.c.l.b16 %v2553
      %v2611 = vunpack.c.l.b16 %v2554
      %v2612 = vunpack.c.l.b16 %v2555
      %v2613 = vunpack.c.l.b16 %v2556
      %v2614 = vunpack.c.l.b16 %v2557
      %v2615 = vunpack.c.l.b16 %v2558
      %v2616 = vunpack.c.l.b16 %v2559
      %v2617 = vunpack.c.l.b16 %v2560
      %v2618 = vunpack.c.l.b16 %v2561
      %v2619 = vunpack.c.l.b16 %v2562
      %v2620 = vunpack.c.l.b16 %v2563
      %v2621 = vunpack.c.l.b16 %v2564
      %v2622 = vunpack.c.l.b16 %v2565
      %v2623 = vunpack.c.l.b16 %v2566
      %v2624 = vunpack.c.l.b16 %v2567
      %v2625 = vunpack.c.l.b16 %v2568
      %v2626 = vunpack.c.l.b16 %v2569
      %v2627 = vunpack.c.l.b16 %v2570
      %v2628 = vunpack.c.l.b16 %v2571
      %v2629 = vunpack.c.l.b16 %v2572
      %v2630 = vunpack.c.l.b16 %v2573
      %v2631 = vunpack.c.l.b16 %v2574
      %v2632 = vunpack.c.l.b16 %v2575
      %v2633 = vunpack.c.l.b16 %v2576
      %v2634 = vpack.c.b16 %v2611, %v2610
      %v2635 = vpack.c.b16 %v2613, %v2612
      %v2636 = vpack.c.b16 %v2615, %v2614
      %v2637 = vpack.c.b16 %v2617, %v2616
      %v2638 = vpack.c.b16 %v2619, %v2618
      %v2639 = vpack.c.b16 %v2621, %v2620
      %v2640 = vpack.c.b16 %v2623, %v2622
      %v2641 = vpack.c.b16 %v2625, %v2624
      %v2642 = vpack.c.b16 %v2627, %v2626
      %v2643 = vpack.c.b16 %v2629, %v2628
      %v2644 = vpack.c.b16 %v2631, %v2630
      %v2645 = vpack.c.b16 %v2633, %v2632
      %v2654 = vunpack.c.l.b16 %v2578
      %v2655 = vunpack.c.l.b16 %v2579
      %v2656 = vunpack.c.l.b16 %v2580
      %v2657 = vunpack.c.l.b16 %v2581
      %v2658 = vunpack.c.l.b16 %v2582
      %v2659 = vunpack.c.l.b16 %v2583
      %v2660 = vunpack.c.l.b16 %v2584
      %v2661 = vunpack.c.l.b16 %v2585
      %v2662 = vpack.c.b16 %v2655, %v2654
      %v2663 = vpack.c.b16 %v2657, %v2656
      %v2664 = vpack.c.b16 %v2659, %v2658
      %v2665 = vpack.c.b16 %v2661, %v2660
      %v2671 = vsel %vm325, %v2634, 0
      %v2674 = vsel %vm325, %v2635, 0
      %v2677 = vsel %vm325, %v2636, 0
      %v2680 = vsel %vm325, %v2637, 0
      %v2683 = vsel %vm325, %v2638, 0
      %v2686 = vsel %vm325, %v2639, 0
      %v2689 = vsel %vm325, %v2640, 0
      %v2692 = vsel %vm325, %v2641, 0
      %v2695 = vsel %vm325, %v2642, 0
      %v2698 = vsel %vm325, %v2643, 0
      %v2701 = vsel %vm325, %v2644, 0
      %v2704 = vsel %vm325, %v2645, 0
      %2706 = vmatprep.subr.bf16.mxu0 0
      %2707 = vmatpush1.bf16.msra.mxu0 %v2662
      %2708 = vmatprep.subr.bf16.mxu0 0
      %2709 = vmatpush1.bf16.msra.mxu0 %v2663
      %2710 = vmatprep.subr.bf16.mxu0 0
      %2711 = vmatpush1.bf16.msra.mxu0 %v2664
      %2712 = vmatprep.subr.bf16.mxu0 0
      %2713 = vmatpush1.bf16.msra.mxu0 %v2665
      %2714 = vmatprep.subr.bf16.mxu0 0
      %2715 = vmatpush1.bf16.msra.mxu0 0
      %2716 = vmatprep.subr.bf16.mxu0 0
      %2717 = vmatpush1.bf16.msra.mxu0 0
      %2718 = vmatprep.subr.bf16.mxu0 0
      %2719 = vmatpush1.bf16.msra.mxu0 0
      %2720 = vmatprep.subr.bf16.mxu0 0
      %2721 = vmatpush1.bf16.msra.mxu0 0
      %2722 = vmatprep.subr.bf16.mxu0 0
      %2723 = vmatpush1.bf16.msra.mxu0 0
      %2724 = vmatprep.subr.bf16.mxu0 0
      %2725 = vmatpush1.bf16.msra.mxu0 0
      %2726 = vmatprep.subr.bf16.mxu0 0
      %2727 = vmatpush1.bf16.msra.mxu0 0
      %2728 = vmatprep.subr.bf16.mxu0 0
      %2729 = vmatpush1.bf16.msra.mxu0 0
      %2730 = vmatprep.subr.bf16.mxu0 0
      %2731 = vmatpush1.bf16.msra.mxu0 0
      %2732 = vmatprep.subr.bf16.mxu0 0
      %2733 = vmatpush1.bf16.msra.mxu0 0
      %2734 = vmatprep.subr.bf16.mxu0 0
      %2735 = vmatpush1.bf16.msra.mxu0 0
      %2736 = vmatprep.subr.bf16.mxu0 0
      %2737 = vmatpush1.bf16.msra.mxu0 0
      %2738 = vmatprep.mubr.bf16.mxu0 0
      %2739 = vmatmul.mubr.bf16.gmra.mrb[0].mxu0 %v2671
      %v2740 = vpop.f32.mrb[0].mxu0
      %v2741 = vadd.f32 0.0, %v2740
      %v2742 = vpop.f32.mrb[0].mxu0
      %v2743 = vpop.f32.mrb[0].mxu0
      %v2744 = vadd.f32 0.0, %v2743
      %v2745 = vpop.f32.mrb[0].mxu0
      %2746 = vmatprep.mubr.bf16.mxu0 0
      %2747 = vmatmul.mubr.bf16.gmra.mrb[0].mxu0 %v2674
      %v2748 = vpop.f32.mrb[0].mxu0
      %v2749 = vadd.f32 0.0, %v2748
      %v2750 = vpop.f32.mrb[0].mxu0
      %v2751 = vpop.f32.mrb[0].mxu0
      %v2752 = vadd.f32 0.0, %v2751
      %v2753 = vpop.f32.mrb[0].mxu0
      %2754 = vmatprep.mubr.bf16.mxu0 0
      %2755 = vmatmul.mubr.bf16.gmra.mrb[0].mxu0 %v2677
      %v2756 = vpop.f32.mrb[0].mxu0
      %v2757 = vadd.f32 0.0, %v2756
      %v2758 = vpop.f32.mrb[0].mxu0
      %v2759 = vpop.f32.mrb[0].mxu0
      %v2760 = vadd.f32 0.0, %v2759
      %v2761 = vpop.f32.mrb[0].mxu0
      %2762 = vmatprep.mubr.bf16.mxu0 0
      %2763 = vmatmul.mubr.bf16.gmra.mrb[0].mxu0 %v2680
      %v2764 = vpop.f32.mrb[0].mxu0
      %v2765 = vadd.f32 0.0, %v2764
      %v2766 = vpop.f32.mrb[0].mxu0
      %v2767 = vpop.f32.mrb[0].mxu0
      %v2768 = vadd.f32 0.0, %v2767
      %v2769 = vpop.f32.mrb[0].mxu0
      %2770 = vmatprep.mubr.bf16.mxu0 0
      %2771 = vmatmul.mubr.bf16.gmra.mrb[0].mxu0 %v2683
      %v2772 = vpop.f32.mrb[0].mxu0
      %v2773 = vadd.f32 0.0, %v2772
      %v2774 = vpop.f32.mrb[0].mxu0
      %v2775 = vpop.f32.mrb[0].mxu0
      %v2776 = vadd.f32 0.0, %v2775
      %v2777 = vpop.f32.mrb[0].mxu0
      %2778 = vmatprep.mubr.bf16.mxu0 0
      %2779 = vmatmul.mubr.bf16.gmra.mrb[0].mxu0 %v2686
      %v2780 = vpop.f32.mrb[0].mxu0
      %v2781 = vadd.f32 0.0, %v2780
      %v2782 = vpop.f32.mrb[0].mxu0
      %v2783 = vpop.f32.mrb[0].mxu0
      %v2784 = vadd.f32 0.0, %v2783
      %v2785 = vpop.f32.mrb[0].mxu0
      %2786 = vmatprep.mubr.bf16.mxu0 0
      %2787 = vmatmul.mubr.bf16.gmra.mrb[0].mxu0 %v2689
      %v2788 = vpop.f32.mrb[0].mxu0
      %v2789 = vadd.f32 0.0, %v2788
      %v2790 = vpop.f32.mrb[0].mxu0
      %v2791 = vpop.f32.mrb[0].mxu0
      %v2792 = vadd.f32 0.0, %v2791
      %v2793 = vpop.f32.mrb[0].mxu0
      %2794 = vmatprep.mubr.bf16.mxu0 0
      %2795 = vmatmul.mubr.bf16.gmra.mrb[0].mxu0 %v2692
      %v2796 = vpop.f32.mrb[0].mxu0
      %v2797 = vadd.f32 0.0, %v2796
      %v2798 = vpop.f32.mrb[0].mxu0
      %v2799 = vpop.f32.mrb[0].mxu0
      %v2800 = vadd.f32 0.0, %v2799
      %v2801 = vpop.f32.mrb[0].mxu0
      %2802 = vmatprep.mubr.bf16.mxu0 0
      %2803 = vmatmul.mubr.bf16.gmra.mrb[0].mxu0 %v2695
      %v2804 = vpop.f32.mrb[0].mxu0
      %v2805 = vadd.f32 0.0, %v2804
      %v2806 = vpop.f32.mrb[0].mxu0
      %v2807 = vpop.f32.mrb[0].mxu0
      %v2808 = vadd.f32 0.0, %v2807
      %v2809 = vpop.f32.mrb[0].mxu0
      %2810 = vmatprep.mubr.bf16.mxu0 0
      %2811 = vmatmul.mubr.bf16.gmra.mrb[0].mxu0 %v2698
      %v2812 = vpop.f32.mrb[0].mxu0
      %v2813 = vadd.f32 0.0, %v2812
      %v2814 = vpop.f32.mrb[0].mxu0
      %v2815 = vpop.f32.mrb[0].mxu0
      %v2816 = vadd.f32 0.0, %v2815
      %v2817 = vpop.f32.mrb[0].mxu0
      %2818 = vmatprep.mubr.bf16.mxu0 0
      %2819 = vmatmul.mubr.bf16.gmra.mrb[0].mxu0 %v2701
      %v2820 = vpop.f32.mrb[0].mxu0
      %v2821 = vadd.f32 0.0, %v2820
      %v2822 = vpop.f32.mrb[0].mxu0
      %v2823 = vpop.f32.mrb[0].mxu0
      %v2824 = vadd.f32 0.0, %v2823
      %v2825 = vpop.f32.mrb[0].mxu0
      %2826 = vmatprep.mubr.bf16.mxu0 0
      %2827 = vmatmul.mubr.bf16.gmra.mrb[0].mxu0 %v2704
      %v2828 = vpop.f32.mrb[0].mxu0
      %v2829 = vadd.f32 0.0, %v2828
      %v2830 = vpop.f32.mrb[0].mxu0
      %v2831 = vpop.f32.mrb[0].mxu0
      %v2832 = vadd.f32 0.0, %v2831
      %v2833 = vpop.f32.mrb[0].mxu0
      %2834 = vdwg.mxu0
      %v2835 = vld [vmem:[#allocation2] sm:$0xff]
      %v2836 = vld [vmem:[#allocation2 + $0x8] sm:$0xff]
      %v2837 = vld [vmem:[#allocation2 + $0x10] sm:$0xff]
      %v2838 = vld [vmem:[#allocation2 + $0x18] sm:$0xff]
      %v2839 = vld [vmem:[#allocation2 + $0x20] sm:$0xff]
      %v2840 = vld [vmem:[#allocation2 + $0x28] sm:$0xff]
      %v2841 = vld [vmem:[#allocation2 + $0x30] sm:$0xff]
      %v2842 = vld [vmem:[#allocation2 + $0x38] sm:$0xff]
      %v2843 = vld [vmem:[#allocation2 + $0x40] sm:$0xff]
      %v2844 = vld [vmem:[#allocation2 + $0x48] sm:$0xff]
      %v2845 = vld [vmem:[#allocation2 + $0x50] sm:$0xff]
      %v2846 = vld [vmem:[#allocation2 + $0x58] sm:$0xff]
      %v2847 = vld [vmem:[#allocation2 + $0x60] sm:$0xff]
      %v2848 = vld [vmem:[#allocation2 + $0x68] sm:$0xff]
      %v2849 = vld [vmem:[#allocation2 + $0x70] sm:$0xff]
      %v2850 = vld [vmem:[#allocation2 + $0x78] sm:$0xff]
      %v2851 = vld [vmem:[#allocation2 + $0x80] sm:$0xff]
      %v2852 = vld [vmem:[#allocation2 + $0x88] sm:$0xff]
      %v2853 = vld [vmem:[#allocation2 + $0x90] sm:$0xff]
      %v2854 = vld [vmem:[#allocation2 + $0x98] sm:$0xff]
      %v2855 = vld [vmem:[#allocation2 + $0xa0] sm:$0xff]
      %v2856 = vld [vmem:[#allocation2 + $0xa8] sm:$0xff]
      %v2857 = vld [vmem:[#allocation2 + $0xb0] sm:$0xff]
      %v2858 = vld [vmem:[#allocation2 + $0xb8] sm:$0xff]
      %v2859 = vadd.f32 %v2835, %v2741
      %v2860 = vadd.f32 %v2836, %v2744
      %v2861 = vadd.f32 %v2837, %v2749
      %v2862 = vadd.f32 %v2838, %v2752
      %v2863 = vadd.f32 %v2839, %v2757
      %v2864 = vadd.f32 %v2840, %v2760
      %v2865 = vadd.f32 %v2841, %v2765
      %v2866 = vadd.f32 %v2842, %v2768
      %v2867 = vadd.f32 %v2843, %v2773
      %v2868 = vadd.f32 %v2844, %v2776
      %v2869 = vadd.f32 %v2845, %v2781
      %v2870 = vadd.f32 %v2846, %v2784
      %v2871 = vadd.f32 %v2847, %v2789
      %v2872 = vadd.f32 %v2848, %v2792
      %v2873 = vadd.f32 %v2849, %v2797
      %v2874 = vadd.f32 %v2850, %v2800
      %v2875 = vadd.f32 %v2851, %v2805
      %v2876 = vadd.f32 %v2852, %v2808
      %v2877 = vadd.f32 %v2853, %v2813
      %v2878 = vadd.f32 %v2854, %v2816
      %v2879 = vadd.f32 %v2855, %v2821
      %v2880 = vadd.f32 %v2856, %v2824
      %v2881 = vadd.f32 %v2857, %v2829
      %v2882 = vadd.f32 %v2858, %v2832
      %2883 = vst.msk [vmem:[#allocation2] sm:$0xff] %vm325, %v2859
      %2884 = vst.msk [vmem:[#allocation2 + $0x8] sm:$0xff] %vm325, %v2860
      %2885 = vst.msk [vmem:[#allocation2 + $0x10] sm:$0xff] %vm325, %v2861
      %2886 = vst.msk [vmem:[#allocation2 + $0x18] sm:$0xff] %vm325, %v2862
      %2887 = vst.msk [vmem:[#allocation2 + $0x20] sm:$0xff] %vm325, %v2863
      %2888 = vst.msk [vmem:[#allocation2 + $0x28] sm:$0xff] %vm325, %v2864
      %2889 = vst.msk [vmem:[#allocation2 + $0x30] sm:$0xff] %vm325, %v2865
      %2890 = vst.msk [vmem:[#allocation2 + $0x38] sm:$0xff] %vm325, %v2866
      %2891 = vst.msk [vmem:[#allocation2 + $0x40] sm:$0xff] %vm325, %v2867
      %2892 = vst.msk [vmem:[#allocation2 + $0x48] sm:$0xff] %vm325, %v2868
      %2893 = vst.msk [vmem:[#allocation2 + $0x50] sm:$0xff] %vm325, %v2869
      %2894 = vst.msk [vmem:[#allocation2 + $0x58] sm:$0xff] %vm325, %v2870
      %2895 = vst.msk [vmem:[#allocation2 + $0x60] sm:$0xff] %vm325, %v2871
      %2896 = vst.msk [vmem:[#allocation2 + $0x68] sm:$0xff] %vm325, %v2872
      %2897 = vst.msk [vmem:[#allocation2 + $0x70] sm:$0xff] %vm325, %v2873
      %2898 = vst.msk [vmem:[#allocation2 + $0x78] sm:$0xff] %vm325, %v2874
      %2899 = vst.msk [vmem:[#allocation2 + $0x80] sm:$0xff] %vm325, %v2875
      %2900 = vst.msk [vmem:[#allocation2 + $0x88] sm:$0xff] %vm325, %v2876
      %2901 = vst.msk [vmem:[#allocation2 + $0x90] sm:$0xff] %vm325, %v2877
      %2902 = vst.msk [vmem:[#allocation2 + $0x98] sm:$0xff] %vm325, %v2878
      %2903 = vst.msk [vmem:[#allocation2 + $0xa0] sm:$0xff] %vm325, %v2879
      %2904 = vst.msk [vmem:[#allocation2 + $0xa8] sm:$0xff] %vm325, %v2880
      %2905 = vst.msk [vmem:[#allocation2 + $0xb0] sm:$0xff] %vm325, %v2881
      %2906 = vst.msk [vmem:[#allocation2 + $0xb8] sm:$0xff] %vm325, %v2882
      %v2907 = vld [vmem:[%s197 + $0x18] sm:$0xf]
      %v2908 = vld [vmem:[%s197 + $0x1c] sm:$0xf]
      %v2909 = vld [vmem:[%s197 + $0x20] sm:$0xf]
      %v2910 = vld [vmem:[%s197 + $0x24] sm:$0xf]
      %v2911 = vld [vmem:[%s197 + $0x28] sm:$0xf]
      %v2912 = vld [vmem:[%s197 + $0x2c] sm:$0xf]
      %v2913 = vld [vmem:[%s197 + $0x30] sm:$0xf]
      %v2914 = vld [vmem:[%s197 + $0x34] sm:$0xf]
      %v2915 = vld [vmem:[%s197 + $0x38] sm:$0xf]
      %v2916 = vld [vmem:[%s197 + $0x3c] sm:$0xf]
      %v2917 = vld [vmem:[%s197 + $0x40] sm:$0xf]
      %v2918 = vld [vmem:[%s197 + $0x44] sm:$0xf]
      %v2919 = vld [vmem:[%s197 + $0x48] sm:$0xf]
      %v2920 = vld [vmem:[%s197 + $0x4c] sm:$0xf]
      %v2921 = vld [vmem:[%s197 + $0x50] sm:$0xf]
      %v2922 = vld [vmem:[%s197 + $0x54] sm:$0xf]
      %v2923 = vld [vmem:[%s197 + $0x58] sm:$0xf]
      %v2924 = vld [vmem:[%s197 + $0x5c] sm:$0xf]
      %v2925 = vld [vmem:[%s197 + $0x60] sm:$0xf]
      %v2926 = vld [vmem:[%s197 + $0x64] sm:$0xf]
      %v2927 = vld [vmem:[%s197 + $0x68] sm:$0xf]
      %v2928 = vld [vmem:[%s197 + $0x6c] sm:$0xf]
      %v2929 = vld [vmem:[%s197 + $0x70] sm:$0xf]
      %v2930 = vld [vmem:[%s197 + $0x74] sm:$0xf]
      %v2931 = vld [vmem:[%s197 + $0x78] sm:$0x1]
      %s2932 = scalar_lea.vmem %s1, 224
      %v2933 = vld [vmem:[%s2932] sm:$0xf]
      %v2934 = vld [vmem:[%s2932 + $0x4] sm:$0xf]
      %v2935 = vld [vmem:[%s2932 + $0x8] sm:$0xf]
      %v2936 = vld [vmem:[%s2932 + $0xc] sm:$0xf]
      %v2937 = vld [vmem:[%s2932 + $0x10] sm:$0xf]
      %v2938 = vld [vmem:[%s2932 + $0x14] sm:$0xf]
      %v2939 = vld [vmem:[%s2932 + $0x18] sm:$0xf]
      %v2940 = vld [vmem:[%s2932 + $0x1c] sm:$0xf]
      %v2966 = vunpack.c.l.b16 %v2907
      %v2967 = vunpack.c.l.b16 %v2908
      %v2968 = vunpack.c.l.b16 %v2909
      %v2969 = vunpack.c.l.b16 %v2910
      %v2970 = vunpack.c.l.b16 %v2911
      %v2971 = vunpack.c.l.b16 %v2912
      %v2972 = vunpack.c.l.b16 %v2913
      %v2973 = vunpack.c.l.b16 %v2914
      %v2974 = vunpack.c.l.b16 %v2915
      %v2975 = vunpack.c.l.b16 %v2916
      %v2976 = vunpack.c.l.b16 %v2917
      %v2977 = vunpack.c.l.b16 %v2918
      %v2978 = vunpack.c.l.b16 %v2919
      %v2979 = vunpack.c.l.b16 %v2920
      %v2980 = vunpack.c.l.b16 %v2921
      %v2981 = vunpack.c.l.b16 %v2922
      %v2982 = vunpack.c.l.b16 %v2923
      %v2983 = vunpack.c.l.b16 %v2924
      %v2984 = vunpack.c.l.b16 %v2925
      %v2985 = vunpack.c.l.b16 %v2926
      %v2986 = vunpack.c.l.b16 %v2927
      %v2987 = vunpack.c.l.b16 %v2928
      %v2988 = vunpack.c.l.b16 %v2929
      %v2989 = vunpack.c.l.b16 %v2930
      %v2990 = vunpack.c.l.b16 %v2931
      %v2991 = vpack.c.b16 %v2967, %v2966
      %v2992 = vpack.c.b16 %v2969, %v2968
      %v2993 = vpack.c.b16 %v2971, %v2970
      %v2994 = vpack.c.b16 %v2973, %v2972
      %v2995 = vpack.c.b16 %v2975, %v2974
      %v2996 = vpack.c.b16 %v2977, %v2976
      %v2997 = vpack.c.b16 %v2979, %v2978
      %v2998 = vpack.c.b16 %v2981, %v2980
      %v2999 = vpack.c.b16 %v2983, %v2982
      %v3000 = vpack.c.b16 %v2985, %v2984
      %v3001 = vpack.c.b16 %v2987, %v2986
      %v3002 = vpack.c.b16 %v2989, %v2988
      %v3003 = vpack.c.b16 %v2990, %v2990
      %v3005 = vshrl.u32 %v2991, 16
      %v3007 = vshll.u32 %v2991, 16
      %v3009 = vrot.slane %v3007, 1
      %v3010 = vor.u32 %v3005, %v3009
      %v3012 = vshll.u32 %v2992, 16
      %v3014 = vrot.slane %v3012, 1
      %v3015 = vsel %vm612, %v3010, %v3014
      %v3016 = vshrl.u32 %v2992, 16
      %v3018 = vor.u32 %v3016, %v3014
      %v3020 = vshll.u32 %v2993, 16
      %v3022 = vrot.slane %v3020, 1
      %v3023 = vsel %vm612, %v3018, %v3022
      %v3024 = vshrl.u32 %v2993, 16
      %v3026 = vor.u32 %v3024, %v3022
      %v3028 = vshll.u32 %v2994, 16
      %v3030 = vrot.slane %v3028, 1
      %v3031 = vsel %vm612, %v3026, %v3030
      %v3032 = vshrl.u32 %v2994, 16
      %v3034 = vor.u32 %v3032, %v3030
      %v3036 = vshll.u32 %v2995, 16
      %v3038 = vrot.slane %v3036, 1
      %v3039 = vsel %vm612, %v3034, %v3038
      %v3040 = vshrl.u32 %v2995, 16
      %v3042 = vor.u32 %v3040, %v3038
      %v3044 = vshll.u32 %v2996, 16
      %v3046 = vrot.slane %v3044, 1
      %v3047 = vsel %vm612, %v3042, %v3046
      %v3048 = vshrl.u32 %v2996, 16
      %v3050 = vor.u32 %v3048, %v3046
      %v3052 = vshll.u32 %v2997, 16
      %v3054 = vrot.slane %v3052, 1
      %v3055 = vsel %vm612, %v3050, %v3054
      %v3056 = vshrl.u32 %v2997, 16
      %v3058 = vor.u32 %v3056, %v3054
      %v3060 = vshll.u32 %v2998, 16
      %v3062 = vrot.slane %v3060, 1
      %v3063 = vsel %vm612, %v3058, %v3062
      %v3064 = vshrl.u32 %v2998, 16
      %v3066 = vor.u32 %v3064, %v3062
      %v3068 = vshll.u32 %v2999, 16
      %v3070 = vrot.slane %v3068, 1
      %v3071 = vsel %vm612, %v3066, %v3070
      %v3072 = vshrl.u32 %v2999, 16
      %v3074 = vor.u32 %v3072, %v3070
      %v3076 = vshll.u32 %v3000, 16
      %v3078 = vrot.slane %v3076, 1
      %v3079 = vsel %vm612, %v3074, %v3078
      %v3080 = vshrl.u32 %v3000, 16
      %v3082 = vor.u32 %v3080, %v3078
      %v3084 = vshll.u32 %v3001, 16
      %v3086 = vrot.slane %v3084, 1
      %v3087 = vsel %vm612, %v3082, %v3086
      %v3088 = vshrl.u32 %v3001, 16
      %v3090 = vor.u32 %v3088, %v3086
      %v3092 = vshll.u32 %v3002, 16
      %v3094 = vrot.slane %v3092, 1
      %v3095 = vsel %vm612, %v3090, %v3094
      %v3096 = vshrl.u32 %v3002, 16
      %v3098 = vor.u32 %v3096, %v3094
      %v3100 = vshll.u32 %v3003, 16
      %v3102 = vrot.slane %v3100, 1
      %v3103 = vsel %vm612, %v3098, %v3102
      %v3112 = vunpack.c.l.b16 %v2933
      %v3113 = vunpack.c.l.b16 %v2934
      %v3114 = vunpack.c.l.b16 %v2935
      %v3115 = vunpack.c.l.b16 %v2936
      %v3116 = vunpack.c.l.b16 %v2937
      %v3117 = vunpack.c.l.b16 %v2938
      %v3118 = vunpack.c.l.b16 %v2939
      %v3119 = vunpack.c.l.b16 %v2940
      %v3120 = vpack.c.b16 %v3113, %v3112
      %v3121 = vpack.c.b16 %v3115, %v3114
      %v3122 = vpack.c.b16 %v3117, %v3116
      %v3123 = vpack.c.b16 %v3119, %v3118
      %v3129 = vsel %vm325, %v3015, 0
      %v3132 = vsel %vm325, %v3023, 0
      %v3135 = vsel %vm325, %v3031, 0
      %v3138 = vsel %vm325, %v3039, 0
      %v3141 = vsel %vm325, %v3047, 0
      %v3144 = vsel %vm325, %v3055, 0
      %v3147 = vsel %vm325, %v3063, 0
      %v3150 = vsel %vm325, %v3071, 0
      %v3153 = vsel %vm325, %v3079, 0
      %v3156 = vsel %vm325, %v3087, 0
      %v3159 = vsel %vm325, %v3095, 0
      %v3162 = vsel %vm325, %v3103, 0
      %3164 = vmatprep.subr.bf16.mxu0 0
      %3165 = vmatpush1.bf16.msra.mxu0 %v3120
      %3166 = vmatprep.subr.bf16.mxu0 0
      %3167 = vmatpush1.bf16.msra.mxu0 %v3121
      %3168 = vmatprep.subr.bf16.mxu0 0
      %3169 = vmatpush1.bf16.msra.mxu0 %v3122
      %3170 = vmatprep.subr.bf16.mxu0 0
      %3171 = vmatpush1.bf16.msra.mxu0 %v3123
      %3172 = vmatprep.subr.bf16.mxu0 0
      %3173 = vmatpush1.bf16.msra.mxu0 0
      %3174 = vmatprep.subr.bf16.mxu0 0
      %3175 = vmatpush1.bf16.msra.mxu0 0
      %3176 = vmatprep.subr.bf16.mxu0 0
      %3177 = vmatpush1.bf16.msra.mxu0 0
      %3178 = vmatprep.subr.bf16.mxu0 0
      %3179 = vmatpush1.bf16.msra.mxu0 0
      %3180 = vmatprep.subr.bf16.mxu0 0
      %3181 = vmatpush1.bf16.msra.mxu0 0
      %3182 = vmatprep.subr.bf16.mxu0 0
      %3183 = vmatpush1.bf16.msra.mxu0 0
      %3184 = vmatprep.subr.bf16.mxu0 0
      %3185 = vmatpush1.bf16.msra.mxu0 0
      %3186 = vmatprep.subr.bf16.mxu0 0
      %3187 = vmatpush1.bf16.msra.mxu0 0
      %3188 = vmatprep.subr.bf16.mxu0 0
      %3189 = vmatpush1.bf16.msra.mxu0 0
      %3190 = vmatprep.subr.bf16.mxu0 0
      %3191 = vmatpush1.bf16.msra.mxu0 0
      %3192 = vmatprep.subr.bf16.mxu0 0
      %3193 = vmatpush1.bf16.msra.mxu0 0
      %3194 = vmatprep.subr.bf16.mxu0 0
      %3195 = vmatpush1.bf16.msra.mxu0 0
      %3196 = vmatprep.mubr.bf16.mxu0 0
      %3197 = vmatmul.mubr.bf16.gmra.mrb[0].mxu0 %v3129
      %v3198 = vpop.f32.mrb[0].mxu0
      %v3199 = vadd.f32 0.0, %v3198
      %v3200 = vpop.f32.mrb[0].mxu0
      %v3201 = vpop.f32.mrb[0].mxu0
      %v3202 = vadd.f32 0.0, %v3201
      %v3203 = vpop.f32.mrb[0].mxu0
      %3204 = vmatprep.mubr.bf16.mxu0 0
      %3205 = vmatmul.mubr.bf16.gmra.mrb[0].mxu0 %v3132
      %v3206 = vpop.f32.mrb[0].mxu0
      %v3207 = vadd.f32 0.0, %v3206
      %v3208 = vpop.f32.mrb[0].mxu0
      %v3209 = vpop.f32.mrb[0].mxu0
      %v3210 = vadd.f32 0.0, %v3209
      %v3211 = vpop.f32.mrb[0].mxu0
      %3212 = vmatprep.mubr.bf16.mxu0 0
      %3213 = vmatmul.mubr.bf16.gmra.mrb[0].mxu0 %v3135
      %v3214 = vpop.f32.mrb[0].mxu0
      %v3215 = vadd.f32 0.0, %v3214
      %v3216 = vpop.f32.mrb[0].mxu0
      %v3217 = vpop.f32.mrb[0].mxu0
      %v3218 = vadd.f32 0.0, %v3217
      %v3219 = vpop.f32.mrb[0].mxu0
      %3220 = vmatprep.mubr.bf16.mxu0 0
      %3221 = vmatmul.mubr.bf16.gmra.mrb[0].mxu0 %v3138
      %v3222 = vpop.f32.mrb[0].mxu0
      %v3223 = vadd.f32 0.0, %v3222
      %v3224 = vpop.f32.mrb[0].mxu0
      %v3225 = vpop.f32.mrb[0].mxu0
      %v3226 = vadd.f32 0.0, %v3225
      %v3227 = vpop.f32.mrb[0].mxu0
      %3228 = vmatprep.mubr.bf16.mxu0 0
      %3229 = vmatmul.mubr.bf16.gmra.mrb[0].mxu0 %v3141
      %v3230 = vpop.f32.mrb[0].mxu0
      %v3231 = vadd.f32 0.0, %v3230
      %v3232 = vpop.f32.mrb[0].mxu0
      %v3233 = vpop.f32.mrb[0].mxu0
      %v3234 = vadd.f32 0.0, %v3233
      %v3235 = vpop.f32.mrb[0].mxu0
      %3236 = vmatprep.mubr.bf16.mxu0 0
      %3237 = vmatmul.mubr.bf16.gmra.mrb[0].mxu0 %v3144
      %v3238 = vpop.f32.mrb[0].mxu0
      %v3239 = vadd.f32 0.0, %v3238
      %v3240 = vpop.f32.mrb[0].mxu0
      %v3241 = vpop.f32.mrb[0].mxu0
      %v3242 = vadd.f32 0.0, %v3241
      %v3243 = vpop.f32.mrb[0].mxu0
      %3244 = vmatprep.mubr.bf16.mxu0 0
      %3245 = vmatmul.mubr.bf16.gmra.mrb[0].mxu0 %v3147
      %v3246 = vpop.f32.mrb[0].mxu0
      %v3247 = vadd.f32 0.0, %v3246
      %v3248 = vpop.f32.mrb[0].mxu0
      %v3249 = vpop.f32.mrb[0].mxu0
      %v3250 = vadd.f32 0.0, %v3249
      %v3251 = vpop.f32.mrb[0].mxu0
      %3252 = vmatprep.mubr.bf16.mxu0 0
      %3253 = vmatmul.mubr.bf16.gmra.mrb[0].mxu0 %v3150
      %v3254 = vpop.f32.mrb[0].mxu0
      %v3255 = vadd.f32 0.0, %v3254
      %v3256 = vpop.f32.mrb[0].mxu0
      %v3257 = vpop.f32.mrb[0].mxu0
      %v3258 = vadd.f32 0.0, %v3257
      %v3259 = vpop.f32.mrb[0].mxu0
      %3260 = vmatprep.mubr.bf16.mxu0 0
      %3261 = vmatmul.mubr.bf16.gmra.mrb[0].mxu0 %v3153
      %v3262 = vpop.f32.mrb[0].mxu0
      %v3263 = vadd.f32 0.0, %v3262
      %v3264 = vpop.f32.mrb[0].mxu0
      %v3265 = vpop.f32.mrb[0].mxu0
      %v3266 = vadd.f32 0.0, %v3265
      %v3267 = vpop.f32.mrb[0].mxu0
      %3268 = vmatprep.mubr.bf16.mxu0 0
      %3269 = vmatmul.mubr.bf16.gmra.mrb[0].mxu0 %v3156
      %v3270 = vpop.f32.mrb[0].mxu0
      %v3271 = vadd.f32 0.0, %v3270
      %v3272 = vpop.f32.mrb[0].mxu0
      %v3273 = vpop.f32.mrb[0].mxu0
      %v3274 = vadd.f32 0.0, %v3273
      %v3275 = vpop.f32.mrb[0].mxu0
      %3276 = vmatprep.mubr.bf16.mxu0 0
      %3277 = vmatmul.mubr.bf16.gmra.mrb[0].mxu0 %v3159
      %v3278 = vpop.f32.mrb[0].mxu0
      %v3279 = vadd.f32 0.0, %v3278
      %v3280 = vpop.f32.mrb[0].mxu0
      %v3281 = vpop.f32.mrb[0].mxu0
      %v3282 = vadd.f32 0.0, %v3281
      %v3283 = vpop.f32.mrb[0].mxu0
      %3284 = vmatprep.mubr.bf16.mxu0 0
      %3285 = vmatmul.mubr.bf16.gmra.mrb[0].mxu0 %v3162
      %v3286 = vpop.f32.mrb[0].mxu0
      %v3287 = vadd.f32 0.0, %v3286
      %v3288 = vpop.f32.mrb[0].mxu0
      %v3289 = vpop.f32.mrb[0].mxu0
      %v3290 = vadd.f32 0.0, %v3289
      %v3291 = vpop.f32.mrb[0].mxu0
      %3292 = vdwg.mxu0
      %v3293 = vld [vmem:[#allocation2] sm:$0xff]
      %v3294 = vld [vmem:[#allocation2 + $0x8] sm:$0xff]
      %v3295 = vld [vmem:[#allocation2 + $0x10] sm:$0xff]
      %v3296 = vld [vmem:[#allocation2 + $0x18] sm:$0xff]
      %v3297 = vld [vmem:[#allocation2 + $0x20] sm:$0xff]
      %v3298 = vld [vmem:[#allocation2 + $0x28] sm:$0xff]
      %v3299 = vld [vmem:[#allocation2 + $0x30] sm:$0xff]
      %v3300 = vld [vmem:[#allocation2 + $0x38] sm:$0xff]
      %v3301 = vld [vmem:[#allocation2 + $0x40] sm:$0xff]
      %v3302 = vld [vmem:[#allocation2 + $0x48] sm:$0xff]
      %v3303 = vld [vmem:[#allocation2 + $0x50] sm:$0xff]
      %v3304 = vld [vmem:[#allocation2 + $0x58] sm:$0xff]
      %v3305 = vld [vmem:[#allocation2 + $0x60] sm:$0xff]
      %v3306 = vld [vmem:[#allocation2 + $0x68] sm:$0xff]
      %v3307 = vld [vmem:[#allocation2 + $0x70] sm:$0xff]
      %v3308 = vld [vmem:[#allocation2 + $0x78] sm:$0xff]
      %v3309 = vld [vmem:[#allocation2 + $0x80] sm:$0xff]
      %v3310 = vld [vmem:[#allocation2 + $0x88] sm:$0xff]
      %v3311 = vld [vmem:[#allocation2 + $0x90] sm:$0xff]
      %v3312 = vld [vmem:[#allocation2 + $0x98] sm:$0xff]
      %v3313 = vld [vmem:[#allocation2 + $0xa0] sm:$0xff]
      %v3314 = vld [vmem:[#allocation2 + $0xa8] sm:$0xff]
      %v3315 = vld [vmem:[#allocation2 + $0xb0] sm:$0xff]
      %v3316 = vld [vmem:[#allocation2 + $0xb8] sm:$0xff]
      %v3317 = vadd.f32 %v3293, %v3199
      %v3318 = vadd.f32 %v3294, %v3202
      %v3319 = vadd.f32 %v3295, %v3207
      %v3320 = vadd.f32 %v3296, %v3210
      %v3321 = vadd.f32 %v3297, %v3215
      %v3322 = vadd.f32 %v3298, %v3218
      %v3323 = vadd.f32 %v3299, %v3223
      %v3324 = vadd.f32 %v3300, %v3226
      %v3325 = vadd.f32 %v3301, %v3231
      %v3326 = vadd.f32 %v3302, %v3234
      %v3327 = vadd.f32 %v3303, %v3239
      %v3328 = vadd.f32 %v3304, %v3242
      %v3329 = vadd.f32 %v3305, %v3247
      %v3330 = vadd.f32 %v3306, %v3250
      %v3331 = vadd.f32 %v3307, %v3255
      %v3332 = vadd.f32 %v3308, %v3258
      %v3333 = vadd.f32 %v3309, %v3263
      %v3334 = vadd.f32 %v3310, %v3266
      %v3335 = vadd.f32 %v3311, %v3271
      %v3336 = vadd.f32 %v3312, %v3274
      %v3337 = vadd.f32 %v3313, %v3279
      %v3338 = vadd.f32 %v3314, %v3282
      %v3339 = vadd.f32 %v3315, %v3287
      %v3340 = vadd.f32 %v3316, %v3290
      %3341 = vst.msk [vmem:[#allocation2] sm:$0xff] %vm325, %v3317
      %3342 = vst.msk [vmem:[#allocation2 + $0x8] sm:$0xff] %vm325, %v3318
      %3343 = vst.msk [vmem:[#allocation2 + $0x10] sm:$0xff] %vm325, %v3319
      %3344 = vst.msk [vmem:[#allocation2 + $0x18] sm:$0xff] %vm325, %v3320
      %3345 = vst.msk [vmem:[#allocation2 + $0x20] sm:$0xff] %vm325, %v3321
      %3346 = vst.msk [vmem:[#allocation2 + $0x28] sm:$0xff] %vm325, %v3322
      %3347 = vst.msk [vmem:[#allocation2 + $0x30] sm:$0xff] %vm325, %v3323
      %3348 = vst.msk [vmem:[#allocation2 + $0x38] sm:$0xff] %vm325, %v3324
      %3349 = vst.msk [vmem:[#allocation2 + $0x40] sm:$0xff] %vm325, %v3325
      %3350 = vst.msk [vmem:[#allocation2 + $0x48] sm:$0xff] %vm325, %v3326
      %3351 = vst.msk [vmem:[#allocation2 + $0x50] sm:$0xff] %vm325, %v3327
      %3352 = vst.msk [vmem:[#allocation2 + $0x58] sm:$0xff] %vm325, %v3328
      %3353 = vst.msk [vmem:[#allocation2 + $0x60] sm:$0xff] %vm325, %v3329
      %3354 = vst.msk [vmem:[#allocation2 + $0x68] sm:$0xff] %vm325, %v3330
      %3355 = vst.msk [vmem:[#allocation2 + $0x70] sm:$0xff] %vm325, %v3331
      %3356 = vst.msk [vmem:[#allocation2 + $0x78] sm:$0xff] %vm325, %v3332
      %3357 = vst.msk [vmem:[#allocation2 + $0x80] sm:$0xff] %vm325, %v3333
      %3358 = vst.msk [vmem:[#allocation2 + $0x88] sm:$0xff] %vm325, %v3334
      %3359 = vst.msk [vmem:[#allocation2 + $0x90] sm:$0xff] %vm325, %v3335
      %3360 = vst.msk [vmem:[#allocation2 + $0x98] sm:$0xff] %vm325, %v3336
      %3361 = vst.msk [vmem:[#allocation2 + $0xa0] sm:$0xff] %vm325, %v3337
      %3362 = vst.msk [vmem:[#allocation2 + $0xa8] sm:$0xff] %vm325, %v3338
      %3363 = vst.msk [vmem:[#allocation2 + $0xb0] sm:$0xff] %vm325, %v3339
      %3364 = vst.msk [vmem:[#allocation2 + $0xb8] sm:$0xff] %vm325, %v3340
      %v3365 = vld [vmem:[%s197 + $0x18] sm:$0xe]
      %v3366 = vld [vmem:[%s197 + $0x1c] sm:$0xf]
      %v3367 = vld [vmem:[%s197 + $0x20] sm:$0xf]
      %v3368 = vld [vmem:[%s197 + $0x24] sm:$0xf]
      %v3369 = vld [vmem:[%s197 + $0x28] sm:$0xf]
      %v3370 = vld [vmem:[%s197 + $0x2c] sm:$0xf]
      %v3371 = vld [vmem:[%s197 + $0x30] sm:$0xf]
      %v3372 = vld [vmem:[%s197 + $0x34] sm:$0xf]
      %v3373 = vld [vmem:[%s197 + $0x38] sm:$0xf]
      %v3374 = vld [vmem:[%s197 + $0x3c] sm:$0xf]
      %v3375 = vld [vmem:[%s197 + $0x40] sm:$0xf]
      %v3376 = vld [vmem:[%s197 + $0x44] sm:$0xf]
      %v3377 = vld [vmem:[%s197 + $0x48] sm:$0xf]
      %v3378 = vld [vmem:[%s197 + $0x4c] sm:$0xf]
      %v3379 = vld [vmem:[%s197 + $0x50] sm:$0xf]
      %v3380 = vld [vmem:[%s197 + $0x54] sm:$0xf]
      %v3381 = vld [vmem:[%s197 + $0x58] sm:$0xf]
      %v3382 = vld [vmem:[%s197 + $0x5c] sm:$0xf]
      %v3383 = vld [vmem:[%s197 + $0x60] sm:$0xf]
      %v3384 = vld [vmem:[%s197 + $0x64] sm:$0xf]
      %v3385 = vld [vmem:[%s197 + $0x68] sm:$0xf]
      %v3386 = vld [vmem:[%s197 + $0x6c] sm:$0xf]
      %v3387 = vld [vmem:[%s197 + $0x70] sm:$0xf]
      %v3388 = vld [vmem:[%s197 + $0x74] sm:$0xf]
      %v3389 = vld [vmem:[%s197 + $0x78] sm:$0x1]
      %s3390 = scalar_lea.vmem %s1, 256
      %v3391 = vld [vmem:[%s3390] sm:$0xf]
      %v3392 = vld [vmem:[%s3390 + $0x4] sm:$0xf]
      %v3393 = vld [vmem:[%s3390 + $0x8] sm:$0xf]
      %v3394 = vld [vmem:[%s3390 + $0xc] sm:$0xf]
      %v3395 = vld [vmem:[%s3390 + $0x10] sm:$0xf]
      %v3396 = vld [vmem:[%s3390 + $0x14] sm:$0xf]
      %v3397 = vld [vmem:[%s3390 + $0x18] sm:$0xf]
      %v3398 = vld [vmem:[%s3390 + $0x1c] sm:$0xf]
      %v3424 = vunpack.c.l.b16 %v3365
      %v3425 = vunpack.c.l.b16 %v3366
      %v3426 = vunpack.c.l.b16 %v3367
      %v3427 = vunpack.c.l.b16 %v3368
      %v3428 = vunpack.c.l.b16 %v3369
      %v3429 = vunpack.c.l.b16 %v3370
      %v3430 = vunpack.c.l.b16 %v3371
      %v3431 = vunpack.c.l.b16 %v3372
      %v3432 = vunpack.c.l.b16 %v3373
      %v3433 = vunpack.c.l.b16 %v3374
      %v3434 = vunpack.c.l.b16 %v3375
      %v3435 = vunpack.c.l.b16 %v3376
      %v3436 = vunpack.c.l.b16 %v3377
      %v3437 = vunpack.c.l.b16 %v3378
      %v3438 = vunpack.c.l.b16 %v3379
      %v3439 = vunpack.c.l.b16 %v3380
      %v3440 = vunpack.c.l.b16 %v3381
      %v3441 = vunpack.c.l.b16 %v3382
      %v3442 = vunpack.c.l.b16 %v3383
      %v3443 = vunpack.c.l.b16 %v3384
      %v3444 = vunpack.c.l.b16 %v3385
      %v3445 = vunpack.c.l.b16 %v3386
      %v3446 = vunpack.c.l.b16 %v3387
      %v3447 = vunpack.c.l.b16 %v3388
      %v3448 = vunpack.c.l.b16 %v3389
      %v3449 = vpack.c.b16 %v3425, %v3424
      %v3450 = vpack.c.b16 %v3427, %v3426
      %v3451 = vpack.c.b16 %v3429, %v3428
      %v3452 = vpack.c.b16 %v3431, %v3430
      %v3453 = vpack.c.b16 %v3433, %v3432
      %v3454 = vpack.c.b16 %v3435, %v3434
      %v3455 = vpack.c.b16 %v3437, %v3436
      %v3456 = vpack.c.b16 %v3439, %v3438
      %v3457 = vpack.c.b16 %v3441, %v3440
      %v3458 = vpack.c.b16 %v3443, %v3442
      %v3459 = vpack.c.b16 %v3445, %v3444
      %v3460 = vpack.c.b16 %v3447, %v3446
      %v3461 = vpack.c.b16 %v3448, %v3448
      %v3462 = vrot.slane %v3449, 1
      %v3463 = vrot.slane %v3450, 1
      %v3464 = vsel %vm1071, %v3462, %v3463
      %v3465 = vrot.slane %v3451, 1
      %v3466 = vsel %vm1071, %v3463, %v3465
      %v3467 = vrot.slane %v3452, 1
      %v3468 = vsel %vm1071, %v3465, %v3467
      %v3469 = vrot.slane %v3453, 1
      %v3470 = vsel %vm1071, %v3467, %v3469
      %v3471 = vrot.slane %v3454, 1
      %v3472 = vsel %vm1071, %v3469, %v3471
      %v3473 = vrot.slane %v3455, 1
      %v3474 = vsel %vm1071, %v3471, %v3473
      %v3475 = vrot.slane %v3456, 1
      %v3476 = vsel %vm1071, %v3473, %v3475
      %v3477 = vrot.slane %v3457, 1
      %v3478 = vsel %vm1071, %v3475, %v3477
      %v3479 = vrot.slane %v3458, 1
      %v3480 = vsel %vm1071, %v3477, %v3479
      %v3481 = vrot.slane %v3459, 1
      %v3482 = vsel %vm1071, %v3479, %v3481
      %v3483 = vrot.slane %v3460, 1
      %v3484 = vsel %vm1071, %v3481, %v3483
      %v3485 = vrot.slane %v3461, 1
      %v3486 = vsel %vm1071, %v3483, %v3485
      %v3495 = vunpack.c.l.b16 %v3391
      %v3496 = vunpack.c.l.b16 %v3392
      %v3497 = vunpack.c.l.b16 %v3393
      %v3498 = vunpack.c.l.b16 %v3394
      %v3499 = vunpack.c.l.b16 %v3395
      %v3500 = vunpack.c.l.b16 %v3396
      %v3501 = vunpack.c.l.b16 %v3397
      %v3502 = vunpack.c.l.b16 %v3398
      %v3503 = vpack.c.b16 %v3496, %v3495
      %v3504 = vpack.c.b16 %v3498, %v3497
      %v3505 = vpack.c.b16 %v3500, %v3499
      %v3506 = vpack.c.b16 %v3502, %v3501
      %v3512 = vsel %vm325, %v3464, 0
      %v3515 = vsel %vm325, %v3466, 0
      %v3518 = vsel %vm325, %v3468, 0
      %v3521 = vsel %vm325, %v3470, 0
      %v3524 = vsel %vm325, %v3472, 0
      %v3527 = vsel %vm325, %v3474, 0
      %v3530 = vsel %vm325, %v3476, 0
      %v3533 = vsel %vm325, %v3478, 0
      %v3536 = vsel %vm325, %v3480, 0
      %v3539 = vsel %vm325, %v3482, 0
      %v3542 = vsel %vm325, %v3484, 0
      %v3545 = vsel %vm325, %v3486, 0
      %3547 = vmatprep.subr.bf16.mxu0 0
      %3548 = vmatpush1.bf16.msra.mxu0 %v3503
      %3549 = vmatprep.subr.bf16.mxu0 0
      %3550 = vmatpush1.bf16.msra.mxu0 %v3504
      %3551 = vmatprep.subr.bf16.mxu0 0
      %3552 = vmatpush1.bf16.msra.mxu0 %v3505
      %3553 = vmatprep.subr.bf16.mxu0 0
      %3554 = vmatpush1.bf16.msra.mxu0 %v3506
      %3555 = vmatprep.subr.bf16.mxu0 0
      %3556 = vmatpush1.bf16.msra.mxu0 0
      %3557 = vmatprep.subr.bf16.mxu0 0
      %3558 = vmatpush1.bf16.msra.mxu0 0
      %3559 = vmatprep.subr.bf16.mxu0 0
      %3560 = vmatpush1.bf16.msra.mxu0 0
      %3561 = vmatprep.subr.bf16.mxu0 0
      %3562 = vmatpush1.bf16.msra.mxu0 0
      %3563 = vmatprep.subr.bf16.mxu0 0
      %3564 = vmatpush1.bf16.msra.mxu0 0
      %3565 = vmatprep.subr.bf16.mxu0 0
      %3566 = vmatpush1.bf16.msra.mxu0 0
      %3567 = vmatprep.subr.bf16.mxu0 0
      %3568 = vmatpush1.bf16.msra.mxu0 0
      %3569 = vmatprep.subr.bf16.mxu0 0
      %3570 = vmatpush1.bf16.msra.mxu0 0
      %3571 = vmatprep.subr.bf16.mxu0 0
      %3572 = vmatpush1.bf16.msra.mxu0 0
      %3573 = vmatprep.subr.bf16.mxu0 0
      %3574 = vmatpush1.bf16.msra.mxu0 0
      %3575 = vmatprep.subr.bf16.mxu0 0
      %3576 = vmatpush1.bf16.msra.mxu0 0
      %3577 = vmatprep.subr.bf16.mxu0 0
      %3578 = vmatpush1.bf16.msra.mxu0 0
      %3579 = vmatprep.mubr.bf16.mxu0 0
      %3580 = vmatmul.mubr.bf16.gmra.mrb[0].mxu0 %v3512
      %v3581 = vpop.f32.mrb[0].mxu0
      %v3582 = vadd.f32 0.0, %v3581
      %v3583 = vpop.f32.mrb[0].mxu0
      %v3584 = vpop.f32.mrb[0].mxu0
      %v3585 = vadd.f32 0.0, %v3584
      %v3586 = vpop.f32.mrb[0].mxu0
      %3587 = vmatprep.mubr.bf16.mxu0 0
      %3588 = vmatmul.mubr.bf16.gmra.mrb[0].mxu0 %v3515
      %v3589 = vpop.f32.mrb[0].mxu0
      %v3590 = vadd.f32 0.0, %v3589
      %v3591 = vpop.f32.mrb[0].mxu0
      %v3592 = vpop.f32.mrb[0].mxu0
      %v3593 = vadd.f32 0.0, %v3592
      %v3594 = vpop.f32.mrb[0].mxu0
      %3595 = vmatprep.mubr.bf16.mxu0 0
      %3596 = vmatmul.mubr.bf16.gmra.mrb[0].mxu0 %v3518
      %v3597 = vpop.f32.mrb[0].mxu0
      %v3598 = vadd.f32 0.0, %v3597
      %v3599 = vpop.f32.mrb[0].mxu0
      %v3600 = vpop.f32.mrb[0].mxu0
      %v3601 = vadd.f32 0.0, %v3600
      %v3602 = vpop.f32.mrb[0].mxu0
      %3603 = vmatprep.mubr.bf16.mxu0 0
      %3604 = vmatmul.mubr.bf16.gmra.mrb[0].mxu0 %v3521
      %v3605 = vpop.f32.mrb[0].mxu0
      %v3606 = vadd.f32 0.0, %v3605
      %v3607 = vpop.f32.mrb[0].mxu0
      %v3608 = vpop.f32.mrb[0].mxu0
      %v3609 = vadd.f32 0.0, %v3608
      %v3610 = vpop.f32.mrb[0].mxu0
      %3611 = vmatprep.mubr.bf16.mxu0 0
      %3612 = vmatmul.mubr.bf16.gmra.mrb[0].mxu0 %v3524
      %v3613 = vpop.f32.mrb[0].mxu0
      %v3614 = vadd.f32 0.0, %v3613
      %v3615 = vpop.f32.mrb[0].mxu0
      %v3616 = vpop.f32.mrb[0].mxu0
      %v3617 = vadd.f32 0.0, %v3616
      %v3618 = vpop.f32.mrb[0].mxu0
      %3619 = vmatprep.mubr.bf16.mxu0 0
      %3620 = vmatmul.mubr.bf16.gmra.mrb[0].mxu0 %v3527
      %v3621 = vpop.f32.mrb[0].mxu0
      %v3622 = vadd.f32 0.0, %v3621
      %v3623 = vpop.f32.mrb[0].mxu0
      %v3624 = vpop.f32.mrb[0].mxu0
      %v3625 = vadd.f32 0.0, %v3624
      %v3626 = vpop.f32.mrb[0].mxu0
      %3627 = vmatprep.mubr.bf16.mxu0 0
      %3628 = vmatmul.mubr.bf16.gmra.mrb[0].mxu0 %v3530
      %v3629 = vpop.f32.mrb[0].mxu0
      %v3630 = vadd.f32 0.0, %v3629
      %v3631 = vpop.f32.mrb[0].mxu0
      %v3632 = vpop.f32.mrb[0].mxu0
      %v3633 = vadd.f32 0.0, %v3632
      %v3634 = vpop.f32.mrb[0].mxu0
      %3635 = vmatprep.mubr.bf16.mxu0 0
      %3636 = vmatmul.mubr.bf16.gmra.mrb[0].mxu0 %v3533
      %v3637 = vpop.f32.mrb[0].mxu0
      %v3638 = vadd.f32 0.0, %v3637
      %v3639 = vpop.f32.mrb[0].mxu0
      %v3640 = vpop.f32.mrb[0].mxu0
      %v3641 = vadd.f32 0.0, %v3640
      %v3642 = vpop.f32.mrb[0].mxu0
      %3643 = vmatprep.mubr.bf16.mxu0 0
      %3644 = vmatmul.mubr.bf16.gmra.mrb[0].mxu0 %v3536
      %v3645 = vpop.f32.mrb[0].mxu0
      %v3646 = vadd.f32 0.0, %v3645
      %v3647 = vpop.f32.mrb[0].mxu0
      %v3648 = vpop.f32.mrb[0].mxu0
      %v3649 = vadd.f32 0.0, %v3648
      %v3650 = vpop.f32.mrb[0].mxu0
      %3651 = vmatprep.mubr.bf16.mxu0 0
      %3652 = vmatmul.mubr.bf16.gmra.mrb[0].mxu0 %v3539
      %v3653 = vpop.f32.mrb[0].mxu0
      %v3654 = vadd.f32 0.0, %v3653
      %v3655 = vpop.f32.mrb[0].mxu0
      %v3656 = vpop.f32.mrb[0].mxu0
      %v3657 = vadd.f32 0.0, %v3656
      %v3658 = vpop.f32.mrb[0].mxu0
      %3659 = vmatprep.mubr.bf16.mxu0 0
      %3660 = vmatmul.mubr.bf16.gmra.mrb[0].mxu0 %v3542
      %v3661 = vpop.f32.mrb[0].mxu0
      %v3662 = vadd.f32 0.0, %v3661
      %v3663 = vpop.f32.mrb[0].mxu0
      %v3664 = vpop.f32.mrb[0].mxu0
      %v3665 = vadd.f32 0.0, %v3664
      %v3666 = vpop.f32.mrb[0].mxu0
      %3667 = vmatprep.mubr.bf16.mxu0 0
      %3668 = vmatmul.mubr.bf16.gmra.mrb[0].mxu0 %v3545
      %v3669 = vpop.f32.mrb[0].mxu0
      %v3670 = vadd.f32 0.0, %v3669
      %v3671 = vpop.f32.mrb[0].mxu0
      %v3672 = vpop.f32.mrb[0].mxu0
      %v3673 = vadd.f32 0.0, %v3672
      %v3674 = vpop.f32.mrb[0].mxu0
      %3675 = vdwg.mxu0
      %v3676 = vld [vmem:[#allocation2] sm:$0xff]
      %v3677 = vld [vmem:[#allocation2 + $0x8] sm:$0xff]
      %v3678 = vld [vmem:[#allocation2 + $0x10] sm:$0xff]
      %v3679 = vld [vmem:[#allocation2 + $0x18] sm:$0xff]
      %v3680 = vld [vmem:[#allocation2 + $0x20] sm:$0xff]
      %v3681 = vld [vmem:[#allocation2 + $0x28] sm:$0xff]
      %v3682 = vld [vmem:[#allocation2 + $0x30] sm:$0xff]
      %v3683 = vld [vmem:[#allocation2 + $0x38] sm:$0xff]
      %v3684 = vld [vmem:[#allocation2 + $0x40] sm:$0xff]
      %v3685 = vld [vmem:[#allocation2 + $0x48] sm:$0xff]
      %v3686 = vld [vmem:[#allocation2 + $0x50] sm:$0xff]
      %v3687 = vld [vmem:[#allocation2 + $0x58] sm:$0xff]
      %v3688 = vld [vmem:[#allocation2 + $0x60] sm:$0xff]
      %v3689 = vld [vmem:[#allocation2 + $0x68] sm:$0xff]
      %v3690 = vld [vmem:[#allocation2 + $0x70] sm:$0xff]
      %v3691 = vld [vmem:[#allocation2 + $0x78] sm:$0xff]
      %v3692 = vld [vmem:[#allocation2 + $0x80] sm:$0xff]
      %v3693 = vld [vmem:[#allocation2 + $0x88] sm:$0xff]
      %v3694 = vld [vmem:[#allocation2 + $0x90] sm:$0xff]
      %v3695 = vld [vmem:[#allocation2 + $0x98] sm:$0xff]
      %v3696 = vld [vmem:[#allocation2 + $0xa0] sm:$0xff]
      %v3697 = vld [vmem:[#allocation2 + $0xa8] sm:$0xff]
      %v3698 = vld [vmem:[#allocation2 + $0xb0] sm:$0xff]
      %v3699 = vld [vmem:[#allocation2 + $0xb8] sm:$0xff]
      %v3700 = vadd.f32 %v3676, %v3582
      %v3701 = vadd.f32 %v3677, %v3585
      %v3702 = vadd.f32 %v3678, %v3590
      %v3703 = vadd.f32 %v3679, %v3593
      %v3704 = vadd.f32 %v3680, %v3598
      %v3705 = vadd.f32 %v3681, %v3601
      %v3706 = vadd.f32 %v3682, %v3606
      %v3707 = vadd.f32 %v3683, %v3609
      %v3708 = vadd.f32 %v3684, %v3614
      %v3709 = vadd.f32 %v3685, %v3617
      %v3710 = vadd.f32 %v3686, %v3622
      %v3711 = vadd.f32 %v3687, %v3625
      %v3712 = vadd.f32 %v3688, %v3630
      %v3713 = vadd.f32 %v3689, %v3633
      %v3714 = vadd.f32 %v3690, %v3638
      %v3715 = vadd.f32 %v3691, %v3641
      %v3716 = vadd.f32 %v3692, %v3646
      %v3717 = vadd.f32 %v3693, %v3649
      %v3718 = vadd.f32 %v3694, %v3654
      %v3719 = vadd.f32 %v3695, %v3657
      %v3720 = vadd.f32 %v3696, %v3662
      %v3721 = vadd.f32 %v3697, %v3665
      %v3722 = vadd.f32 %v3698, %v3670
      %v3723 = vadd.f32 %v3699, %v3673
      %3724 = vst.msk [vmem:[#allocation2] sm:$0xff] %vm325, %v3700
      %3725 = vst.msk [vmem:[#allocation2 + $0x8] sm:$0xff] %vm325, %v3701
      %3726 = vst.msk [vmem:[#allocation2 + $0x10] sm:$0xff] %vm325, %v3702
      %3727 = vst.msk [vmem:[#allocation2 + $0x18] sm:$0xff] %vm325, %v3703
      %3728 = vst.msk [vmem:[#allocation2 + $0x20] sm:$0xff] %vm325, %v3704
      %3729 = vst.msk [vmem:[#allocation2 + $0x28] sm:$0xff] %vm325, %v3705
      %3730 = vst.msk [vmem:[#allocation2 + $0x30] sm:$0xff] %vm325, %v3706
      %3731 = vst.msk [vmem:[#allocation2 + $0x38] sm:$0xff] %vm325, %v3707
      %3732 = vst.msk [vmem:[#allocation2 + $0x40] sm:$0xff] %vm325, %v3708
      %3733 = vst.msk [vmem:[#allocation2 + $0x48] sm:$0xff] %vm325, %v3709
      %3734 = vst.msk [vmem:[#allocation2 + $0x50] sm:$0xff] %vm325, %v3710
      %3735 = vst.msk [vmem:[#allocation2 + $0x58] sm:$0xff] %vm325, %v3711
      %3736 = vst.msk [vmem:[#allocation2 + $0x60] sm:$0xff] %vm325, %v3712
      %3737 = vst.msk [vmem:[#allocation2 + $0x68] sm:$0xff] %vm325, %v3713
      %3738 = vst.msk [vmem:[#allocation2 + $0x70] sm:$0xff] %vm325, %v3714
      %3739 = vst.msk [vmem:[#allocation2 + $0x78] sm:$0xff] %vm325, %v3715
      %3740 = vst.msk [vmem:[#allocation2 + $0x80] sm:$0xff] %vm325, %v3716
      %3741 = vst.msk [vmem:[#allocation2 + $0x88] sm:$0xff] %vm325, %v3717
      %3742 = vst.msk [vmem:[#allocation2 + $0x90] sm:$0xff] %vm325, %v3718
      %3743 = vst.msk [vmem:[#allocation2 + $0x98] sm:$0xff] %vm325, %v3719
      %3744 = vst.msk [vmem:[#allocation2 + $0xa0] sm:$0xff] %vm325, %v3720
      %3745 = vst.msk [vmem:[#allocation2 + $0xa8] sm:$0xff] %vm325, %v3721
      %3746 = vst.msk [vmem:[#allocation2 + $0xb0] sm:$0xff] %vm325, %v3722
      %3747 = vst.msk [vmem:[#allocation2 + $0xb8] sm:$0xff] %vm325, %v3723
      %v3748 = vld [vmem:[#allocation2] sm:$0xff]
      %v3749 = vld [vmem:[#allocation2 + $0x8] sm:$0xff]
      %v3750 = vld [vmem:[#allocation2 + $0x10] sm:$0xff]
      %v3751 = vld [vmem:[#allocation2 + $0x18] sm:$0xff]
      %v3752 = vld [vmem:[#allocation2 + $0x20] sm:$0xff]
      %v3753 = vld [vmem:[#allocation2 + $0x28] sm:$0xff]
      %v3754 = vld [vmem:[#allocation2 + $0x30] sm:$0xff]
      %v3755 = vld [vmem:[#allocation2 + $0x38] sm:$0xff]
      %v3756 = vld [vmem:[#allocation2 + $0x40] sm:$0xff]
      %v3757 = vld [vmem:[#allocation2 + $0x48] sm:$0xff]
      %v3758 = vld [vmem:[#allocation2 + $0x50] sm:$0xff]
      %v3759 = vld [vmem:[#allocation2 + $0x58] sm:$0xff]
      %v3760 = vld [vmem:[#allocation2 + $0x60] sm:$0xff]
      %v3761 = vld [vmem:[#allocation2 + $0x68] sm:$0xff]
      %v3762 = vld [vmem:[#allocation2 + $0x70] sm:$0xff]
      %v3763 = vld [vmem:[#allocation2 + $0x78] sm:$0xff]
      %v3764 = vld [vmem:[#allocation2 + $0x80] sm:$0xff]
      %v3765 = vld [vmem:[#allocation2 + $0x88] sm:$0xff]
      %v3766 = vld [vmem:[#allocation2 + $0x90] sm:$0xff]
      %v3767 = vld [vmem:[#allocation2 + $0x98] sm:$0xff]
      %v3768 = vld [vmem:[#allocation2 + $0xa0] sm:$0xff]
      %v3769 = vld [vmem:[#allocation2 + $0xa8] sm:$0xff]
      %v3770 = vld [vmem:[#allocation2 + $0xb0] sm:$0xff]
      %v3771 = vld [vmem:[#allocation2 + $0xb8] sm:$0xff]
      %v3772 = vld [vmem:[%s2] sm:$0x1]
      %v3774 = vlaneseq
      %v3775 = vshrl.u32 %v3774, 7
      %v3776 = vsub.s32 0, %v3775
      %v3777 = vrot.slane %v3772, %v3776
      %v3779 = vadd.f32 %v3748, %v3777
      %v3780 = vadd.f32 %v3749, %v3777
      %v3781 = vadd.f32 %v3750, %v3777
      %v3782 = vadd.f32 %v3751, %v3777
      %v3783 = vadd.f32 %v3752, %v3777
      %v3784 = vadd.f32 %v3753, %v3777
      %v3785 = vadd.f32 %v3754, %v3777
      %v3786 = vadd.f32 %v3755, %v3777
      %v3787 = vadd.f32 %v3756, %v3777
      %v3788 = vadd.f32 %v3757, %v3777
      %v3789 = vadd.f32 %v3758, %v3777
      %v3790 = vadd.f32 %v3759, %v3777
      %v3791 = vadd.f32 %v3760, %v3777
      %v3792 = vadd.f32 %v3761, %v3777
      %v3793 = vadd.f32 %v3762, %v3777
      %v3794 = vadd.f32 %v3763, %v3777
      %v3795 = vadd.f32 %v3764, %v3777
      %v3796 = vadd.f32 %v3765, %v3777
      %v3797 = vadd.f32 %v3766, %v3777
      %v3798 = vadd.f32 %v3767, %v3777
      %v3799 = vadd.f32 %v3768, %v3777
      %v3800 = vadd.f32 %v3769, %v3777
      %v3801 = vadd.f32 %v3770, %v3777
      %v3802 = vadd.f32 %v3771, %v3777
      %v3803 = vmax.f32 %v3779, 0.0
      %v3804 = vmax.f32 %v3780, 0.0
      %v3805 = vmax.f32 %v3781, 0.0
      %v3806 = vmax.f32 %v3782, 0.0
      %v3807 = vmax.f32 %v3783, 0.0
      %v3808 = vmax.f32 %v3784, 0.0
      %v3809 = vmax.f32 %v3785, 0.0
      %v3810 = vmax.f32 %v3786, 0.0
      %v3811 = vmax.f32 %v3787, 0.0
      %v3812 = vmax.f32 %v3788, 0.0
      %v3813 = vmax.f32 %v3789, 0.0
      %v3814 = vmax.f32 %v3790, 0.0
      %v3815 = vmax.f32 %v3791, 0.0
      %v3816 = vmax.f32 %v3792, 0.0
      %v3817 = vmax.f32 %v3793, 0.0
      %v3818 = vmax.f32 %v3794, 0.0
      %v3819 = vmax.f32 %v3795, 0.0
      %v3820 = vmax.f32 %v3796, 0.0
      %v3821 = vmax.f32 %v3797, 0.0
      %v3822 = vmax.f32 %v3798, 0.0
      %v3823 = vmax.f32 %v3799, 0.0
      %v3824 = vmax.f32 %v3800, 0.0
      %v3825 = vmax.f32 %v3801, 0.0
      %v3826 = vmax.f32 %v3802, 0.0
      %v3827 = vpack.c.bf16 %v3804, %v3803
      %v3828 = vpack.c.bf16 %v3806, %v3805
      %v3829 = vpack.c.bf16 %v3808, %v3807
      %v3830 = vpack.c.bf16 %v3810, %v3809
      %v3831 = vpack.c.bf16 %v3812, %v3811
      %v3832 = vpack.c.bf16 %v3814, %v3813
      %v3833 = vpack.c.bf16 %v3816, %v3815
      %v3834 = vpack.c.bf16 %v3818, %v3817
      %v3835 = vpack.c.bf16 %v3820, %v3819
      %v3836 = vpack.c.bf16 %v3822, %v3821
      %v3837 = vpack.c.bf16 %v3824, %v3823
      %v3838 = vpack.c.bf16 %v3826, %v3825
      %v3851 = vunpack.c.l.b16 %v3827
      %v3852 = vunpack.c.h.b16 %v3827
      %v3853 = vunpack.c.l.b16 %v3828
      %v3854 = vunpack.c.h.b16 %v3828
      %v3855 = vunpack.c.l.b16 %v3829
      %v3856 = vunpack.c.h.b16 %v3829
      %v3857 = vunpack.c.l.b16 %v3830
      %v3858 = vunpack.c.h.b16 %v3830
      %v3859 = vunpack.c.l.b16 %v3831
      %v3860 = vunpack.c.h.b16 %v3831
      %v3861 = vunpack.c.l.b16 %v3832
      %v3862 = vunpack.c.h.b16 %v3832
      %v3863 = vunpack.c.l.b16 %v3833
      %v3864 = vunpack.c.h.b16 %v3833
      %v3865 = vunpack.c.l.b16 %v3834
      %v3866 = vunpack.c.h.b16 %v3834
      %v3867 = vunpack.c.l.b16 %v3835
      %v3868 = vunpack.c.h.b16 %v3835
      %v3869 = vunpack.c.l.b16 %v3836
      %v3870 = vunpack.c.h.b16 %v3836
      %v3871 = vunpack.c.l.b16 %v3837
      %v3872 = vunpack.c.h.b16 %v3837
      %v3873 = vunpack.c.l.b16 %v3838
      %v3874 = vunpack.c.h.b16 %v3838
      %v3875 = vpack.c.b16 %v3851, %v3851
      %v3876 = vpack.c.b16 %v3852, %v3852
      %v3877 = vpack.c.b16 %v3853, %v3853
      %v3878 = vpack.c.b16 %v3854, %v3854
      %v3879 = vpack.c.b16 %v3855, %v3855
      %v3880 = vpack.c.b16 %v3856, %v3856
      %v3881 = vpack.c.b16 %v3857, %v3857
      %v3882 = vpack.c.b16 %v3858, %v3858
      %v3883 = vpack.c.b16 %v3859, %v3859
      %v3884 = vpack.c.b16 %v3860, %v3860
      %v3885 = vpack.c.b16 %v3861, %v3861
      %v3886 = vpack.c.b16 %v3862, %v3862
      %v3887 = vpack.c.b16 %v3863, %v3863
      %v3888 = vpack.c.b16 %v3864, %v3864
      %v3889 = vpack.c.b16 %v3865, %v3865
      %v3890 = vpack.c.b16 %v3866, %v3866
      %v3891 = vpack.c.b16 %v3867, %v3867
      %v3892 = vpack.c.b16 %v3868, %v3868
      %v3893 = vpack.c.b16 %v3869, %v3869
      %v3894 = vpack.c.b16 %v3870, %v3870
      %v3895 = vpack.c.b16 %v3871, %v3871
      %v3896 = vpack.c.b16 %v3872, %v3872
      %v3897 = vpack.c.b16 %v3873, %v3873
      %v3898 = vpack.c.b16 %v3874, %v3874
      %vm3923 = vcmask 519168
      %3924 = vst.msk [vmem:[%s206] sm:$0xf] %vm3923, %v3875
      %3925 = vst.msk [vmem:[%s206 + $0x4] sm:$0xf] %vm3923, %v3876
      %3926 = vst.msk [vmem:[%s206 + $0x8] sm:$0xf] %vm3923, %v3877
      %3927 = vst.msk [vmem:[%s206 + $0xc] sm:$0xf] %vm3923, %v3878
      %3928 = vst.msk [vmem:[%s206 + $0x10] sm:$0xf] %vm3923, %v3879
      %3929 = vst.msk [vmem:[%s206 + $0x14] sm:$0xf] %vm3923, %v3880
      %3930 = vst.msk [vmem:[%s206 + $0x18] sm:$0xf] %vm3923, %v3881
      %3931 = vst.msk [vmem:[%s206 + $0x1c] sm:$0xf] %vm3923, %v3882
      %3932 = vst.msk [vmem:[%s206 + $0x20] sm:$0xf] %vm3923, %v3883
      %3933 = vst.msk [vmem:[%s206 + $0x24] sm:$0xf] %vm3923, %v3884
      %3934 = vst.msk [vmem:[%s206 + $0x28] sm:$0xf] %vm3923, %v3885
      %3935 = vst.msk [vmem:[%s206 + $0x2c] sm:$0xf] %vm3923, %v3886
      %3936 = vst.msk [vmem:[%s206 + $0x30] sm:$0xf] %vm3923, %v3887
      %3937 = vst.msk [vmem:[%s206 + $0x34] sm:$0xf] %vm3923, %v3888
      %3938 = vst.msk [vmem:[%s206 + $0x38] sm:$0xf] %vm3923, %v3889
      %3939 = vst.msk [vmem:[%s206 + $0x3c] sm:$0xf] %vm3923, %v3890
      %3940 = vst.msk [vmem:[%s206 + $0x40] sm:$0xf] %vm3923, %v3891
      %3941 = vst.msk [vmem:[%s206 + $0x44] sm:$0xf] %vm3923, %v3892
      %3942 = vst.msk [vmem:[%s206 + $0x48] sm:$0xf] %vm3923, %v3893
      %3943 = vst.msk [vmem:[%s206 + $0x4c] sm:$0xf] %vm3923, %v3894
      %3944 = vst.msk [vmem:[%s206 + $0x50] sm:$0xf] %vm3923, %v3895
      %3945 = vst.msk [vmem:[%s206 + $0x54] sm:$0xf] %vm3923, %v3896
      %3946 = vst.msk [vmem:[%s206 + $0x58] sm:$0xf] %vm3923, %v3897
      %3947 = vst.msk [vmem:[%s206 + $0x5c] sm:$0xf] %vm3923, %v3898
      %s3948 = smul.u32 24, %s19
      %p3949 = scmp.lt.s32.totalorder %s18, 0
      %s3950 = scalar_select %p3949, %s18, 0
      %p3951 = scmp.lt.s32.totalorder %s3948, 95
      %s3952 = scalar_select %p3951, %s3948, 95
      %s3953 = smul.addr %s3950, 96
      %s3954 = sadd.s32 %s3952, %s3953
      %s3955 = smul.addr %s3954, 4
      %s3956 = scalar_lea.vmem %s3, %s3955
      // Predicated region
      $region33: #{tpu_custom_call.1} parent=31 // pred_check
        %p3957 = pneg %p116
      $region34: #{tpu_custom_call.1} parent=31 // pred_check_branch
        %3959 = sbr.rel (%p3957) target = $region36
      $region35: #{tpu_custom_call.1} parent=31 // pred_region
        %s3960 = smul.u32 24, %s19
      $region36: #{tpu_custom_call.1} parent=31 // pred_fallthru
        _
    $region32: #{tpu_custom_call.1} parent=5 // pred_fallthru
      _
    %p3961 = scmp.le.s32.totalorder 2, %s9
    // Predicated region
    $region37: #{tpu_custom_call.1} parent=5 // pred_check
      %p3962 = pneg %p3961
    $region38: #{tpu_custom_call.1} parent=5 // pred_check_branch
      %3964 = sbr.rel (%p3962) target = $region40
    $region39: #{tpu_custom_call.1} parent=5 // pred_region
      %s3965 = ssub.s32 %s9, 2
      // Predicated region
      $region41: #{tpu_custom_call.1} parent=39 // pred_check
        %p3966 = pneg %p122
      $region42: #{tpu_custom_call.1} parent=39 // pred_check_branch
        %3968 = sbr.rel (%p3966) target = $region44
      $region43: #{tpu_custom_call.1} parent=39 // pred_region
        %s3969 = smul.u32 24, %s21
        %p3970 = scmp.lt.s32.totalorder %s20, 0
        %s3971 = scalar_select %p3970, %s20, 0
        %p3972 = scmp.lt.s32.totalorder %s3969, 95
        %s3973 = scalar_select %p3972, %s3969, 95
        %s3974 = smul.addr %s3971, 96
        %s3975 = sadd.s32 %s3973, %s3974
        %s3976 = smul.addr %s3975, 4
        %s3977 = scalar_lea.vmem %s3, %s3976
      $region44: #{tpu_custom_call.1} parent=39 // pred_fallthru
        _
    $region40: #{tpu_custom_call.1} parent=5 // pred_fallthru
      _
  $region6: #{tpu_custom_call.1} parent=0 // loop_footer
    %s13 = sadd.s32 1, %s9
  $region7: #{tpu_custom_call.1} parent=0 // loop_footer_branch
    %8 = sbr.rel target = $region3
  $region8: #{tpu_custom_call.1} parent=0 // loop_exit
    _

</llo_original>
